<compile_context>
chip_gen: v6e
topology: v6e:2x2x1
jax: 0.10.0
libtpu: 0.0.40
codegen_flags: <defaults>
</compile_context>

<pallas_src>
import functools

import jax
import jax.numpy as jnp
from jax.experimental import pallas as pl
from jax.experimental.pallas import tpu as pltpu


def cross_attention_kernel(q_ref, kv_ref, kw_ref, vw_ref, pw_ref, pb_ref,
                           o_ref,
                           qh_sc, m_sc, l_sc, acc_sc,
                           *, num_heads, scale, mxu_dtype):
    """Grid = (batch, q tiles, kv tiles); kv is the innermost (reduction) axis."""
    ki = pl.program_id(2)
    nk = pl.num_programs(2)

    tq, C = q_ref.shape[1], q_ref.shape[2]
    tk = kv_ref.shape[1]
    H = num_heads
    Dh = C // H

    # ---- per-q-tile init (runs once per (b, qi)): cache scaled head-major q and
    # reset the online-softmax state.
    @pl.when(ki == 0)
    def _():
        q = q_ref[0].astype(jnp.float32) * scale                          # (tq, C)
        qh_sc[...] = jnp.swapaxes(q.reshape(tq, H, Dh), 0, 1).astype(mxu_dtype)
        m_sc[...] = jnp.full_like(m_sc, -jnp.inf)
        l_sc[...] = jnp.zeros_like(l_sc)
        acc_sc[...] = jnp.zeros_like(acc_sc)

    # ---- K / V projections for this kv block (lane-aligned separate weights),
    # then one relayout each to head-major (H, tk, Dh).
    x_kv = kv_ref[0].astype(mxu_dtype)                                    # (tk, C)
    k = jnp.dot(x_kv, kw_ref[...], preferred_element_type=jnp.float32)    # (tk, C)
    v = jnp.dot(x_kv, vw_ref[...], preferred_element_type=jnp.float32)    # (tk, C)
    kh = jnp.swapaxes(k.reshape(tk, H, Dh), 0, 1).astype(mxu_dtype)       # (H, tk, Dh)
    vh = jnp.swapaxes(v.reshape(tk, H, Dh), 0, 1).astype(mxu_dtype)       # (H, tk, Dh)

    # ---- scores + online softmax (element-wise math in f32).
    s = jnp.einsum('hqd,hkd->hqk', qh_sc[...], kh,
                   preferred_element_type=jnp.float32)                    # (H, tq, tk)
    m_new = jnp.maximum(m_sc[...], jnp.max(s, axis=-1, keepdims=True))    # (H, tq, 1)
    alpha = jnp.exp(m_sc[...] - m_new)
    p = jnp.exp(s - m_new)                                                # (H, tq, tk)
    l_sc[...] = alpha * l_sc[...] + jnp.sum(p, axis=-1, keepdims=True)
    acc_sc[...] = alpha * acc_sc[...] + jnp.einsum(
        'hqk,hkd->hqd', p.astype(mxu_dtype), vh,
        preferred_element_type=jnp.float32)                               # (H, tq, Dh)
    m_sc[...] = m_new
    # attn_drop is identity (p = 0.0)

    # ---- finalize: one reciprocal per q row, head recombination + projection.
    @pl.when(ki == nk - 1)
    def _():
        oh = (acc_sc[...] * pl.reciprocal(l_sc[...], approx=True)).astype(mxu_dtype)
        x = jnp.swapaxes(oh, 0, 1).reshape(tq, C)                         # (tq, C)
        out = jnp.dot(x, pw_ref[...], preferred_element_type=jnp.float32) + pb_ref[...]
        o_ref[0] = out.astype(o_ref.dtype)                                # proj_drop identity


def _const_block_spec(shape):
    """BlockSpec for a grid-invariant block; single-buffer it when the installed
    Pallas supports pipeline_mode (double-buffering a constant block only wastes
    VMEM, which matters on v7x's 64 MiB)."""
    index_map = lambda b, qi, ki: (0,) * len(shape)
    if hasattr(pl, "Buffered"):
        try:
            return pl.BlockSpec(shape, index_map, pipeline_mode=pl.Buffered(1))
        except TypeError:
            pass
    return pl.BlockSpec(shape, index_map)


def text_img_interaction(text, img, kv_w, proj_w, proj_b, *, num_heads,
                         tq=256, tk=256, vmem_limit_bytes=64 * 1024 * 1024):
    """Text_img_interaction.forward(text, img) == CrossAttention(text, img).

    text, img : (B, N, C)
    kv_w      : (2C, C)  PyTorch Linear layout for kv_linear (bias=False)
    proj_w    : (C, C), proj_b: (C,)
    """
    B, N, C = img.shape
    assert text.shape == (B, N, C), "PyTorch reshape(B, N, C) requires query len == N"
    assert C % num_heads == 0
    Dh = C // num_heads
    scale = Dh ** (-0.5)

    # 256-multiples fill the v6e/v7x 256x256 MXU; 128-multiples already fill v5e.
    tq = min(tq, N)
    tk = min(tk, N)
    assert N % tq == 0 and N % tk == 0, "N must divide the tile sizes (see TODO)"

    # bf16 MXU operands (f32 accumulation) when the inputs are bf16; f32 otherwise.
    mxu_dtype = jnp.bfloat16 if text.dtype == jnp.bfloat16 else jnp.float32

    # Split the fused kv weight and pre-transpose all weights to (in, out) layout
    # so both projection outputs are lane-aligned at column 0.
    k_w_t = kv_w[:C, :].T.astype(mxu_dtype)           # (C, C)
    v_w_t = kv_w[C:, :].T.astype(mxu_dtype)           # (C, C)
    proj_w_t = proj_w.T.astype(mxu_dtype)             # (C, C)
    proj_b2 = proj_b.reshape(1, C).astype(jnp.float32)

    kernel = functools.partial(cross_attention_kernel, num_heads=num_heads,
                               scale=scale, mxu_dtype=mxu_dtype)

    grid = (B, N // tq, N // tk)

    return pl.pallas_call(
        kernel,
        out_shape=jax.ShapeDtypeStruct((B, N, C), text.dtype),
        grid=grid,
        in_specs=[
            pl.BlockSpec((1, tq, C), lambda b, qi, ki: (b, qi, 0)),   # query (text)
            pl.BlockSpec((1, tk, C), lambda b, qi, ki: (b, ki, 0)),   # key_value (img)
            _const_block_spec((C, C)),                                # k weight (in,out)
            _const_block_spec((C, C)),                                # v weight (in,out)
            _const_block_spec((C, C)),                                # proj weight (in,out)
            _const_block_spec((1, C)),                                # proj bias
        ],
        out_specs=pl.BlockSpec((1, tq, C), lambda b, qi, ki: (b, qi, 0)),
        scratch_shapes=[
            pltpu.VMEM((num_heads, tq, Dh), mxu_dtype),    # cached scaled head-major q
            pltpu.VMEM((num_heads, tq, 1), jnp.float32),   # running max m
            pltpu.VMEM((num_heads, tq, 1), jnp.float32),   # running denominator l
            pltpu.VMEM((num_heads, tq, Dh), jnp.float32),  # output accumulator
        ],
        compiler_params=pltpu.CompilerParams(
            dimension_semantics=("parallel", "parallel", "arbitrary"),
            vmem_limit_bytes=vmem_limit_bytes),
    )(text, img, k_w_t, v_w_t, proj_w_t, proj_b2)


def text_img_interaction_ref(text, img, kv_w, proj_w, proj_b, *, num_heads):
    """Pure-JAX reference mirroring the PyTorch forward."""
    B, N, C = img.shape
    Dh = C // num_heads
    scale = Dh ** (-0.5)
    q = text.reshape(B, N, num_heads, Dh).transpose(0, 2, 1, 3)        # (B,H,N,Dh)
    kv = img @ kv_w.T                                                  # (B,N,2C)
    kv = kv.reshape(B, N, 2, num_heads, Dh).transpose(2, 0, 3, 1, 4)   # (2,B,H,N,Dh)
    k, v = kv[0], kv[1]
    attn = jnp.einsum('bhqd,bhkd->bhqk', q, k) * scale
    attn = jax.nn.softmax(attn, axis=-1)
    x = jnp.einsum('bhqk,bhkd->bhqd', attn, v).transpose(0, 2, 1, 3).reshape(B, N, C)
    return x @ proj_w.T + proj_b


if __name__ == "__main__":
    # Small shapes consistent with the module: model_dim=32, num_heads=8 -> head_dim=4
    B, N, C, H = 2, 8, 32, 8

    key = jax.random.PRNGKey(0)
    k_t, k_i, k_w1, k_w2, k_b = jax.random.split(key, 5)

    text = jax.random.normal(k_t, (B, N, C), dtype=jnp.float32)
    img = jax.random.normal(k_i, (B, N, C), dtype=jnp.float32)

    # Deterministic synthetic parameters (PyTorch layout: (out_features, in_features))
    kv_w = 0.05 * jax.random.normal(k_w1, (2 * C, C), dtype=jnp.float32)   # kv_linear
    proj_w = 0.05 * jax.random.normal(k_w2, (C, C), dtype=jnp.float32)     # proj weight
    proj_b = 0.05 * jax.random.normal(k_b, (C,), dtype=jnp.float32)        # proj bias

    # f32 path
    out = text_img_interaction(text, img, kv_w, proj_w, proj_b, num_heads=H)
    out = jax.block_until_ready(out)
    ref = text_img_interaction_ref(text, img, kv_w, proj_w, proj_b, num_heads=H)
    assert out.shape == (B, N, C)
    # tolerance covers the EUP approximate reciprocal in the softmax denominator
    assert jnp.allclose(out, ref, atol=2e-3, rtol=2e-3), "f32 mismatch vs reference"

    # bf16 path (bf16 MXU operands, f32 accumulation)
    text16, img16 = text.astype(jnp.bfloat16), img.astype(jnp.bfloat16)
    kv16 = kv_w.astype(jnp.bfloat16)
    pw16 = proj_w.astype(jnp.bfloat16)
    pb16 = proj_b.astype(jnp.bfloat16)
    out16 = jax.block_until_ready(
        text_img_interaction(text16, img16, kv16, pw16, pb16, num_heads=H))
    ref16 = text_img_interaction_ref(
        text16.astype(jnp.float32), img16.astype(jnp.float32),
        kv16.astype(jnp.float32), pw16.astype(jnp.float32),
        pb16.astype(jnp.float32), num_heads=H)
    assert out16.shape == (B, N, C)
    assert jnp.allclose(out16.astype(jnp.float32), ref16, atol=5e-2, rtol=5e-2), \
        "bf16 mismatch vs reference"

    print("KERNEL_OK")
</pallas_src>

<mosaic_0001>
module attributes {stable_mosaic.version = 11 : i64} {
  func.func @cross_attention_kernel(%arg0: i32, %arg1: i32, %arg2: i32, %arg3: memref<1x8x32xf32, #tpu.memory_space<vmem>>, %arg4: memref<1x8x32xf32, #tpu.memory_space<vmem>>, %arg5: memref<32x32xf32, #tpu.memory_space<vmem>>, %arg6: memref<32x32xf32, #tpu.memory_space<vmem>>, %arg7: memref<32x32xf32, #tpu.memory_space<vmem>>, %arg8: memref<1x32xf32, #tpu.memory_space<vmem>>, %arg9: memref<1x8x32xf32, #tpu.memory_space<vmem>>, %arg10: memref<8x8x4xf32, #tpu.memory_space<vmem>>, %arg11: memref<8x8x1xf32, #tpu.memory_space<vmem>>, %arg12: memref<8x8x1xf32, #tpu.memory_space<vmem>>, %arg13: memref<8x8x4xf32, #tpu.memory_space<vmem>>) attributes {dimension_semantics = [#tpu.dimension_semantics<parallel>, #tpu.dimension_semantics<parallel>, #tpu.dimension_semantics<arbitrary>], iteration_bounds = array<i64: 2, 1, 1>, scalar_prefetch = 0 : i64, scratch_operands = 4 : i64, tpu.core_type = #tpu.core_type<tc>, window_params = [{transform_indices = @transform_0, window_bounds = array<i64: 1, 8, 32>}, {transform_indices = @transform_1, window_bounds = array<i64: 1, 8, 32>}, {pipeline_mode = #tpu.pipeline_mode<synchronous>, transform_indices = @transform_2, window_bounds = array<i64: 32, 32>}, {pipeline_mode = #tpu.pipeline_mode<synchronous>, transform_indices = @transform_3, window_bounds = array<i64: 32, 32>}, {pipeline_mode = #tpu.pipeline_mode<synchronous>, transform_indices = @transform_4, window_bounds = array<i64: 32, 32>}, {pipeline_mode = #tpu.pipeline_mode<synchronous>, transform_indices = @transform_5, window_bounds = array<i64: 1, 32>}, {transform_indices = @transform_6, window_bounds = array<i64: 1, 8, 32>}]} {
    %c0_i32 = arith.constant 0 : i32
    %0 = arith.cmpi eq, %arg2, %c0_i32 : i32
    %1 = arith.extui %0 : i1 to i32
    %c0_i32_0 = arith.constant 0 : i32
    %2 = arith.cmpi ne, %1, %c0_i32_0 : i32
    scf.if %2 {
      %c0_38 = arith.constant 0 : index
      %c0_39 = arith.constant 0 : index
      %c0_40 = arith.constant 0 : index
      %41 = vector.load %arg3[%c0_38, %c0_39, %c0_40] : memref<1x8x32xf32, #tpu.memory_space<vmem>>, vector<1x8x32xf32>
      %42 = vector.shape_cast %41 : vector<1x8x32xf32> to vector<8x32xf32>
      %cst_41 = arith.constant 5.000000e-01 : f32
      %43 = vector.broadcast %cst_41 : f32 to vector<8x32xf32>
      %44 = arith.mulf %42, %43 : vector<8x32xf32>
      %45 = vector.shape_cast %44 : vector<8x32xf32> to vector<8x8x4xf32>
      %46 = tpu.transpose %45, [1, 0, 2] : vector<8x8x4xf32> -> vector<8x8x4xf32>
      %c0_42 = arith.constant 0 : index
      %c0_43 = arith.constant 0 : index
      %c0_44 = arith.constant 0 : index
      %47 = vector.load %arg10[%c0_42, %c0_43, %c0_44] : memref<8x8x4xf32, #tpu.memory_space<vmem>>, vector<8x8x4xf32>
      tpu.vector_store %arg10[%c0_42, %c0_43, %c0_44], %46 {strides = array<i32>} : memref<8x8x4xf32, #tpu.memory_space<vmem>>, vector<8x8x4xf32>,
      %cst_45 = arith.constant 0xFF800000 : f32
      %48 = vector.broadcast %cst_45 : f32 to vector<8x8x1xf32>
      %c0_46 = arith.constant 0 : index
      %c0_47 = arith.constant 0 : index
      %c0_48 = arith.constant 0 : index
      %49 = vector.load %arg11[%c0_46, %c0_47, %c0_48] : memref<8x8x1xf32, #tpu.memory_space<vmem>>, vector<8x8x1xf32>
      tpu.vector_store %arg11[%c0_46, %c0_47, %c0_48], %48 {strides = array<i32>} : memref<8x8x1xf32, #tpu.memory_space<vmem>>, vector<8x8x1xf32>,
      %cst_49 = arith.constant 0.000000e+00 : f32
      %50 = vector.broadcast %cst_49 : f32 to vector<8x8x1xf32>
      %c0_50 = arith.constant 0 : index
      %c0_51 = arith.constant 0 : index
      %c0_52 = arith.constant 0 : index
      %51 = vector.load %arg12[%c0_50, %c0_51, %c0_52] : memref<8x8x1xf32, #tpu.memory_space<vmem>>, vector<8x8x1xf32>
      tpu.vector_store %arg12[%c0_50, %c0_51, %c0_52], %50 {strides = array<i32>} : memref<8x8x1xf32, #tpu.memory_space<vmem>>, vector<8x8x1xf32>,
      %cst_53 = arith.constant 0.000000e+00 : f32
      %52 = vector.broadcast %cst_53 : f32 to vector<8x8x4xf32>
      %c0_54 = arith.constant 0 : index
      %c0_55 = arith.constant 0 : index
      %c0_56 = arith.constant 0 : index
      %53 = vector.load %arg13[%c0_54, %c0_55, %c0_56] : memref<8x8x4xf32, #tpu.memory_space<vmem>>, vector<8x8x4xf32>
      tpu.vector_store %arg13[%c0_54, %c0_55, %c0_56], %52 {strides = array<i32>} : memref<8x8x4xf32, #tpu.memory_space<vmem>>, vector<8x8x4xf32>,
    } else {
    }
    %c0 = arith.constant 0 : index
    %c0_1 = arith.constant 0 : index
    %c0_2 = arith.constant 0 : index
    %3 = vector.load %arg4[%c0, %c0_1, %c0_2] : memref<1x8x32xf32, #tpu.memory_space<vmem>>, vector<1x8x32xf32>
    %4 = vector.shape_cast %3 : vector<1x8x32xf32> to vector<8x32xf32>
    %c0_3 = arith.constant 0 : index
    %c0_4 = arith.constant 0 : index
    %5 = vector.load %arg5[%c0_3, %c0_4] : memref<32x32xf32, #tpu.memory_space<vmem>>, vector<32x32xf32>
    %cst = arith.constant dense<0.000000e+00> : vector<8x32xf32>
    %6 = tpu.matmul %4, %5, %cst {dimension_numbers = #tpu.dot_dimension_numbers<[1], [0], [0], [1], [0, 0, 1, 1], [], []>} : vector<8x32xf32>, vector<32x32xf32>, vector<8x32xf32> -> vector<8x32xf32>
    %c0_5 = arith.constant 0 : index
    %c0_6 = arith.constant 0 : index
    %7 = vector.load %arg6[%c0_5, %c0_6] : memref<32x32xf32, #tpu.memory_space<vmem>>, vector<32x32xf32>
    %cst_7 = arith.constant dense<0.000000e+00> : vector<8x32xf32>
    %8 = tpu.matmul %4, %7, %cst_7 {dimension_numbers = #tpu.dot_dimension_numbers<[1], [0], [0], [1], [0, 0, 1, 1], [], []>} : vector<8x32xf32>, vector<32x32xf32>, vector<8x32xf32> -> vector<8x32xf32>
    %9 = vector.shape_cast %6 : vector<8x32xf32> to vector<8x8x4xf32>
    %10 = tpu.transpose %9, [1, 0, 2] : vector<8x8x4xf32> -> vector<8x8x4xf32>
    %11 = vector.shape_cast %8 : vector<8x32xf32> to vector<8x8x4xf32>
    %12 = tpu.transpose %11, [1, 0, 2] : vector<8x8x4xf32> -> vector<8x8x4xf32>
    %c0_8 = arith.constant 0 : index
    %c0_9 = arith.constant 0 : index
    %c0_10 = arith.constant 0 : index
    %13 = vector.load %arg10[%c0_8, %c0_9, %c0_10] : memref<8x8x4xf32, #tpu.memory_space<vmem>>, vector<8x8x4xf32>
    "tpu.trace_start"() <{level = 10 : i32, message = "hqd,hkd->hqk"}> : () -> ()
    %cst_11 = arith.constant dense<0.000000e+00> : vector<8x8x8xf32>
    %14 = tpu.matmul %13, %10, %cst_11 {dimension_numbers = #tpu.dot_dimension_numbers<[2], [2], [1], [1], [0, 0, 0, 1, 1, 1], [0], [0]>} : vector<8x8x4xf32>, vector<8x8x4xf32>, vector<8x8x8xf32> -> vector<8x8x8xf32>
    "tpu.trace_stop"() : () -> ()
    %c0_12 = arith.constant 0 : index
    %c0_13 = arith.constant 0 : index
    %c0_14 = arith.constant 0 : index
    %15 = vector.load %arg11[%c0_12, %c0_13, %c0_14] : memref<8x8x1xf32, #tpu.memory_space<vmem>>, vector<8x8x1xf32>
    %cst_15 = arith.constant dense<0xFF800000> : vector<8x8xf32>
    %16 = vector.multi_reduction <maximumf>, %14, %cst_15 [2] : vector<8x8x8xf32> to vector<8x8xf32>
    %17 = vector.shape_cast %16 : vector<8x8xf32> to vector<8x8x1xf32>
    %18 = arith.maximumf %15, %17 : vector<8x8x1xf32>
    %c0_16 = arith.constant 0 : index
    %c0_17 = arith.constant 0 : index
    %c0_18 = arith.constant 0 : index
    %19 = vector.load %arg11[%c0_16, %c0_17, %c0_18] : memref<8x8x1xf32, #tpu.memory_space<vmem>>, vector<8x8x1xf32>
    %20 = arith.subf %19, %18 : vector<8x8x1xf32>
    %21 = math.exp %20 : vector<8x8x1xf32>
    %22 = vector.broadcast %18 : vector<8x8x1xf32> to vector<8x8x8xf32>
    %23 = arith.subf %14, %22 : vector<8x8x8xf32>
    %24 = math.exp %23 : vector<8x8x8xf32>
    %c0_19 = arith.constant 0 : index
    %c0_20 = arith.constant 0 : index
    %c0_21 = arith.constant 0 : index
    %25 = vector.load %arg12[%c0_19, %c0_20, %c0_21] : memref<8x8x1xf32, #tpu.memory_space<vmem>>, vector<8x8x1xf32>
    %26 = arith.mulf %21, %25 : vector<8x8x1xf32>
    %cst_22 = arith.constant dense<0.000000e+00> : vector<8x8xf32>
    %27 = vector.multi_reduction <add>, %24, %cst_22 [2] : vector<8x8x8xf32> to vector<8x8xf32>
    %28 = vector.shape_cast %27 : vector<8x8xf32> to vector<8x8x1xf32>
    %29 = arith.addf %26, %28 : vector<8x8x1xf32>
    %c0_23 = arith.constant 0 : index
    %c0_24 = arith.constant 0 : index
    %c0_25 = arith.constant 0 : index
    %30 = vector.load %arg12[%c0_23, %c0_24, %c0_25] : memref<8x8x1xf32, #tpu.memory_space<vmem>>, vector<8x8x1xf32>
    tpu.vector_store %arg12[%c0_23, %c0_24, %c0_25], %29 {strides = array<i32>} : memref<8x8x1xf32, #tpu.memory_space<vmem>>, vector<8x8x1xf32>,
    %c0_26 = arith.constant 0 : index
    %c0_27 = arith.constant 0 : index
    %c0_28 = arith.constant 0 : index
    %31 = vector.load %arg13[%c0_26, %c0_27, %c0_28] : memref<8x8x4xf32, #tpu.memory_space<vmem>>, vector<8x8x4xf32>
    %32 = vector.broadcast %21 : vector<8x8x1xf32> to vector<8x8x4xf32>
    %33 = arith.mulf %32, %31 : vector<8x8x4xf32>
    "tpu.trace_start"() <{level = 10 : i32, message = "hqk,hkd->hqd"}> : () -> ()
    %cst_29 = arith.constant dense<0.000000e+00> : vector<8x8x4xf32>
    %34 = tpu.matmul %24, %12, %cst_29 {dimension_numbers = #tpu.dot_dimension_numbers<[2], [1], [1], [2], [0, 0, 0, 1, 1, 2], [0], [0]>} : vector<8x8x8xf32>, vector<8x8x4xf32>, vector<8x8x4xf32> -> vector<8x8x4xf32>
    "tpu.trace_stop"() : () -> ()
    %35 = arith.addf %33, %34 : vector<8x8x4xf32>
    %c0_30 = arith.constant 0 : index
    %c0_31 = arith.constant 0 : index
    %c0_32 = arith.constant 0 : index
    %36 = vector.load %arg13[%c0_30, %c0_31, %c0_32] : memref<8x8x4xf32, #tpu.memory_space<vmem>>, vector<8x8x4xf32>
    tpu.vector_store %arg13[%c0_30, %c0_31, %c0_32], %35 {strides = array<i32>} : memref<8x8x4xf32, #tpu.memory_space<vmem>>, vector<8x8x4xf32>,
    %c0_33 = arith.constant 0 : index
    %c0_34 = arith.constant 0 : index
    %c0_35 = arith.constant 0 : index
    %37 = vector.load %arg11[%c0_33, %c0_34, %c0_35] : memref<8x8x1xf32, #tpu.memory_space<vmem>>, vector<8x8x1xf32>
    tpu.vector_store %arg11[%c0_33, %c0_34, %c0_35], %18 {strides = array<i32>} : memref<8x8x1xf32, #tpu.memory_space<vmem>>, vector<8x8x1xf32>,
    %c0_i32_36 = arith.constant 0 : i32
    %38 = arith.cmpi eq, %arg2, %c0_i32_36 : i32
    %39 = arith.extui %38 : i1 to i32
    %c0_i32_37 = arith.constant 0 : i32
    %40 = arith.cmpi ne, %39, %c0_i32_37 : i32
    scf.if %40 {
      %c0_38 = arith.constant 0 : index
      %c0_39 = arith.constant 0 : index
      %c0_40 = arith.constant 0 : index
      %41 = vector.load %arg13[%c0_38, %c0_39, %c0_40] : memref<8x8x4xf32, #tpu.memory_space<vmem>>, vector<8x8x4xf32>
      %c0_41 = arith.constant 0 : index
      %c0_42 = arith.constant 0 : index
      %c0_43 = arith.constant 0 : index
      %42 = vector.load %arg12[%c0_41, %c0_42, %c0_43] : memref<8x8x1xf32, #tpu.memory_space<vmem>>, vector<8x8x1xf32>
      %43 = tpu.reciprocal %42 {approx = true} : vector<8x8x1xf32> -> vector<8x8x1xf32>
      %44 = vector.broadcast %43 : vector<8x8x1xf32> to vector<8x8x4xf32>
      %45 = arith.mulf %41, %44 : vector<8x8x4xf32>
      %46 = tpu.transpose %45, [1, 0, 2] : vector<8x8x4xf32> -> vector<8x8x4xf32>
      %47 = vector.shape_cast %46 : vector<8x8x4xf32> to vector<8x32xf32>
      %c0_44 = arith.constant 0 : index
      %c0_45 = arith.constant 0 : index
      %48 = vector.load %arg7[%c0_44, %c0_45] : memref<32x32xf32, #tpu.memory_space<vmem>>, vector<32x32xf32>
      %cst_46 = arith.constant dense<0.000000e+00> : vector<8x32xf32>
      %49 = tpu.matmul %47, %48, %cst_46 {dimension_numbers = #tpu.dot_dimension_numbers<[1], [0], [0], [1], [0, 0, 1, 1], [], []>} : vector<8x32xf32>, vector<32x32xf32>, vector<8x32xf32> -> vector<8x32xf32>
      %c0_47 = arith.constant 0 : index
      %c0_48 = arith.constant 0 : index
      %50 = vector.load %arg8[%c0_47, %c0_48] : memref<1x32xf32, #tpu.memory_space<vmem>>, vector<1x32xf32>
      %51 = vector.broadcast %50 : vector<1x32xf32> to vector<8x32xf32>
      %52 = arith.addf %49, %51 : vector<8x32xf32>
      %c0_49 = arith.constant 0 : index
      %c0_50 = arith.constant 0 : index
      %c0_51 = arith.constant 0 : index
      %53 = vector.load %arg9[%c0_49, %c0_50, %c0_51] : memref<1x8x32xf32, #tpu.memory_space<vmem>>, vector<1x8x32xf32>
      %54 = vector.shape_cast %53 : vector<1x8x32xf32> to vector<8x32xf32>
      %55 = vector.shape_cast %52 : vector<8x32xf32> to vector<1x8x32xf32>
      tpu.vector_store %arg9[%c0_49, %c0_50, %c0_51], %55 {strides = array<i32>} : memref<1x8x32xf32, #tpu.memory_space<vmem>>, vector<1x8x32xf32>,
    } else {
    }
    return
  }
  func.func @transform_0(%arg0: i32, %arg1: i32, %arg2: i32) -> (i32, i32, i32) {
    %c0_i32 = arith.constant 0 : i32
    %c0_i32_0 = arith.constant 0 : i32
    return %arg0, %arg1, %c0_i32 : i32, i32, i32
  }
  func.func @transform_1(%arg0: i32, %arg1: i32, %arg2: i32) -> (i32, i32, i32) {
    %c0_i32 = arith.constant 0 : i32
    %c0_i32_0 = arith.constant 0 : i32
    return %arg0, %arg2, %c0_i32 : i32, i32, i32
  }
  func.func @transform_2(%arg0: i32, %arg1: i32, %arg2: i32) -> (i32, i32) {
    %c0_i32 = arith.constant 0 : i32
    %c0_i32_0 = arith.constant 0 : i32
    %c0_i32_1 = arith.constant 0 : i32
    return %c0_i32, %c0_i32_0 : i32, i32
  }
  func.func @transform_3(%arg0: i32, %arg1: i32, %arg2: i32) -> (i32, i32) {
    %c0_i32 = arith.constant 0 : i32
    %c0_i32_0 = arith.constant 0 : i32
    %c0_i32_1 = arith.constant 0 : i32
    return %c0_i32, %c0_i32_0 : i32, i32
  }
  func.func @transform_4(%arg0: i32, %arg1: i32, %arg2: i32) -> (i32, i32) {
    %c0_i32 = arith.constant 0 : i32
    %c0_i32_0 = arith.constant 0 : i32
    %c0_i32_1 = arith.constant 0 : i32
    return %c0_i32, %c0_i32_0 : i32, i32
  }
  func.func @transform_5(%arg0: i32, %arg1: i32, %arg2: i32) -> (i32, i32) {
    %c0_i32 = arith.constant 0 : i32
    %c0_i32_0 = arith.constant 0 : i32
    %c0_i32_1 = arith.constant 0 : i32
    return %c0_i32, %c0_i32_0 : i32, i32
  }
  func.func @transform_6(%arg0: i32, %arg1: i32, %arg2: i32) -> (i32, i32, i32) {
    %c0_i32 = arith.constant 0 : i32
    %c0_i32_0 = arith.constant 0 : i32
    return %arg0, %arg1, %c0_i32 : i32, i32, i32
  }
}

</mosaic_0001>

<llo_original>
// kernel: tpu_custom_call.1
$region0: #{tpu_custom_call.1}
  #allocation0 [shape = 'u32[]', space=smem, size = 0x4, offset = 0x4, fixed_abs, tag = 'smem constant byte address 0x4 - core index']
  #allocation1 [shape = 'u32[144,128]{1,0:T(1,128)}', space=vmem, size = 0x12000, scoped, tag = 'internal scratch']
  #allocation2 [shape = 'f32[8,8,4]{2,1,0:T(8,128)}', space=vmem, size = 0x8000, scoped, tag = 'scratch operand']
  #allocation3 [shape = 'f32[8,8,1]{2,1,0:T(8,128)}', space=vmem, size = 0x8000, scoped, tag = 'scratch operand']
  #allocation4 [shape = 'f32[8,8,1]{2,1,0:T(8,128)}', space=vmem, size = 0x8000, scoped, tag = 'scratch operand']
  #allocation5 [shape = 'f32[8,8,4]{2,1,0:T(8,128)}', space=vmem, size = 0x8000, scoped, tag = 'scratch operand']
  %s0 = inlined_call_operand.hbm [shape: f32[2,8,32], index: 0, kind: input, shape index: {}]
  %s1 = inlined_call_operand.hbm [shape: f32[2,8,32], index: 1, kind: input, shape index: {}]
  %s2 = inlined_call_operand.hbm [shape: f32[32,32], index: 2, kind: input, shape index: {}]
  %s3 = inlined_call_operand.hbm [shape: f32[32,32], index: 3, kind: input, shape index: {}]
  %s4 = inlined_call_operand.hbm [shape: f32[32,32], index: 4, kind: input, shape index: {}]
  %s5 = inlined_call_operand.vmem [shape: f32[1,32], index: 5, kind: input, shape index: {}]
  %s6 = inlined_call_operand.hbm [shape: f32[2,8,32], index: 6, kind: output, shape index: {}]
  %s7 = sld [smem:[#allocation0]]
  $region85: #{tpu_custom_call.1} parent=0
    _
  %s9 = ssub.s32 1, %s7
  %s10 = scalar_select 0, %s9, %s7
  $region1: #{tpu_custom_call.1} parent=0
    #allocation6 [shape = 'u8[8192]{0}', space=vmem, size = 0x2000, scoped, tag = 'input window, operand 0']
    #allocation7 [shape = 's32[2]{0}', space=sflag, size = 0x8, scoped, tag = 'scoped memory for tpu_custom_call.1']
    #allocation8 [shape = 's32[2]{0}', space=sflag, size = 0x8, scoped, tag = 'scoped memory for tpu_custom_call.1']
    #allocation9 [shape = 'u8[8192]{0}', space=vmem, size = 0x2000, scoped, tag = 'input window, operand 1']
    #allocation10 [shape = 's32[2]{0}', space=sflag, size = 0x8, scoped, tag = 'scoped memory for tpu_custom_call.1']
    #allocation11 [shape = 'u8[16384]{0}', space=vmem, size = 0x4000, scoped, tag = 'input window, operand 2, single buffered']
    #allocation12 [shape = 'u8[16384]{0}', space=vmem, size = 0x4000, scoped, tag = 'input window, operand 3, single buffered']
    #allocation13 [shape = 's32[1]{0}', space=sflag, size = 0x4, scoped, tag = 'scoped memory for tpu_custom_call.1']
    #allocation14 [shape = 'u8[16384]{0}', space=vmem, size = 0x4000, scoped, tag = 'input window, operand 4, single buffered']
    #allocation15 [shape = 'u8[8192]{0}', space=vmem, size = 0x2000, scoped, tag = 'output window, operand 0']
    %11 = vsyncpa [#allocation7], 0
    %s12 = scalar_lea.sflag [#allocation7], 1
    %13 = vsyncpa %s12, 0
    %14 = vsyncpa [#allocation10], 0
    %s15 = scalar_lea.sflag [#allocation10], 1
    %16 = vsyncpa %s15, 0
    %17 = vsyncpa [#allocation13], 0
    %18 = vsyncpa [#allocation8], 0
    %s19 = scalar_lea.sflag [#allocation8], 1
    %20 = vsyncpa %s19, 0
    loop: start=0, step=1, limit=4
    $region2: #{tpu_custom_call.1} parent=1 // loop_pre_header
      _
    $region3: #{tpu_custom_call.1} parent=1 // loop_header
      %s22 = sphi 0, %s26
      %p23 = scmp.ge.s32.totalorder %s22, 4
      %s29 = sphi 0, %s48
      %s30 = sphi 0, %s44
      %s31 = sphi 0, %s40
      %s32 = sphi 0, %s29
      %s33 = sphi 0, %s30
      %s34 = sphi 0, %s31
      %s35 = sphi 0, %s32
      %s36 = sphi 0, %s33
      %s37 = sphi 0, %s34
      %s53 = sphi 0, %s55
      %s56 = sphi 0, %s53
      %s57 = sphi 0, %s56
      %s73 = sphi 0, %s57
      %s81 = sphi 0, %s83
      %s84 = sphi 0, %s81
      %s85 = sphi 0, %s84
      %s101 = sphi 0, %s85
      %s105 = sphi 0, %s105
      %s107 = sphi 0, %s105
      %s108 = sphi 0, %s107
      %s122 = sphi 0, %s108
      %s126 = sphi 0, %s126
      %s128 = sphi 0, %s126
      %s129 = sphi 0, %s128
      %s143 = sphi 0, %s129
      %s147 = sphi 0, %s147
      %s149 = sphi 0, %s147
      %s150 = sphi 0, %s149
      %s164 = sphi 0, %s150
      %s168 = sphi 0, %s168
      %s170 = sphi 0, %s168
      %s171 = sphi 0, %s170
      %s185 = sphi 0, %s171
      %s193 = sphi 0, %s195
      %s196 = sphi 0, %s193
      %s197 = sphi 0, %s196
      %s213 = sphi 0, %s197
    $region4: #{tpu_custom_call.1} parent=1 // loop_header_branch
      %25 = sbr.rel (%p23) target = $region8
    $region5: #{tpu_custom_call.1} parent=1 // loop_body
      %s27 = ssub.s32 %s22, 1
      %s28 = ssub.s32 %s22, 2
      %s38 = sadd.s32 1, %s31
      %p39 = scmp.ge.s32.totalorder %s38, 1
      %s40 = scalar_select %p39, 0, %s38
      %s41 = sadd.s32 1, %s30
      %s42 = scalar_select %p39, %s41, %s30
      %p43 = scmp.ge.s32.totalorder %s42, 1
      %s44 = scalar_select %p43, 0, %s42
      %s45 = sadd.s32 1, %s29
      %s46 = scalar_select %p43, %s45, %s29
      %p47 = scmp.ge.s32.totalorder %s46, 2
      %s48 = scalar_select %p47, 0, %s46
      %s49 = ssub.s32 %s29, %s48
      %s50 = ssub.s32 %s30, %s44
      %s51 = sor.u32 %s49, %s50
      %p52 = scmp.eq.s32.totalorder %s51, 0
      %s54 = sadd.s32 %s53, 1
      %s55 = scalar_select %p52, %s53, %s54
      %p58 = pneg %p52
      %p59 = scmp.eq.s32.totalorder %s22, 1
      %p60 = por %p58, %p59
      %p61 = scmp.ne.s32.totalorder %s53, %s56
      %p62 = scmp.eq.s32.totalorder %s22, 0
      %p63 = por %p61, %p62
      %p64 = scmp.ne.s32.totalorder %s53, %s56
      %p65 = scmp.eq.s32.totalorder %s27, 1
      %p66 = por %p64, %p65
      %p67 = scmp.ne.s32.totalorder %s56, %s57
      %p68 = scmp.eq.s32.totalorder %s27, 0
      %p69 = por %p67, %p68
      %p70 = scmp.ne.s32.totalorder %s56, %s57
      %p71 = scmp.eq.s32.totalorder %s28, 1
      %p72 = por %p70, %p71
      %p74 = scmp.ne.s32.totalorder %s57, %s73
      %p75 = scmp.eq.s32.totalorder %s28, 0
      %p76 = por %p74, %p75
      %s77 = ssub.s32 %s29, %s48
      %s78 = ssub.s32 %s31, %s40
      %s79 = sor.u32 %s77, %s78
      %p80 = scmp.eq.s32.totalorder %s79, 0
      %s82 = sadd.s32 %s81, 1
      %s83 = scalar_select %p80, %s81, %s82
      %p86 = pneg %p80
      %p87 = scmp.eq.s32.totalorder %s22, 1
      %p88 = por %p86, %p87
      %p89 = scmp.ne.s32.totalorder %s81, %s84
      %p90 = scmp.eq.s32.totalorder %s22, 0
      %p91 = por %p89, %p90
      %p92 = scmp.ne.s32.totalorder %s81, %s84
      %p93 = scmp.eq.s32.totalorder %s27, 1
      %p94 = por %p92, %p93
      %p95 = scmp.ne.s32.totalorder %s84, %s85
      %p96 = scmp.eq.s32.totalorder %s27, 0
      %p97 = por %p95, %p96
      %p98 = scmp.ne.s32.totalorder %s84, %s85
      %p99 = scmp.eq.s32.totalorder %s28, 1
      %p100 = por %p98, %p99
      %p102 = scmp.ne.s32.totalorder %s85, %s101
      %p103 = scmp.eq.s32.totalorder %s28, 0
      %p104 = por %p102, %p103
      %s106 = sadd.s32 %s105, 1
      %p109 = scmp.eq.s32.totalorder %s22, 1
      %p110 = scmp.ne.s32.totalorder %s105, %s107
      %p111 = scmp.eq.s32.totalorder %s22, 0
      %p112 = por %p110, %p111
      %p113 = scmp.ne.s32.totalorder %s105, %s107
      %p114 = scmp.eq.s32.totalorder %s27, 1
      %p115 = por %p113, %p114
      %p116 = scmp.ne.s32.totalorder %s107, %s108
      %p117 = scmp.eq.s32.totalorder %s27, 0
      %p118 = por %p116, %p117
      %p119 = scmp.ne.s32.totalorder %s107, %s108
      %p120 = scmp.eq.s32.totalorder %s28, 1
      %p121 = por %p119, %p120
      %p123 = scmp.ne.s32.totalorder %s108, %s122
      %p124 = scmp.eq.s32.totalorder %s28, 0
      %p125 = por %p123, %p124
      %s127 = sadd.s32 %s126, 1
      %p130 = scmp.eq.s32.totalorder %s22, 1
      %p131 = scmp.ne.s32.totalorder %s126, %s128
      %p132 = scmp.eq.s32.totalorder %s22, 0
      %p133 = por %p131, %p132
      %p134 = scmp.ne.s32.totalorder %s126, %s128
      %p135 = scmp.eq.s32.totalorder %s27, 1
      %p136 = por %p134, %p135
      %p137 = scmp.ne.s32.totalorder %s128, %s129
      %p138 = scmp.eq.s32.totalorder %s27, 0
      %p139 = por %p137, %p138
      %p140 = scmp.ne.s32.totalorder %s128, %s129
      %p141 = scmp.eq.s32.totalorder %s28, 1
      %p142 = por %p140, %p141
      %p144 = scmp.ne.s32.totalorder %s129, %s143
      %p145 = scmp.eq.s32.totalorder %s28, 0
      %p146 = por %p144, %p145
      %s148 = sadd.s32 %s147, 1
      %p151 = scmp.eq.s32.totalorder %s22, 1
      %p152 = scmp.ne.s32.totalorder %s147, %s149
      %p153 = scmp.eq.s32.totalorder %s22, 0
      %p154 = por %p152, %p153
      %p155 = scmp.ne.s32.totalorder %s147, %s149
      %p156 = scmp.eq.s32.totalorder %s27, 1
      %p157 = por %p155, %p156
      %p158 = scmp.ne.s32.totalorder %s149, %s150
      %p159 = scmp.eq.s32.totalorder %s27, 0
      %p160 = por %p158, %p159
      %p161 = scmp.ne.s32.totalorder %s149, %s150
      %p162 = scmp.eq.s32.totalorder %s28, 1
      %p163 = por %p161, %p162
      %p165 = scmp.ne.s32.totalorder %s150, %s164
      %p166 = scmp.eq.s32.totalorder %s28, 0
      %p167 = por %p165, %p166
      %s169 = sadd.s32 %s168, 1
      %p172 = scmp.eq.s32.totalorder %s22, 1
      %p173 = scmp.ne.s32.totalorder %s168, %s170
      %p174 = scmp.eq.s32.totalorder %s22, 0
      %p175 = por %p173, %p174
      %p176 = scmp.ne.s32.totalorder %s168, %s170
      %p177 = scmp.eq.s32.totalorder %s27, 1
      %p178 = por %p176, %p177
      %p179 = scmp.ne.s32.totalorder %s170, %s171
      %p180 = scmp.eq.s32.totalorder %s27, 0
      %p181 = por %p179, %p180
      %p182 = scmp.ne.s32.totalorder %s170, %s171
      %p183 = scmp.eq.s32.totalorder %s28, 1
      %p184 = por %p182, %p183
      %p186 = scmp.ne.s32.totalorder %s171, %s185
      %p187 = scmp.eq.s32.totalorder %s28, 0
      %p188 = por %p186, %p187
      %s189 = ssub.s32 %s29, %s48
      %s190 = ssub.s32 %s30, %s44
      %s191 = sor.u32 %s189, %s190
      %p192 = scmp.eq.s32.totalorder %s191, 0
      %s194 = sadd.s32 %s193, 1
      %s195 = scalar_select %p192, %s193, %s194
      %p198 = pneg %p192
      %p199 = scmp.eq.s32.totalorder %s22, 1
      %p200 = por %p198, %p199
      %p201 = scmp.ne.s32.totalorder %s193, %s196
      %p202 = scmp.eq.s32.totalorder %s22, 0
      %p203 = por %p201, %p202
      %p204 = scmp.ne.s32.totalorder %s193, %s196
      %p205 = scmp.eq.s32.totalorder %s27, 1
      %p206 = por %p204, %p205
      %p207 = scmp.ne.s32.totalorder %s196, %s197
      %p208 = scmp.eq.s32.totalorder %s27, 0
      %p209 = por %p207, %p208
      %p210 = scmp.ne.s32.totalorder %s196, %s197
      %p211 = scmp.eq.s32.totalorder %s28, 1
      %p212 = por %p210, %p211
      %p214 = scmp.ne.s32.totalorder %s197, %s213
      %p215 = scmp.eq.s32.totalorder %s28, 0
      %p216 = por %p214, %p215
      %p217 = scmp.le.s32.totalorder 1, %s22
      %p218 = scmp.lt.s32.totalorder %s22, 3
      %p219 = pnand %p217, %p218
      %p220 = pneg %p219
      // Predicated region
      $region9: #{tpu_custom_call.1} parent=5 // pred_check
        _
      $region10: #{tpu_custom_call.1} parent=5 // pred_check_branch
        %222 = sbr.rel (%p219) target = $region12
      $region11: #{tpu_custom_call.1} parent=5 // pred_region
        %s223 = ssub.s32 %s22, 1
        // Predicated region
        $region13: #{tpu_custom_call.1} parent=11 // pred_check
          %p224 = pneg %p118
        $region14: #{tpu_custom_call.1} parent=11 // pred_check_branch
          %226 = sbr.rel (%p224) target = $region16
        $region15: #{tpu_custom_call.1} parent=11 // pred_region
          %s228 = ssub.s32 512, 512
          %229 = vsyncadd [#allocation10], %s228
          %s230 = sshll.u32 [#allocation11], 4
          %s231 = int_to_ptr.vmem [resolvable:$true] %s230
          %236 = dma.hbm_to_vmem [thread:$0]  %s2, 512, %s231, [#allocation10], 128, 128, 8
        $region16: #{tpu_custom_call.1} parent=11 // pred_fallthru
          _
        // Predicated region
        $region17: #{tpu_custom_call.1} parent=11 // pred_check
          %p237 = pneg %p139
        $region18: #{tpu_custom_call.1} parent=11 // pred_check_branch
          %239 = sbr.rel (%p237) target = $region20
        $region19: #{tpu_custom_call.1} parent=11 // pred_region
          %s241 = ssub.s32 512, 512
          %242 = vsyncadd [#allocation13], %s241
          %s243 = sshll.u32 [#allocation12], 4
          %s244 = int_to_ptr.vmem [resolvable:$true] %s243
          %249 = dma.hbm_to_vmem [thread:$0]  %s3, 512, %s244, [#allocation13], 128, 128, 8
        $region20: #{tpu_custom_call.1} parent=11 // pred_fallthru
          _
        // Predicated region
        $region21: #{tpu_custom_call.1} parent=11 // pred_check
          %p250 = pneg %p160
        $region22: #{tpu_custom_call.1} parent=11 // pred_check_branch
          %252 = sbr.rel (%p250) target = $region24
        $region23: #{tpu_custom_call.1} parent=11 // pred_region
          %s254 = ssub.s32 512, 512
          %255 = vsyncadd [#allocation13], %s254
          %s256 = sshll.u32 [#allocation14], 4
          %s257 = int_to_ptr.vmem [resolvable:$true] %s256
          %262 = dma.hbm_to_vmem [thread:$0]  %s4, 512, %s257, [#allocation13], 128, 128, 8
        $region24: #{tpu_custom_call.1} parent=11 // pred_fallthru
          _
        // Predicated region
        $region25: #{tpu_custom_call.1} parent=11 // pred_check
          %p263 = pneg %p181
        $region26: #{tpu_custom_call.1} parent=11 // pred_check_branch
          %265 = sbr.rel (%p263) target = $region28
        $region27: #{tpu_custom_call.1} parent=11 // pred_region
          _
        $region28: #{tpu_custom_call.1} parent=11 // pred_fallthru
          _
      $region12: #{tpu_custom_call.1} parent=5 // pred_fallthru
        _
      %p266 = scmp.lt.s32.totalorder %s22, 2
      // Predicated region
      $region29: #{tpu_custom_call.1} parent=5 // pred_check
        %p267 = pneg %p266
      $region30: #{tpu_custom_call.1} parent=5 // pred_check_branch
        %269 = sbr.rel (%p267) target = $region32
      $region31: #{tpu_custom_call.1} parent=5 // pred_region
        // Predicated region
        $region33: #{tpu_custom_call.1} parent=31 // pred_check
          %p270 = pneg %p63
        $region34: #{tpu_custom_call.1} parent=31 // pred_check_branch
          %272 = sbr.rel (%p270) target = $region36
        $region35: #{tpu_custom_call.1} parent=31 // pred_region
          %s273 = sand.u32 %s53, 1
          %s274 = scalar_lea.sflag [#allocation7], %s273
          %s275 = sand.u32 %s53, 1
          %s276 = smul.addr %s275, 8
          %s277 = scalar_lea.vmem [#allocation6], %s276
          %s279 = ssub.s32 128, 128
          %280 = vsyncadd %s274, %s279
          %s281 = sadd.s32 %s30, %s29
          %s282 = smul.addr %s281, 128
          %s283 = scalar_lea.hbm %s0, %s282
          %s285 = sshll.u32 %s277, 4
          %s286 = int_to_ptr.vmem [resolvable:$true] %s285
          %288 = dma.hbm_to_vmem [thread:$0]  %s283, 128, %s286, %s274
        $region36: #{tpu_custom_call.1} parent=31 // pred_fallthru
          _
        // Predicated region
        $region37: #{tpu_custom_call.1} parent=31 // pred_check
          %p289 = pneg %p91
        $region38: #{tpu_custom_call.1} parent=31 // pred_check_branch
          %291 = sbr.rel (%p289) target = $region40
        $region39: #{tpu_custom_call.1} parent=31 // pred_region
          %s292 = sand.u32 %s22, 1
          %s293 = scalar_lea.sflag [#allocation10], %s292
          %s294 = sand.u32 %s81, 1
          %s295 = smul.addr %s294, 8
          %s296 = scalar_lea.vmem [#allocation9], %s295
          %s298 = ssub.s32 128, 128
          %299 = vsyncadd %s293, %s298
          %s300 = sadd.s32 %s31, %s29
          %s301 = smul.addr %s300, 128
          %s302 = scalar_lea.hbm %s1, %s301
          %s304 = sshll.u32 %s296, 4
          %s305 = int_to_ptr.vmem [resolvable:$true] %s304
          %307 = dma.hbm_to_vmem [thread:$0]  %s302, 128, %s305, %s293
        $region40: #{tpu_custom_call.1} parent=31 // pred_fallthru
          _
      $region32: #{tpu_custom_call.1} parent=5 // pred_fallthru
        _
      %p308 = scmp.le.s32.totalorder 1, %s22
      %p309 = scmp.lt.s32.totalorder %s22, 3
      %p310 = pnand %p308, %p309
      %p311 = pneg %p310
      // Predicated region
      $region41: #{tpu_custom_call.1} parent=5 // pred_check
        _
      $region42: #{tpu_custom_call.1} parent=5 // pred_check_branch
        %313 = sbr.rel (%p310) target = $region44
      $region43: #{tpu_custom_call.1} parent=5 // pred_region
        %s314 = ssub.s32 %s22, 1
        %s315 = sand.u32 %s56, 1
        %s316 = scalar_lea.sflag [#allocation7], %s315
        %s317 = sand.u32 %s56, 1
        %s318 = smul.addr %s317, 8
        %s319 = scalar_lea.vmem [#allocation6], %s318
        // Predicated region
        $region45: #{tpu_custom_call.1} parent=43 // pred_check
          %p320 = pneg %p69
        $region46: #{tpu_custom_call.1} parent=43 // pred_check_branch
          %322 = sbr.rel (%p320) target = $region48
        $region47: #{tpu_custom_call.1} parent=43 // pred_region
          %323 = dma.done %s316, 128
        $region48: #{tpu_custom_call.1} parent=43 // pred_fallthru
          _
        %s324 = sand.u32 %s27, 1
        %s325 = scalar_lea.sflag [#allocation10], %s324
        %s326 = sand.u32 %s84, 1
        %s327 = smul.addr %s326, 8
        %s328 = scalar_lea.vmem [#allocation9], %s327
        // Predicated region
        $region49: #{tpu_custom_call.1} parent=43 // pred_check
          %p329 = pneg %p97
        $region50: #{tpu_custom_call.1} parent=43 // pred_check_branch
          %331 = sbr.rel (%p329) target = $region52
        $region51: #{tpu_custom_call.1} parent=43 // pred_region
          %332 = dma.done %s325, 128
        $region52: #{tpu_custom_call.1} parent=43 // pred_fallthru
          _
        // Predicated region
        $region53: #{tpu_custom_call.1} parent=43 // pred_check
          %p333 = pneg %p118
        $region54: #{tpu_custom_call.1} parent=43 // pred_check_branch
          %335 = sbr.rel (%p333) target = $region56
        $region55: #{tpu_custom_call.1} parent=43 // pred_region
          %336 = dma.done [#allocation10], 512
        $region56: #{tpu_custom_call.1} parent=43 // pred_fallthru
          _
        // Predicated region
        $region57: #{tpu_custom_call.1} parent=43 // pred_check
          %p337 = pneg %p139
        $region58: #{tpu_custom_call.1} parent=43 // pred_check_branch
          %339 = sbr.rel (%p337) target = $region60
        $region59: #{tpu_custom_call.1} parent=43 // pred_region
          %340 = dma.done [#allocation13], 512
        $region60: #{tpu_custom_call.1} parent=43 // pred_fallthru
          _
        // Predicated region
        $region61: #{tpu_custom_call.1} parent=43 // pred_check
          %p341 = pneg %p160
        $region62: #{tpu_custom_call.1} parent=43 // pred_check_branch
          %343 = sbr.rel (%p341) target = $region64
        $region63: #{tpu_custom_call.1} parent=43 // pred_region
          %344 = dma.done [#allocation13], 512
        $region64: #{tpu_custom_call.1} parent=43 // pred_fallthru
          _
        %s345 = sand.u32 %s56, 1
        %s346 = scalar_lea.sflag [#allocation7], %s345
        %s347 = sand.u32 %s56, 1
        %s348 = smul.addr %s347, 8
        %s349 = scalar_lea.vmem [#allocation6], %s348
        %p350 = pneg %p69
        %p351 = pneg %p66
        %s352 = sand.u32 %s27, 1
        %s353 = scalar_lea.sflag [#allocation10], %s352
        %s354 = sand.u32 %s84, 1
        %s355 = smul.addr %s354, 8
        %s356 = scalar_lea.vmem [#allocation9], %s355
        %p357 = pneg %p97
        %p358 = pneg %p94
        %p359 = pneg %p118
        %p360 = pneg %p115
        %p361 = pneg %p139
        %p362 = pneg %p136
        %p363 = pneg %p160
        %p364 = pneg %p157
        %p365 = pneg %p181
        %p366 = pneg %p178
        %p367 = pneg %p209
        %p368 = pneg %p206
        %s369 = sand.u32 %s196, 1
        %s370 = scalar_lea.sflag [#allocation8], %s369
        %s371 = sand.u32 %s196, 1
        %s372 = smul.addr %s371, 8
        %s373 = scalar_lea.vmem [#allocation15], %s372
        %p374 = scmp.eq.s32.totalorder %s34, 0
        // Predicated region
        $region65: #{tpu_custom_call.1} parent=43 // pred_check
          %p375 = pneg %p374
        $region66: #{tpu_custom_call.1} parent=43 // pred_check_branch
          %377 = sbr.rel (%p375) target = $region68
        $region67: #{tpu_custom_call.1} parent=43 // pred_region
          %v378 = vld [vmem:[%s319] sm:$0xff]
          %v379 = vmul.f32 %v378, 0.5
          %381 = vrot.lane.b32.xlu0 %v379, 124
          %v382 = vpop.permute.xlu0 %381
          %384 = vrot.lane.b32.xlu0 %v379, 120
          %v385 = vpop.permute.xlu0 %384
          %387 = vrot.lane.b32.xlu0 %v379, 116
          %v388 = vpop.permute.xlu0 %387
          %390 = vrot.lane.b32.xlu0 %v379, 112
          %v391 = vpop.permute.xlu0 %390
          %393 = vrot.lane.b32.xlu0 %v379, 108
          %v394 = vpop.permute.xlu0 %393
          %396 = vrot.lane.b32.xlu0 %v379, 104
          %v397 = vpop.permute.xlu0 %396
          %399 = vrot.lane.b32.xlu0 %v379, 100
          %v400 = vpop.permute.xlu0 %399
          %v402 = vcombine.low %v379, %v385
          %v403 = vcombine.high %v379, %v385
          %v405 = vunpack.c.l.s4 1983009808
          %v406 = vunpack.c.0.s8 %v405
          %v407 = vlaneseq
          %v408 = vshrl.u32 %v407, 7
          %v409 = vsub.s32 %v406, %v408
          %v410 = vrot.slane %v402, %v409
          %v412 = vunpack.c.l.s4 1983009808
          %v413 = vunpack.c.0.s8 %v412
          %v414 = vlaneseq
          %v415 = vshrl.u32 %v414, 7
          %v416 = vsub.s32 %v413, %v415
          %v417 = vrot.slane %v403, %v416
          %v418 = vcombine.low %v382, %v388
          %v419 = vcombine.high %v382, %v388
          %v421 = vunpack.c.l.s4 1983009808
          %v422 = vunpack.c.0.s8 %v421
          %v423 = vlaneseq
          %v424 = vshrl.u32 %v423, 7
          %v425 = vsub.s32 %v422, %v424
          %v426 = vrot.slane %v418, %v425
          %v428 = vunpack.c.l.s4 1983009808
          %v429 = vunpack.c.0.s8 %v428
          %v430 = vlaneseq
          %v431 = vshrl.u32 %v430, 7
          %v432 = vsub.s32 %v429, %v431
          %v433 = vrot.slane %v419, %v432
          %v434 = vcombine.low %v391, %v397
          %v435 = vcombine.high %v391, %v397
          %v437 = vunpack.c.l.s4 1983009808
          %v438 = vunpack.c.0.s8 %v437
          %v439 = vlaneseq
          %v440 = vshrl.u32 %v439, 7
          %v441 = vsub.s32 %v438, %v440
          %v442 = vrot.slane %v434, %v441
          %v444 = vunpack.c.l.s4 1983009808
          %v445 = vunpack.c.0.s8 %v444
          %v446 = vlaneseq
          %v447 = vshrl.u32 %v446, 7
          %v448 = vsub.s32 %v445, %v447
          %v449 = vrot.slane %v435, %v448
          %v450 = vcombine.low %v394, %v400
          %v451 = vcombine.high %v394, %v400
          %v453 = vunpack.c.l.s4 1983009808
          %v454 = vunpack.c.0.s8 %v453
          %v455 = vlaneseq
          %v456 = vshrl.u32 %v455, 7
          %v457 = vsub.s32 %v454, %v456
          %v458 = vrot.slane %v450, %v457
          %v460 = vunpack.c.l.s4 1983009808
          %v461 = vunpack.c.0.s8 %v460
          %v462 = vlaneseq
          %v463 = vshrl.u32 %v462, 7
          %v464 = vsub.s32 %v461, %v463
          %v465 = vrot.slane %v451, %v464
          %v466 = vcombine.low %v410, %v426
          %v467 = vcombine.high %v410, %v426
          %v469 = vunpack.c.l.s4 1934713408
          %v470 = vunpack.c.0.s8 %v469
          %v471 = vlaneseq
          %v472 = vshrl.u32 %v471, 7
          %v473 = vsub.s32 %v470, %v472
          %v474 = vrot.slane %v466, %v473
          %v476 = vunpack.c.l.s4 1934713408
          %v477 = vunpack.c.0.s8 %v476
          %v478 = vlaneseq
          %v479 = vshrl.u32 %v478, 7
          %v480 = vsub.s32 %v477, %v479
          %v481 = vrot.slane %v467, %v480
          %v482 = vcombine.low %v417, %v433
          %v483 = vcombine.high %v417, %v433
          %v485 = vunpack.c.l.s4 1934713408
          %v486 = vunpack.c.0.s8 %v485
          %v487 = vlaneseq
          %v488 = vshrl.u32 %v487, 7
          %v489 = vsub.s32 %v486, %v488
          %v490 = vrot.slane %v482, %v489
          %v492 = vunpack.c.l.s4 1934713408
          %v493 = vunpack.c.0.s8 %v492
          %v494 = vlaneseq
          %v495 = vshrl.u32 %v494, 7
          %v496 = vsub.s32 %v493, %v495
          %v497 = vrot.slane %v483, %v496
          %v498 = vcombine.low %v442, %v458
          %v499 = vcombine.high %v442, %v458
          %v501 = vunpack.c.l.s4 1934713408
          %v502 = vunpack.c.0.s8 %v501
          %v503 = vlaneseq
          %v504 = vshrl.u32 %v503, 7
          %v505 = vsub.s32 %v502, %v504
          %v506 = vrot.slane %v498, %v505
          %v508 = vunpack.c.l.s4 1934713408
          %v509 = vunpack.c.0.s8 %v508
          %v510 = vlaneseq
          %v511 = vshrl.u32 %v510, 7
          %v512 = vsub.s32 %v509, %v511
          %v513 = vrot.slane %v499, %v512
          %v514 = vcombine.low %v449, %v465
          %v515 = vcombine.high %v449, %v465
          %v517 = vunpack.c.l.s4 1934713408
          %v518 = vunpack.c.0.s8 %v517
          %v519 = vlaneseq
          %v520 = vshrl.u32 %v519, 7
          %v521 = vsub.s32 %v518, %v520
          %v522 = vrot.slane %v514, %v521
          %v524 = vunpack.c.l.s4 1934713408
          %v525 = vunpack.c.0.s8 %v524
          %v526 = vlaneseq
          %v527 = vshrl.u32 %v526, 7
          %v528 = vsub.s32 %v525, %v527
          %v529 = vrot.slane %v515, %v528
          %v530 = vcombine.low %v474, %v506
          %v531 = vcombine.high %v474, %v506
          %v532 = vcombine.low %v481, %v513
          %v533 = vcombine.high %v481, %v513
          %v534 = vcombine.low %v490, %v522
          %v535 = vcombine.high %v490, %v522
          %v536 = vcombine.low %v497, %v529
          %v537 = vcombine.high %v497, %v529
          %v538 = vcombine.low %v530, %v532
          %v539 = vcombine.high %v530, %v532
          %v541 = vunpack.c.l.s4 1983009808
          %v542 = vunpack.c.0.s8 %v541
          %v543 = vlaneseq
          %v544 = vshrl.u32 %v543, 7
          %v545 = vsub.s32 %v542, %v544
          %v546 = vrot.slane %v538, %v545
          %v548 = vunpack.c.l.s4 1983009808
          %v549 = vunpack.c.0.s8 %v548
          %v550 = vlaneseq
          %v551 = vshrl.u32 %v550, 7
          %v552 = vsub.s32 %v549, %v551
          %v553 = vrot.slane %v539, %v552
          %v554 = vcombine.low %v531, %v533
          %v555 = vcombine.high %v531, %v533
          %v557 = vunpack.c.l.s4 1983009808
          %v558 = vunpack.c.0.s8 %v557
          %v559 = vlaneseq
          %v560 = vshrl.u32 %v559, 7
          %v561 = vsub.s32 %v558, %v560
          %v562 = vrot.slane %v554, %v561
          %v564 = vunpack.c.l.s4 1983009808
          %v565 = vunpack.c.0.s8 %v564
          %v566 = vlaneseq
          %v567 = vshrl.u32 %v566, 7
          %v568 = vsub.s32 %v565, %v567
          %v569 = vrot.slane %v555, %v568
          %v570 = vcombine.low %v534, %v536
          %v571 = vcombine.high %v534, %v536
          %v573 = vunpack.c.l.s4 1983009808
          %v574 = vunpack.c.0.s8 %v573
          %v575 = vlaneseq
          %v576 = vshrl.u32 %v575, 7
          %v577 = vsub.s32 %v574, %v576
          %v578 = vrot.slane %v570, %v577
          %v580 = vunpack.c.l.s4 1983009808
          %v581 = vunpack.c.0.s8 %v580
          %v582 = vlaneseq
          %v583 = vshrl.u32 %v582, 7
          %v584 = vsub.s32 %v581, %v583
          %v585 = vrot.slane %v571, %v584
          %v586 = vcombine.low %v535, %v537
          %v587 = vcombine.high %v535, %v537
          %v589 = vunpack.c.l.s4 1983009808
          %v590 = vunpack.c.0.s8 %v589
          %v591 = vlaneseq
          %v592 = vshrl.u32 %v591, 7
          %v593 = vsub.s32 %v590, %v592
          %v594 = vrot.slane %v586, %v593
          %v596 = vunpack.c.l.s4 1983009808
          %v597 = vunpack.c.0.s8 %v596
          %v598 = vlaneseq
          %v599 = vshrl.u32 %v598, 7
          %v600 = vsub.s32 %v597, %v599
          %v601 = vrot.slane %v587, %v600
          %v602 = vcombine.low %v546, %v562
          %v603 = vcombine.high %v546, %v562
          %v605 = vunpack.c.l.s4 1934713408
          %v606 = vunpack.c.0.s8 %v605
          %v607 = vlaneseq
          %v608 = vshrl.u32 %v607, 7
          %v609 = vsub.s32 %v606, %v608
          %v610 = vrot.slane %v602, %v609
          %v612 = vunpack.c.l.s4 1934713408
          %v613 = vunpack.c.0.s8 %v612
          %v614 = vlaneseq
          %v615 = vshrl.u32 %v614, 7
          %v616 = vsub.s32 %v613, %v615
          %v617 = vrot.slane %v603, %v616
          %v618 = vcombine.low %v553, %v569
          %v619 = vcombine.high %v553, %v569
          %v621 = vunpack.c.l.s4 1934713408
          %v622 = vunpack.c.0.s8 %v621
          %v623 = vlaneseq
          %v624 = vshrl.u32 %v623, 7
          %v625 = vsub.s32 %v622, %v624
          %v626 = vrot.slane %v618, %v625
          %v628 = vunpack.c.l.s4 1934713408
          %v629 = vunpack.c.0.s8 %v628
          %v630 = vlaneseq
          %v631 = vshrl.u32 %v630, 7
          %v632 = vsub.s32 %v629, %v631
          %v633 = vrot.slane %v619, %v632
          %v634 = vcombine.low %v578, %v594
          %v635 = vcombine.high %v578, %v594
          %v637 = vunpack.c.l.s4 1934713408
          %v638 = vunpack.c.0.s8 %v637
          %v639 = vlaneseq
          %v640 = vshrl.u32 %v639, 7
          %v641 = vsub.s32 %v638, %v640
          %v642 = vrot.slane %v634, %v641
          %v644 = vunpack.c.l.s4 1934713408
          %v645 = vunpack.c.0.s8 %v644
          %v646 = vlaneseq
          %v647 = vshrl.u32 %v646, 7
          %v648 = vsub.s32 %v645, %v647
          %v649 = vrot.slane %v635, %v648
          %v650 = vcombine.low %v585, %v601
          %v651 = vcombine.high %v585, %v601
          %v653 = vunpack.c.l.s4 1934713408
          %v654 = vunpack.c.0.s8 %v653
          %v655 = vlaneseq
          %v656 = vshrl.u32 %v655, 7
          %v657 = vsub.s32 %v654, %v656
          %v658 = vrot.slane %v650, %v657
          %v660 = vunpack.c.l.s4 1934713408
          %v661 = vunpack.c.0.s8 %v660
          %v662 = vlaneseq
          %v663 = vshrl.u32 %v662, 7
          %v664 = vsub.s32 %v661, %v663
          %v665 = vrot.slane %v651, %v664
          %v666 = vcombine.low %v610, %v642
          %v667 = vcombine.high %v610, %v642
          %v668 = vcombine.low %v617, %v649
          %v669 = vcombine.high %v617, %v649
          %v670 = vcombine.low %v626, %v658
          %v671 = vcombine.high %v626, %v658
          %v672 = vcombine.low %v633, %v665
          %v673 = vcombine.high %v633, %v665
          %vm674 = vcmask 31744
          %675 = vst.msk [vmem:[#allocation2] sm:$0xff] %vm674, %v666
          %676 = vst.msk [vmem:[#allocation2 + $0x8] sm:$0xff] %vm674, %v667
          %677 = vst.msk [vmem:[#allocation2 + $0x10] sm:$0xff] %vm674, %v668
          %678 = vst.msk [vmem:[#allocation2 + $0x18] sm:$0xff] %vm674, %v669
          %679 = vst.msk [vmem:[#allocation2 + $0x20] sm:$0xff] %vm674, %v670
          %680 = vst.msk [vmem:[#allocation2 + $0x28] sm:$0xff] %vm674, %v671
          %681 = vst.msk [vmem:[#allocation2 + $0x30] sm:$0xff] %vm674, %v672
          %682 = vst.msk [vmem:[#allocation2 + $0x38] sm:$0xff] %vm674, %v673
          %vm683 = vcmask 7168
          %684 = vst.msk [vmem:[#allocation3] sm:$0xff] %vm683, -inf
          %685 = vst.msk [vmem:[#allocation3 + $0x8] sm:$0xff] %vm683, -inf
          %686 = vst.msk [vmem:[#allocation3 + $0x10] sm:$0xff] %vm683, -inf
          %687 = vst.msk [vmem:[#allocation3 + $0x18] sm:$0xff] %vm683, -inf
          %688 = vst.msk [vmem:[#allocation3 + $0x20] sm:$0xff] %vm683, -inf
          %689 = vst.msk [vmem:[#allocation3 + $0x28] sm:$0xff] %vm683, -inf
          %690 = vst.msk [vmem:[#allocation3 + $0x30] sm:$0xff] %vm683, -inf
          %691 = vst.msk [vmem:[#allocation3 + $0x38] sm:$0xff] %vm683, -inf
          %692 = vst.msk [vmem:[#allocation4] sm:$0xff] %vm683, 0.0
          %693 = vst.msk [vmem:[#allocation4 + $0x8] sm:$0xff] %vm683, 0.0
          %694 = vst.msk [vmem:[#allocation4 + $0x10] sm:$0xff] %vm683, 0.0
          %695 = vst.msk [vmem:[#allocation4 + $0x18] sm:$0xff] %vm683, 0.0
          %696 = vst.msk [vmem:[#allocation4 + $0x20] sm:$0xff] %vm683, 0.0
          %697 = vst.msk [vmem:[#allocation4 + $0x28] sm:$0xff] %vm683, 0.0
          %698 = vst.msk [vmem:[#allocation4 + $0x30] sm:$0xff] %vm683, 0.0
          %699 = vst.msk [vmem:[#allocation4 + $0x38] sm:$0xff] %vm683, 0.0
          %700 = vst.msk [vmem:[#allocation5] sm:$0xff] %vm674, 0.0
          %701 = vst.msk [vmem:[#allocation5 + $0x8] sm:$0xff] %vm674, 0.0
          %702 = vst.msk [vmem:[#allocation5 + $0x10] sm:$0xff] %vm674, 0.0
          %703 = vst.msk [vmem:[#allocation5 + $0x18] sm:$0xff] %vm674, 0.0
          %704 = vst.msk [vmem:[#allocation5 + $0x20] sm:$0xff] %vm674, 0.0
          %705 = vst.msk [vmem:[#allocation5 + $0x28] sm:$0xff] %vm674, 0.0
          %706 = vst.msk [vmem:[#allocation5 + $0x30] sm:$0xff] %vm674, 0.0
          %707 = vst.msk [vmem:[#allocation5 + $0x38] sm:$0xff] %vm674, 0.0
        $region68: #{tpu_custom_call.1} parent=43 // pred_fallthru
          _
        %v708 = vld [vmem:[%s328] sm:$0xff]
        %v709 = vld [vmem:[#allocation11] sm:$0xff]
        %v710 = vld [vmem:[#allocation11 + $0x8] sm:$0xff]
        %v711 = vld [vmem:[#allocation11 + $0x10] sm:$0xff]
        %v712 = vld [vmem:[#allocation11 + $0x18] sm:$0xff]
        %vm713 = vcmask 261120
        %v715 = vsel %vm713, %v708, 0
        %717 = vmatprep.subr.mxu0 0.0
        %718 = vmatpush1.msra.mxu0 0.0
        %719 = vmatprep.subr.mxu0 0.0
        %720 = vmatpush1.msra.mxu0 0.0
        %721 = vmatprep.subr.mxu0 0.0
        %722 = vmatpush1.msra.mxu0 0.0
        %723 = vmatprep.subr.mxu0 0.0
        %724 = vmatpush1.msra.mxu0 0.0
        %725 = vmatprep.subr.mxu0 0.0
        %726 = vmatpush1.msra.mxu0 0.0
        %727 = vmatprep.subr.mxu0 0.0
        %728 = vmatpush1.msra.mxu0 0.0
        %729 = vmatprep.subr.mxu0 0.0
        %730 = vmatpush1.msra.mxu0 0.0
        %731 = vmatprep.subr.mxu0 0.0
        %732 = vmatpush1.msra.mxu0 0.0
        %733 = vmatprep.subr.mxu0 0.0
        %734 = vmatpush1.msra.mxu0 0.0
        %735 = vmatprep.subr.mxu0 0.0
        %736 = vmatpush1.msra.mxu0 0.0
        %737 = vmatprep.subr.mxu0 0.0
        %738 = vmatpush1.msra.mxu0 0.0
        %739 = vmatprep.subr.mxu0 0.0
        %740 = vmatpush1.msra.mxu0 0.0
        %741 = vmatprep.subr.mxu0 0.0
        %742 = vmatpush1.msra.mxu0 %v712
        %743 = vmatprep.subr.mxu0 0.0
        %744 = vmatpush1.msra.mxu0 %v711
        %745 = vmatprep.subr.mxu0 0.0
        %746 = vmatpush1.msra.mxu0 %v710
        %747 = vmatprep.subr.mxu0 0.0
        %748 = vmatpush1.msra.mxu0 %v709
        %749 = vmatprep.subr.mxu0 0.0
        %750 = vmatpush2.msra.mxu0 0.0
        %751 = vmatprep.subr.mxu0 0.0
        %752 = vmatpush2.msra.mxu0 0.0
        %753 = vmatprep.subr.mxu0 0.0
        %754 = vmatpush2.msra.mxu0 0.0
        %755 = vmatprep.subr.mxu0 0.0
        %756 = vmatpush2.msra.mxu0 0.0
        %757 = vmatprep.subr.mxu0 0.0
        %758 = vmatpush2.msra.mxu0 0.0
        %759 = vmatprep.subr.mxu0 0.0
        %760 = vmatpush2.msra.mxu0 0.0
        %761 = vmatprep.subr.mxu0 0.0
        %762 = vmatpush2.msra.mxu0 0.0
        %763 = vmatprep.subr.mxu0 0.0
        %764 = vmatpush2.msra.mxu0 0.0
        %765 = vmatprep.subr.mxu0 0.0
        %766 = vmatpush2.msra.mxu0 0.0
        %767 = vmatprep.subr.mxu0 0.0
        %768 = vmatpush2.msra.mxu0 0.0
        %769 = vmatprep.subr.mxu0 0.0
        %770 = vmatpush2.msra.mxu0 0.0
        %771 = vmatprep.subr.mxu0 0.0
        %772 = vmatpush2.msra.mxu0 0.0
        %773 = vmatprep.subr.mxu0 0.0
        %774 = vmatpush2.msra.mxu0 0.0
        %775 = vmatprep.subr.mxu0 0.0
        %776 = vmatpush2.msra.mxu0 0.0
        %777 = vmatprep.subr.mxu0 0.0
        %778 = vmatpush2.msra.mxu0 0.0
        %779 = vmatprep.subr.mxu0 0.0
        %780 = vmatpush2.msra.mxu0 0.0
        %781 = vmatprep.mubr.f32.mxu0 0.0
        %782 = vmatmul.mubr.f32.gmra.mxu0 %v715
        %v783 = vpop.f32.mrf.mxu0
        %v784 = vadd.f32 0.0, %v783
        %v785 = vpop.f32.mrf.mxu0
        %786 = vdwg.mxu0
        %v787 = vld [vmem:[#allocation12] sm:$0xff]
        %v788 = vld [vmem:[#allocation12 + $0x8] sm:$0xff]
        %v789 = vld [vmem:[#allocation12 + $0x10] sm:$0xff]
        %v790 = vld [vmem:[#allocation12 + $0x18] sm:$0xff]
        %791 = vmatprep.subr.mxu0 0.0
        %792 = vmatpush1.msra.mxu0 0.0
        %793 = vmatprep.subr.mxu0 0.0
        %794 = vmatpush1.msra.mxu0 0.0
        %795 = vmatprep.subr.mxu0 0.0
        %796 = vmatpush1.msra.mxu0 0.0
        %797 = vmatprep.subr.mxu0 0.0
        %798 = vmatpush1.msra.mxu0 0.0
        %799 = vmatprep.subr.mxu0 0.0
        %800 = vmatpush1.msra.mxu0 0.0
        %801 = vmatprep.subr.mxu0 0.0
        %802 = vmatpush1.msra.mxu0 0.0
        %803 = vmatprep.subr.mxu0 0.0
        %804 = vmatpush1.msra.mxu0 0.0
        %805 = vmatprep.subr.mxu0 0.0
        %806 = vmatpush1.msra.mxu0 0.0
        %807 = vmatprep.subr.mxu0 0.0
        %808 = vmatpush1.msra.mxu0 0.0
        %809 = vmatprep.subr.mxu0 0.0
        %810 = vmatpush1.msra.mxu0 0.0
        %811 = vmatprep.subr.mxu0 0.0
        %812 = vmatpush1.msra.mxu0 0.0
        %813 = vmatprep.subr.mxu0 0.0
        %814 = vmatpush1.msra.mxu0 0.0
        %815 = vmatprep.subr.mxu0 0.0
        %816 = vmatpush1.msra.mxu0 %v790
        %817 = vmatprep.subr.mxu0 0.0
        %818 = vmatpush1.msra.mxu0 %v789
        %819 = vmatprep.subr.mxu0 0.0
        %820 = vmatpush1.msra.mxu0 %v788
        %821 = vmatprep.subr.mxu0 0.0
        %822 = vmatpush1.msra.mxu0 %v787
        %823 = vmatprep.subr.mxu0 0.0
        %824 = vmatpush2.msra.mxu0 0.0
        %825 = vmatprep.subr.mxu0 0.0
        %826 = vmatpush2.msra.mxu0 0.0
        %827 = vmatprep.subr.mxu0 0.0
        %828 = vmatpush2.msra.mxu0 0.0
        %829 = vmatprep.subr.mxu0 0.0
        %830 = vmatpush2.msra.mxu0 0.0
        %831 = vmatprep.subr.mxu0 0.0
        %832 = vmatpush2.msra.mxu0 0.0
        %833 = vmatprep.subr.mxu0 0.0
        %834 = vmatpush2.msra.mxu0 0.0
        %835 = vmatprep.subr.mxu0 0.0
        %836 = vmatpush2.msra.mxu0 0.0
        %837 = vmatprep.subr.mxu0 0.0
        %838 = vmatpush2.msra.mxu0 0.0
        %839 = vmatprep.subr.mxu0 0.0
        %840 = vmatpush2.msra.mxu0 0.0
        %841 = vmatprep.subr.mxu0 0.0
        %842 = vmatpush2.msra.mxu0 0.0
        %843 = vmatprep.subr.mxu0 0.0
        %844 = vmatpush2.msra.mxu0 0.0
        %845 = vmatprep.subr.mxu0 0.0
        %846 = vmatpush2.msra.mxu0 0.0
        %847 = vmatprep.subr.mxu0 0.0
        %848 = vmatpush2.msra.mxu0 0.0
        %849 = vmatprep.subr.mxu0 0.0
        %850 = vmatpush2.msra.mxu0 0.0
        %851 = vmatprep.subr.mxu0 0.0
        %852 = vmatpush2.msra.mxu0 0.0
        %853 = vmatprep.subr.mxu0 0.0
        %854 = vmatpush2.msra.mxu0 0.0
        %855 = vmatprep.mubr.f32.mxu0 0.0
        %856 = vmatmul.mubr.f32.gmra.mxu0 %v715
        %v857 = vpop.f32.mrf.mxu0
        %v858 = vadd.f32 0.0, %v857
        %v859 = vpop.f32.mrf.mxu0
        %860 = vdwg.mxu0
        %862 = vrot.lane.b32.xlu0 %v784, 124
        %v863 = vpop.permute.xlu0 %862
        %865 = vrot.lane.b32.xlu0 %v784, 120
        %v866 = vpop.permute.xlu0 %865
        %868 = vrot.lane.b32.xlu0 %v784, 116
        %v869 = vpop.permute.xlu0 %868
        %871 = vrot.lane.b32.xlu0 %v784, 112
        %v872 = vpop.permute.xlu0 %871
        %874 = vrot.lane.b32.xlu0 %v784, 108
        %v875 = vpop.permute.xlu0 %874
        %877 = vrot.lane.b32.xlu0 %v784, 104
        %v878 = vpop.permute.xlu0 %877
        %880 = vrot.lane.b32.xlu0 %v784, 100
        %v881 = vpop.permute.xlu0 %880
        %v883 = vcombine.low %v784, %v866
        %v884 = vcombine.high %v784, %v866
        %v886 = vunpack.c.l.s4 1983009808
        %v887 = vunpack.c.0.s8 %v886
        %v888 = vlaneseq
        %v889 = vshrl.u32 %v888, 7
        %v890 = vsub.s32 %v887, %v889
        %v891 = vrot.slane %v883, %v890
        %v893 = vunpack.c.l.s4 1983009808
        %v894 = vunpack.c.0.s8 %v893
        %v895 = vlaneseq
        %v896 = vshrl.u32 %v895, 7
        %v897 = vsub.s32 %v894, %v896
        %v898 = vrot.slane %v884, %v897
        %v899 = vcombine.low %v863, %v869
        %v900 = vcombine.high %v863, %v869
        %v902 = vunpack.c.l.s4 1983009808
        %v903 = vunpack.c.0.s8 %v902
        %v904 = vlaneseq
        %v905 = vshrl.u32 %v904, 7
        %v906 = vsub.s32 %v903, %v905
        %v907 = vrot.slane %v899, %v906
        %v909 = vunpack.c.l.s4 1983009808
        %v910 = vunpack.c.0.s8 %v909
        %v911 = vlaneseq
        %v912 = vshrl.u32 %v911, 7
        %v913 = vsub.s32 %v910, %v912
        %v914 = vrot.slane %v900, %v913
        %v915 = vcombine.low %v872, %v878
        %v916 = vcombine.high %v872, %v878
        %v918 = vunpack.c.l.s4 1983009808
        %v919 = vunpack.c.0.s8 %v918
        %v920 = vlaneseq
        %v921 = vshrl.u32 %v920, 7
        %v922 = vsub.s32 %v919, %v921
        %v923 = vrot.slane %v915, %v922
        %v925 = vunpack.c.l.s4 1983009808
        %v926 = vunpack.c.0.s8 %v925
        %v927 = vlaneseq
        %v928 = vshrl.u32 %v927, 7
        %v929 = vsub.s32 %v926, %v928
        %v930 = vrot.slane %v916, %v929
        %v931 = vcombine.low %v875, %v881
        %v932 = vcombine.high %v875, %v881
        %v934 = vunpack.c.l.s4 1983009808
        %v935 = vunpack.c.0.s8 %v934
        %v936 = vlaneseq
        %v937 = vshrl.u32 %v936, 7
        %v938 = vsub.s32 %v935, %v937
        %v939 = vrot.slane %v931, %v938
        %v941 = vunpack.c.l.s4 1983009808
        %v942 = vunpack.c.0.s8 %v941
        %v943 = vlaneseq
        %v944 = vshrl.u32 %v943, 7
        %v945 = vsub.s32 %v942, %v944
        %v946 = vrot.slane %v932, %v945
        %v947 = vcombine.low %v891, %v907
        %v948 = vcombine.high %v891, %v907
        %v950 = vunpack.c.l.s4 1934713408
        %v951 = vunpack.c.0.s8 %v950
        %v952 = vlaneseq
        %v953 = vshrl.u32 %v952, 7
        %v954 = vsub.s32 %v951, %v953
        %v955 = vrot.slane %v947, %v954
        %v957 = vunpack.c.l.s4 1934713408
        %v958 = vunpack.c.0.s8 %v957
        %v959 = vlaneseq
        %v960 = vshrl.u32 %v959, 7
        %v961 = vsub.s32 %v958, %v960
        %v962 = vrot.slane %v948, %v961
        %v963 = vcombine.low %v898, %v914
        %v964 = vcombine.high %v898, %v914
        %v966 = vunpack.c.l.s4 1934713408
        %v967 = vunpack.c.0.s8 %v966
        %v968 = vlaneseq
        %v969 = vshrl.u32 %v968, 7
        %v970 = vsub.s32 %v967, %v969
        %v971 = vrot.slane %v963, %v970
        %v973 = vunpack.c.l.s4 1934713408
        %v974 = vunpack.c.0.s8 %v973
        %v975 = vlaneseq
        %v976 = vshrl.u32 %v975, 7
        %v977 = vsub.s32 %v974, %v976
        %v978 = vrot.slane %v964, %v977
        %v979 = vcombine.low %v923, %v939
        %v980 = vcombine.high %v923, %v939
        %v982 = vunpack.c.l.s4 1934713408
        %v983 = vunpack.c.0.s8 %v982
        %v984 = vlaneseq
        %v985 = vshrl.u32 %v984, 7
        %v986 = vsub.s32 %v983, %v985
        %v987 = vrot.slane %v979, %v986
        %v989 = vunpack.c.l.s4 1934713408
        %v990 = vunpack.c.0.s8 %v989
        %v991 = vlaneseq
        %v992 = vshrl.u32 %v991, 7
        %v993 = vsub.s32 %v990, %v992
        %v994 = vrot.slane %v980, %v993
        %v995 = vcombine.low %v930, %v946
        %v996 = vcombine.high %v930, %v946
        %v998 = vunpack.c.l.s4 1934713408
        %v999 = vunpack.c.0.s8 %v998
        %v1000 = vlaneseq
        %v1001 = vshrl.u32 %v1000, 7
        %v1002 = vsub.s32 %v999, %v1001
        %v1003 = vrot.slane %v995, %v1002
        %v1005 = vunpack.c.l.s4 1934713408
        %v1006 = vunpack.c.0.s8 %v1005
        %v1007 = vlaneseq
        %v1008 = vshrl.u32 %v1007, 7
        %v1009 = vsub.s32 %v1006, %v1008
        %v1010 = vrot.slane %v996, %v1009
        %v1011 = vcombine.low %v955, %v987
        %v1012 = vcombine.high %v955, %v987
        %v1013 = vcombine.low %v962, %v994
        %v1014 = vcombine.high %v962, %v994
        %v1015 = vcombine.low %v971, %v1003
        %v1016 = vcombine.high %v971, %v1003
        %v1017 = vcombine.low %v978, %v1010
        %v1018 = vcombine.high %v978, %v1010
        %v1019 = vcombine.low %v1011, %v1013
        %v1020 = vcombine.high %v1011, %v1013
        %v1022 = vunpack.c.l.s4 1983009808
        %v1023 = vunpack.c.0.s8 %v1022
        %v1024 = vlaneseq
        %v1025 = vshrl.u32 %v1024, 7
        %v1026 = vsub.s32 %v1023, %v1025
        %v1027 = vrot.slane %v1019, %v1026
        %v1029 = vunpack.c.l.s4 1983009808
        %v1030 = vunpack.c.0.s8 %v1029
        %v1031 = vlaneseq
        %v1032 = vshrl.u32 %v1031, 7
        %v1033 = vsub.s32 %v1030, %v1032
        %v1034 = vrot.slane %v1020, %v1033
        %v1035 = vcombine.low %v1012, %v1014
        %v1036 = vcombine.high %v1012, %v1014
        %v1038 = vunpack.c.l.s4 1983009808
        %v1039 = vunpack.c.0.s8 %v1038
        %v1040 = vlaneseq
        %v1041 = vshrl.u32 %v1040, 7
        %v1042 = vsub.s32 %v1039, %v1041
        %v1043 = vrot.slane %v1035, %v1042
        %v1045 = vunpack.c.l.s4 1983009808
        %v1046 = vunpack.c.0.s8 %v1045
        %v1047 = vlaneseq
        %v1048 = vshrl.u32 %v1047, 7
        %v1049 = vsub.s32 %v1046, %v1048
        %v1050 = vrot.slane %v1036, %v1049
        %v1051 = vcombine.low %v1015, %v1017
        %v1052 = vcombine.high %v1015, %v1017
        %v1054 = vunpack.c.l.s4 1983009808
        %v1055 = vunpack.c.0.s8 %v1054
        %v1056 = vlaneseq
        %v1057 = vshrl.u32 %v1056, 7
        %v1058 = vsub.s32 %v1055, %v1057
        %v1059 = vrot.slane %v1051, %v1058
        %v1061 = vunpack.c.l.s4 1983009808
        %v1062 = vunpack.c.0.s8 %v1061
        %v1063 = vlaneseq
        %v1064 = vshrl.u32 %v1063, 7
        %v1065 = vsub.s32 %v1062, %v1064
        %v1066 = vrot.slane %v1052, %v1065
        %v1067 = vcombine.low %v1016, %v1018
        %v1068 = vcombine.high %v1016, %v1018
        %v1070 = vunpack.c.l.s4 1983009808
        %v1071 = vunpack.c.0.s8 %v1070
        %v1072 = vlaneseq
        %v1073 = vshrl.u32 %v1072, 7
        %v1074 = vsub.s32 %v1071, %v1073
        %v1075 = vrot.slane %v1067, %v1074
        %v1077 = vunpack.c.l.s4 1983009808
        %v1078 = vunpack.c.0.s8 %v1077
        %v1079 = vlaneseq
        %v1080 = vshrl.u32 %v1079, 7
        %v1081 = vsub.s32 %v1078, %v1080
        %v1082 = vrot.slane %v1068, %v1081
        %v1083 = vcombine.low %v1027, %v1043
        %v1084 = vcombine.high %v1027, %v1043
        %v1086 = vunpack.c.l.s4 1934713408
        %v1087 = vunpack.c.0.s8 %v1086
        %v1088 = vlaneseq
        %v1089 = vshrl.u32 %v1088, 7
        %v1090 = vsub.s32 %v1087, %v1089
        %v1091 = vrot.slane %v1083, %v1090
        %v1093 = vunpack.c.l.s4 1934713408
        %v1094 = vunpack.c.0.s8 %v1093
        %v1095 = vlaneseq
        %v1096 = vshrl.u32 %v1095, 7
        %v1097 = vsub.s32 %v1094, %v1096
        %v1098 = vrot.slane %v1084, %v1097
        %v1099 = vcombine.low %v1034, %v1050
        %v1100 = vcombine.high %v1034, %v1050
        %v1102 = vunpack.c.l.s4 1934713408
        %v1103 = vunpack.c.0.s8 %v1102
        %v1104 = vlaneseq
        %v1105 = vshrl.u32 %v1104, 7
        %v1106 = vsub.s32 %v1103, %v1105
        %v1107 = vrot.slane %v1099, %v1106
        %v1109 = vunpack.c.l.s4 1934713408
        %v1110 = vunpack.c.0.s8 %v1109
        %v1111 = vlaneseq
        %v1112 = vshrl.u32 %v1111, 7
        %v1113 = vsub.s32 %v1110, %v1112
        %v1114 = vrot.slane %v1100, %v1113
        %v1115 = vcombine.low %v1059, %v1075
        %v1116 = vcombine.high %v1059, %v1075
        %v1118 = vunpack.c.l.s4 1934713408
        %v1119 = vunpack.c.0.s8 %v1118
        %v1120 = vlaneseq
        %v1121 = vshrl.u32 %v1120, 7
        %v1122 = vsub.s32 %v1119, %v1121
        %v1123 = vrot.slane %v1115, %v1122
        %v1125 = vunpack.c.l.s4 1934713408
        %v1126 = vunpack.c.0.s8 %v1125
        %v1127 = vlaneseq
        %v1128 = vshrl.u32 %v1127, 7
        %v1129 = vsub.s32 %v1126, %v1128
        %v1130 = vrot.slane %v1116, %v1129
        %v1131 = vcombine.low %v1066, %v1082
        %v1132 = vcombine.high %v1066, %v1082
        %v1134 = vunpack.c.l.s4 1934713408
        %v1135 = vunpack.c.0.s8 %v1134
        %v1136 = vlaneseq
        %v1137 = vshrl.u32 %v1136, 7
        %v1138 = vsub.s32 %v1135, %v1137
        %v1139 = vrot.slane %v1131, %v1138
        %v1141 = vunpack.c.l.s4 1934713408
        %v1142 = vunpack.c.0.s8 %v1141
        %v1143 = vlaneseq
        %v1144 = vshrl.u32 %v1143, 7
        %v1145 = vsub.s32 %v1142, %v1144
        %v1146 = vrot.slane %v1132, %v1145
        %v1147 = vcombine.low %v1091, %v1123
        %v1148 = vcombine.high %v1091, %v1123
        %v1149 = vcombine.low %v1098, %v1130
        %v1150 = vcombine.high %v1098, %v1130
        %v1151 = vcombine.low %v1107, %v1139
        %v1152 = vcombine.high %v1107, %v1139
        %v1153 = vcombine.low %v1114, %v1146
        %v1154 = vcombine.high %v1114, %v1146
        %1156 = vrot.lane.b32.xlu0 %v858, 124
        %v1157 = vpop.permute.xlu0 %1156
        %1159 = vrot.lane.b32.xlu0 %v858, 120
        %v1160 = vpop.permute.xlu0 %1159
        %1162 = vrot.lane.b32.xlu0 %v858, 116
        %v1163 = vpop.permute.xlu0 %1162
        %1165 = vrot.lane.b32.xlu0 %v858, 112
        %v1166 = vpop.permute.xlu0 %1165
        %1168 = vrot.lane.b32.xlu0 %v858, 108
        %v1169 = vpop.permute.xlu0 %1168
        %1171 = vrot.lane.b32.xlu0 %v858, 104
        %v1172 = vpop.permute.xlu0 %1171
        %1174 = vrot.lane.b32.xlu0 %v858, 100
        %v1175 = vpop.permute.xlu0 %1174
        %v1177 = vcombine.low %v858, %v1160
        %v1178 = vcombine.high %v858, %v1160
        %v1180 = vunpack.c.l.s4 1983009808
        %v1181 = vunpack.c.0.s8 %v1180
        %v1182 = vlaneseq
        %v1183 = vshrl.u32 %v1182, 7
        %v1184 = vsub.s32 %v1181, %v1183
        %v1185 = vrot.slane %v1177, %v1184
        %v1187 = vunpack.c.l.s4 1983009808
        %v1188 = vunpack.c.0.s8 %v1187
        %v1189 = vlaneseq
        %v1190 = vshrl.u32 %v1189, 7
        %v1191 = vsub.s32 %v1188, %v1190
        %v1192 = vrot.slane %v1178, %v1191
        %v1193 = vcombine.low %v1157, %v1163
        %v1194 = vcombine.high %v1157, %v1163
        %v1196 = vunpack.c.l.s4 1983009808
        %v1197 = vunpack.c.0.s8 %v1196
        %v1198 = vlaneseq
        %v1199 = vshrl.u32 %v1198, 7
        %v1200 = vsub.s32 %v1197, %v1199
        %v1201 = vrot.slane %v1193, %v1200
        %v1203 = vunpack.c.l.s4 1983009808
        %v1204 = vunpack.c.0.s8 %v1203
        %v1205 = vlaneseq
        %v1206 = vshrl.u32 %v1205, 7
        %v1207 = vsub.s32 %v1204, %v1206
        %v1208 = vrot.slane %v1194, %v1207
        %v1209 = vcombine.low %v1166, %v1172
        %v1210 = vcombine.high %v1166, %v1172
        %v1212 = vunpack.c.l.s4 1983009808
        %v1213 = vunpack.c.0.s8 %v1212
        %v1214 = vlaneseq
        %v1215 = vshrl.u32 %v1214, 7
        %v1216 = vsub.s32 %v1213, %v1215
        %v1217 = vrot.slane %v1209, %v1216
        %v1219 = vunpack.c.l.s4 1983009808
        %v1220 = vunpack.c.0.s8 %v1219
        %v1221 = vlaneseq
        %v1222 = vshrl.u32 %v1221, 7
        %v1223 = vsub.s32 %v1220, %v1222
        %v1224 = vrot.slane %v1210, %v1223
        %v1225 = vcombine.low %v1169, %v1175
        %v1226 = vcombine.high %v1169, %v1175
        %v1228 = vunpack.c.l.s4 1983009808
        %v1229 = vunpack.c.0.s8 %v1228
        %v1230 = vlaneseq
        %v1231 = vshrl.u32 %v1230, 7
        %v1232 = vsub.s32 %v1229, %v1231
        %v1233 = vrot.slane %v1225, %v1232
        %v1235 = vunpack.c.l.s4 1983009808
        %v1236 = vunpack.c.0.s8 %v1235
        %v1237 = vlaneseq
        %v1238 = vshrl.u32 %v1237, 7
        %v1239 = vsub.s32 %v1236, %v1238
        %v1240 = vrot.slane %v1226, %v1239
        %v1241 = vcombine.low %v1185, %v1201
        %v1242 = vcombine.high %v1185, %v1201
        %v1244 = vunpack.c.l.s4 1934713408
        %v1245 = vunpack.c.0.s8 %v1244
        %v1246 = vlaneseq
        %v1247 = vshrl.u32 %v1246, 7
        %v1248 = vsub.s32 %v1245, %v1247
        %v1249 = vrot.slane %v1241, %v1248
        %v1251 = vunpack.c.l.s4 1934713408
        %v1252 = vunpack.c.0.s8 %v1251
        %v1253 = vlaneseq
        %v1254 = vshrl.u32 %v1253, 7
        %v1255 = vsub.s32 %v1252, %v1254
        %v1256 = vrot.slane %v1242, %v1255
        %v1257 = vcombine.low %v1192, %v1208
        %v1258 = vcombine.high %v1192, %v1208
        %v1260 = vunpack.c.l.s4 1934713408
        %v1261 = vunpack.c.0.s8 %v1260
        %v1262 = vlaneseq
        %v1263 = vshrl.u32 %v1262, 7
        %v1264 = vsub.s32 %v1261, %v1263
        %v1265 = vrot.slane %v1257, %v1264
        %v1267 = vunpack.c.l.s4 1934713408
        %v1268 = vunpack.c.0.s8 %v1267
        %v1269 = vlaneseq
        %v1270 = vshrl.u32 %v1269, 7
        %v1271 = vsub.s32 %v1268, %v1270
        %v1272 = vrot.slane %v1258, %v1271
        %v1273 = vcombine.low %v1217, %v1233
        %v1274 = vcombine.high %v1217, %v1233
        %v1276 = vunpack.c.l.s4 1934713408
        %v1277 = vunpack.c.0.s8 %v1276
        %v1278 = vlaneseq
        %v1279 = vshrl.u32 %v1278, 7
        %v1280 = vsub.s32 %v1277, %v1279
        %v1281 = vrot.slane %v1273, %v1280
        %v1283 = vunpack.c.l.s4 1934713408
        %v1284 = vunpack.c.0.s8 %v1283
        %v1285 = vlaneseq
        %v1286 = vshrl.u32 %v1285, 7
        %v1287 = vsub.s32 %v1284, %v1286
        %v1288 = vrot.slane %v1274, %v1287
        %v1289 = vcombine.low %v1224, %v1240
        %v1290 = vcombine.high %v1224, %v1240
        %v1292 = vunpack.c.l.s4 1934713408
        %v1293 = vunpack.c.0.s8 %v1292
        %v1294 = vlaneseq
        %v1295 = vshrl.u32 %v1294, 7
        %v1296 = vsub.s32 %v1293, %v1295
        %v1297 = vrot.slane %v1289, %v1296
        %v1299 = vunpack.c.l.s4 1934713408
        %v1300 = vunpack.c.0.s8 %v1299
        %v1301 = vlaneseq
        %v1302 = vshrl.u32 %v1301, 7
        %v1303 = vsub.s32 %v1300, %v1302
        %v1304 = vrot.slane %v1290, %v1303
        %v1305 = vcombine.low %v1249, %v1281
        %v1306 = vcombine.high %v1249, %v1281
        %v1307 = vcombine.low %v1256, %v1288
        %v1308 = vcombine.high %v1256, %v1288
        %v1309 = vcombine.low %v1265, %v1297
        %v1310 = vcombine.high %v1265, %v1297
        %v1311 = vcombine.low %v1272, %v1304
        %v1312 = vcombine.high %v1272, %v1304
        %v1313 = vcombine.low %v1305, %v1307
        %v1314 = vcombine.high %v1305, %v1307
        %v1316 = vunpack.c.l.s4 1983009808
        %v1317 = vunpack.c.0.s8 %v1316
        %v1318 = vlaneseq
        %v1319 = vshrl.u32 %v1318, 7
        %v1320 = vsub.s32 %v1317, %v1319
        %v1321 = vrot.slane %v1313, %v1320
        %v1323 = vunpack.c.l.s4 1983009808
        %v1324 = vunpack.c.0.s8 %v1323
        %v1325 = vlaneseq
        %v1326 = vshrl.u32 %v1325, 7
        %v1327 = vsub.s32 %v1324, %v1326
        %v1328 = vrot.slane %v1314, %v1327
        %v1329 = vcombine.low %v1306, %v1308
        %v1330 = vcombine.high %v1306, %v1308
        %v1332 = vunpack.c.l.s4 1983009808
        %v1333 = vunpack.c.0.s8 %v1332
        %v1334 = vlaneseq
        %v1335 = vshrl.u32 %v1334, 7
        %v1336 = vsub.s32 %v1333, %v1335
        %v1337 = vrot.slane %v1329, %v1336
        %v1339 = vunpack.c.l.s4 1983009808
        %v1340 = vunpack.c.0.s8 %v1339
        %v1341 = vlaneseq
        %v1342 = vshrl.u32 %v1341, 7
        %v1343 = vsub.s32 %v1340, %v1342
        %v1344 = vrot.slane %v1330, %v1343
        %v1345 = vcombine.low %v1309, %v1311
        %v1346 = vcombine.high %v1309, %v1311
        %v1348 = vunpack.c.l.s4 1983009808
        %v1349 = vunpack.c.0.s8 %v1348
        %v1350 = vlaneseq
        %v1351 = vshrl.u32 %v1350, 7
        %v1352 = vsub.s32 %v1349, %v1351
        %v1353 = vrot.slane %v1345, %v1352
        %v1355 = vunpack.c.l.s4 1983009808
        %v1356 = vunpack.c.0.s8 %v1355
        %v1357 = vlaneseq
        %v1358 = vshrl.u32 %v1357, 7
        %v1359 = vsub.s32 %v1356, %v1358
        %v1360 = vrot.slane %v1346, %v1359
        %v1361 = vcombine.low %v1310, %v1312
        %v1362 = vcombine.high %v1310, %v1312
        %v1364 = vunpack.c.l.s4 1983009808
        %v1365 = vunpack.c.0.s8 %v1364
        %v1366 = vlaneseq
        %v1367 = vshrl.u32 %v1366, 7
        %v1368 = vsub.s32 %v1365, %v1367
        %v1369 = vrot.slane %v1361, %v1368
        %v1371 = vunpack.c.l.s4 1983009808
        %v1372 = vunpack.c.0.s8 %v1371
        %v1373 = vlaneseq
        %v1374 = vshrl.u32 %v1373, 7
        %v1375 = vsub.s32 %v1372, %v1374
        %v1376 = vrot.slane %v1362, %v1375
        %v1377 = vcombine.low %v1321, %v1337
        %v1378 = vcombine.high %v1321, %v1337
        %v1380 = vunpack.c.l.s4 1934713408
        %v1381 = vunpack.c.0.s8 %v1380
        %v1382 = vlaneseq
        %v1383 = vshrl.u32 %v1382, 7
        %v1384 = vsub.s32 %v1381, %v1383
        %v1385 = vrot.slane %v1377, %v1384
        %v1387 = vunpack.c.l.s4 1934713408
        %v1388 = vunpack.c.0.s8 %v1387
        %v1389 = vlaneseq
        %v1390 = vshrl.u32 %v1389, 7
        %v1391 = vsub.s32 %v1388, %v1390
        %v1392 = vrot.slane %v1378, %v1391
        %v1393 = vcombine.low %v1328, %v1344
        %v1394 = vcombine.high %v1328, %v1344
        %v1396 = vunpack.c.l.s4 1934713408
        %v1397 = vunpack.c.0.s8 %v1396
        %v1398 = vlaneseq
        %v1399 = vshrl.u32 %v1398, 7
        %v1400 = vsub.s32 %v1397, %v1399
        %v1401 = vrot.slane %v1393, %v1400
        %v1403 = vunpack.c.l.s4 1934713408
        %v1404 = vunpack.c.0.s8 %v1403
        %v1405 = vlaneseq
        %v1406 = vshrl.u32 %v1405, 7
        %v1407 = vsub.s32 %v1404, %v1406
        %v1408 = vrot.slane %v1394, %v1407
        %v1409 = vcombine.low %v1353, %v1369
        %v1410 = vcombine.high %v1353, %v1369
        %v1412 = vunpack.c.l.s4 1934713408
        %v1413 = vunpack.c.0.s8 %v1412
        %v1414 = vlaneseq
        %v1415 = vshrl.u32 %v1414, 7
        %v1416 = vsub.s32 %v1413, %v1415
        %v1417 = vrot.slane %v1409, %v1416
        %v1419 = vunpack.c.l.s4 1934713408
        %v1420 = vunpack.c.0.s8 %v1419
        %v1421 = vlaneseq
        %v1422 = vshrl.u32 %v1421, 7
        %v1423 = vsub.s32 %v1420, %v1422
        %v1424 = vrot.slane %v1410, %v1423
        %v1425 = vcombine.low %v1360, %v1376
        %v1426 = vcombine.high %v1360, %v1376
        %v1428 = vunpack.c.l.s4 1934713408
        %v1429 = vunpack.c.0.s8 %v1428
        %v1430 = vlaneseq
        %v1431 = vshrl.u32 %v1430, 7
        %v1432 = vsub.s32 %v1429, %v1431
        %v1433 = vrot.slane %v1425, %v1432
        %v1435 = vunpack.c.l.s4 1934713408
        %v1436 = vunpack.c.0.s8 %v1435
        %v1437 = vlaneseq
        %v1438 = vshrl.u32 %v1437, 7
        %v1439 = vsub.s32 %v1436, %v1438
        %v1440 = vrot.slane %v1426, %v1439
        %v1441 = vcombine.low %v1385, %v1417
        %v1442 = vcombine.high %v1385, %v1417
        %v1443 = vcombine.low %v1392, %v1424
        %v1444 = vcombine.high %v1392, %v1424
        %v1445 = vcombine.low %v1401, %v1433
        %v1446 = vcombine.high %v1401, %v1433
        %v1447 = vcombine.low %v1408, %v1440
        %v1448 = vcombine.high %v1408, %v1440
        %v1449 = vld [vmem:[#allocation2] sm:$0xff]
        %v1450 = vld [vmem:[#allocation2 + $0x8] sm:$0xff]
        %v1451 = vld [vmem:[#allocation2 + $0x10] sm:$0xff]
        %v1452 = vld [vmem:[#allocation2 + $0x18] sm:$0xff]
        %v1453 = vld [vmem:[#allocation2 + $0x20] sm:$0xff]
        %v1454 = vld [vmem:[#allocation2 + $0x28] sm:$0xff]
        %v1455 = vld [vmem:[#allocation2 + $0x30] sm:$0xff]
        %v1456 = vld [vmem:[#allocation2 + $0x38] sm:$0xff]
        %vm1457 = vcmask 31744
        %v1459 = vsel %vm1457, %v1449, 0
        %v1462 = vsel %vm1457, %v1147, 0
        %1464 = vmatprep.subr.mxu0 0.0
        %1465 = vmatpush1.xpose.msra.mxu0 0.0
        %1466 = vmatprep.subr.mxu0 0.0
        %1467 = vmatpush1.xpose.msra.mxu0 0.0
        %1468 = vmatprep.subr.mxu0 0.0
        %1469 = vmatpush1.xpose.msra.mxu0 0.0
        %1470 = vmatprep.subr.mxu0 0.0
        %1471 = vmatpush1.xpose.msra.mxu0 0.0
        %1472 = vmatprep.subr.mxu0 0.0
        %1473 = vmatpush1.xpose.msra.mxu0 0.0
        %1474 = vmatprep.subr.mxu0 0.0
        %1475 = vmatpush1.xpose.msra.mxu0 0.0
        %1476 = vmatprep.subr.mxu0 0.0
        %1477 = vmatpush1.xpose.msra.mxu0 0.0
        %1478 = vmatprep.subr.mxu0 0.0
        %1479 = vmatpush1.xpose.msra.mxu0 0.0
        %1480 = vmatprep.subr.mxu0 0.0
        %1481 = vmatpush1.xpose.msra.mxu0 0.0
        %1482 = vmatprep.subr.mxu0 0.0
        %1483 = vmatpush1.xpose.msra.mxu0 0.0
        %1484 = vmatprep.subr.mxu0 0.0
        %1485 = vmatpush1.xpose.msra.mxu0 0.0
        %1486 = vmatprep.subr.mxu0 0.0
        %1487 = vmatpush1.xpose.msra.mxu0 0.0
        %1488 = vmatprep.subr.mxu0 0.0
        %1489 = vmatpush1.xpose.msra.mxu0 0.0
        %1490 = vmatprep.subr.mxu0 0.0
        %1491 = vmatpush1.xpose.msra.mxu0 0.0
        %1492 = vmatprep.subr.mxu0 0.0
        %1493 = vmatpush1.xpose.msra.mxu0 0.0
        %1494 = vmatprep.subr.mxu0 0.0
        %1495 = vmatpush1.xpose.msra.mxu0 %v1462
        %1496 = vmatprep.subr.mxu0 0.0
        %1497 = vmatpush2.xpose.msra.mxu0 0.0
        %1498 = vmatprep.subr.mxu0 0.0
        %1499 = vmatpush2.xpose.msra.mxu0 0.0
        %1500 = vmatprep.subr.mxu0 0.0
        %1501 = vmatpush2.xpose.msra.mxu0 0.0
        %1502 = vmatprep.subr.mxu0 0.0
        %1503 = vmatpush2.xpose.msra.mxu0 0.0
        %1504 = vmatprep.subr.mxu0 0.0
        %1505 = vmatpush2.xpose.msra.mxu0 0.0
        %1506 = vmatprep.subr.mxu0 0.0
        %1507 = vmatpush2.xpose.msra.mxu0 0.0
        %1508 = vmatprep.subr.mxu0 0.0
        %1509 = vmatpush2.xpose.msra.mxu0 0.0
        %1510 = vmatprep.subr.mxu0 0.0
        %1511 = vmatpush2.xpose.msra.mxu0 0.0
        %1512 = vmatprep.subr.mxu0 0.0
        %1513 = vmatpush2.xpose.msra.mxu0 0.0
        %1514 = vmatprep.subr.mxu0 0.0
        %1515 = vmatpush2.xpose.msra.mxu0 0.0
        %1516 = vmatprep.subr.mxu0 0.0
        %1517 = vmatpush2.xpose.msra.mxu0 0.0
        %1518 = vmatprep.subr.mxu0 0.0
        %1519 = vmatpush2.xpose.msra.mxu0 0.0
        %1520 = vmatprep.subr.mxu0 0.0
        %1521 = vmatpush2.xpose.msra.mxu0 0.0
        %1522 = vmatprep.subr.mxu0 0.0
        %1523 = vmatpush2.xpose.msra.mxu0 0.0
        %1524 = vmatprep.subr.mxu0 0.0
        %1525 = vmatpush2.xpose.msra.mxu0 0.0
        %1526 = vmatprep.subr.mxu0 0.0
        %1527 = vmatpush2.xpose.msra.mxu0 0.0
        %1528 = vmatprep.mubr.f32.mxu0 0.0
        %1529 = vmatmul.mubr.f32.gmra.mxu0 %v1459
        %v1530 = vpop.f32.mrf.mxu0
        %v1531 = vadd.f32 0.0, %v1530
        %v1532 = vpop.f32.mrf.mxu0
        %1533 = vdwg.mxu0
        %v1535 = vsel %vm1457, %v1450, 0
        %v1538 = vsel %vm1457, %v1148, 0
        %1540 = vmatprep.subr.mxu0 0.0
        %1541 = vmatpush1.xpose.msra.mxu0 0.0
        %1542 = vmatprep.subr.mxu0 0.0
        %1543 = vmatpush1.xpose.msra.mxu0 0.0
        %1544 = vmatprep.subr.mxu0 0.0
        %1545 = vmatpush1.xpose.msra.mxu0 0.0
        %1546 = vmatprep.subr.mxu0 0.0
        %1547 = vmatpush1.xpose.msra.mxu0 0.0
        %1548 = vmatprep.subr.mxu0 0.0
        %1549 = vmatpush1.xpose.msra.mxu0 0.0
        %1550 = vmatprep.subr.mxu0 0.0
        %1551 = vmatpush1.xpose.msra.mxu0 0.0
        %1552 = vmatprep.subr.mxu0 0.0
        %1553 = vmatpush1.xpose.msra.mxu0 0.0
        %1554 = vmatprep.subr.mxu0 0.0
        %1555 = vmatpush1.xpose.msra.mxu0 0.0
        %1556 = vmatprep.subr.mxu0 0.0
        %1557 = vmatpush1.xpose.msra.mxu0 0.0
        %1558 = vmatprep.subr.mxu0 0.0
        %1559 = vmatpush1.xpose.msra.mxu0 0.0
        %1560 = vmatprep.subr.mxu0 0.0
        %1561 = vmatpush1.xpose.msra.mxu0 0.0
        %1562 = vmatprep.subr.mxu0 0.0
        %1563 = vmatpush1.xpose.msra.mxu0 0.0
        %1564 = vmatprep.subr.mxu0 0.0
        %1565 = vmatpush1.xpose.msra.mxu0 0.0
        %1566 = vmatprep.subr.mxu0 0.0
        %1567 = vmatpush1.xpose.msra.mxu0 0.0
        %1568 = vmatprep.subr.mxu0 0.0
        %1569 = vmatpush1.xpose.msra.mxu0 0.0
        %1570 = vmatprep.subr.mxu0 0.0
        %1571 = vmatpush1.xpose.msra.mxu0 %v1538
        %1572 = vmatprep.subr.mxu0 0.0
        %1573 = vmatpush2.xpose.msra.mxu0 0.0
        %1574 = vmatprep.subr.mxu0 0.0
        %1575 = vmatpush2.xpose.msra.mxu0 0.0
        %1576 = vmatprep.subr.mxu0 0.0
        %1577 = vmatpush2.xpose.msra.mxu0 0.0
        %1578 = vmatprep.subr.mxu0 0.0
        %1579 = vmatpush2.xpose.msra.mxu0 0.0
        %1580 = vmatprep.subr.mxu0 0.0
        %1581 = vmatpush2.xpose.msra.mxu0 0.0
        %1582 = vmatprep.subr.mxu0 0.0
        %1583 = vmatpush2.xpose.msra.mxu0 0.0
        %1584 = vmatprep.subr.mxu0 0.0
        %1585 = vmatpush2.xpose.msra.mxu0 0.0
        %1586 = vmatprep.subr.mxu0 0.0
        %1587 = vmatpush2.xpose.msra.mxu0 0.0
        %1588 = vmatprep.subr.mxu0 0.0
        %1589 = vmatpush2.xpose.msra.mxu0 0.0
        %1590 = vmatprep.subr.mxu0 0.0
        %1591 = vmatpush2.xpose.msra.mxu0 0.0
        %1592 = vmatprep.subr.mxu0 0.0
        %1593 = vmatpush2.xpose.msra.mxu0 0.0
        %1594 = vmatprep.subr.mxu0 0.0
        %1595 = vmatpush2.xpose.msra.mxu0 0.0
        %1596 = vmatprep.subr.mxu0 0.0
        %1597 = vmatpush2.xpose.msra.mxu0 0.0
        %1598 = vmatprep.subr.mxu0 0.0
        %1599 = vmatpush2.xpose.msra.mxu0 0.0
        %1600 = vmatprep.subr.mxu0 0.0
        %1601 = vmatpush2.xpose.msra.mxu0 0.0
        %1602 = vmatprep.subr.mxu0 0.0
        %1603 = vmatpush2.xpose.msra.mxu0 0.0
        %1604 = vmatprep.mubr.f32.mxu0 0.0
        %1605 = vmatmul.mubr.f32.gmra.mxu0 %v1535
        %v1606 = vpop.f32.mrf.mxu0
        %v1607 = vadd.f32 0.0, %v1606
        %v1608 = vpop.f32.mrf.mxu0
        %1609 = vdwg.mxu0
        %v1611 = vsel %vm1457, %v1451, 0
        %v1614 = vsel %vm1457, %v1149, 0
        %1616 = vmatprep.subr.mxu0 0.0
        %1617 = vmatpush1.xpose.msra.mxu0 0.0
        %1618 = vmatprep.subr.mxu0 0.0
        %1619 = vmatpush1.xpose.msra.mxu0 0.0
        %1620 = vmatprep.subr.mxu0 0.0
        %1621 = vmatpush1.xpose.msra.mxu0 0.0
        %1622 = vmatprep.subr.mxu0 0.0
        %1623 = vmatpush1.xpose.msra.mxu0 0.0
        %1624 = vmatprep.subr.mxu0 0.0
        %1625 = vmatpush1.xpose.msra.mxu0 0.0
        %1626 = vmatprep.subr.mxu0 0.0
        %1627 = vmatpush1.xpose.msra.mxu0 0.0
        %1628 = vmatprep.subr.mxu0 0.0
        %1629 = vmatpush1.xpose.msra.mxu0 0.0
        %1630 = vmatprep.subr.mxu0 0.0
        %1631 = vmatpush1.xpose.msra.mxu0 0.0
        %1632 = vmatprep.subr.mxu0 0.0
        %1633 = vmatpush1.xpose.msra.mxu0 0.0
        %1634 = vmatprep.subr.mxu0 0.0
        %1635 = vmatpush1.xpose.msra.mxu0 0.0
        %1636 = vmatprep.subr.mxu0 0.0
        %1637 = vmatpush1.xpose.msra.mxu0 0.0
        %1638 = vmatprep.subr.mxu0 0.0
        %1639 = vmatpush1.xpose.msra.mxu0 0.0
        %1640 = vmatprep.subr.mxu0 0.0
        %1641 = vmatpush1.xpose.msra.mxu0 0.0
        %1642 = vmatprep.subr.mxu0 0.0
        %1643 = vmatpush1.xpose.msra.mxu0 0.0
        %1644 = vmatprep.subr.mxu0 0.0
        %1645 = vmatpush1.xpose.msra.mxu0 0.0
        %1646 = vmatprep.subr.mxu0 0.0
        %1647 = vmatpush1.xpose.msra.mxu0 %v1614
        %1648 = vmatprep.subr.mxu0 0.0
        %1649 = vmatpush2.xpose.msra.mxu0 0.0
        %1650 = vmatprep.subr.mxu0 0.0
        %1651 = vmatpush2.xpose.msra.mxu0 0.0
        %1652 = vmatprep.subr.mxu0 0.0
        %1653 = vmatpush2.xpose.msra.mxu0 0.0
        %1654 = vmatprep.subr.mxu0 0.0
        %1655 = vmatpush2.xpose.msra.mxu0 0.0
        %1656 = vmatprep.subr.mxu0 0.0
        %1657 = vmatpush2.xpose.msra.mxu0 0.0
        %1658 = vmatprep.subr.mxu0 0.0
        %1659 = vmatpush2.xpose.msra.mxu0 0.0
        %1660 = vmatprep.subr.mxu0 0.0
        %1661 = vmatpush2.xpose.msra.mxu0 0.0
        %1662 = vmatprep.subr.mxu0 0.0
        %1663 = vmatpush2.xpose.msra.mxu0 0.0
        %1664 = vmatprep.subr.mxu0 0.0
        %1665 = vmatpush2.xpose.msra.mxu0 0.0
        %1666 = vmatprep.subr.mxu0 0.0
        %1667 = vmatpush2.xpose.msra.mxu0 0.0
        %1668 = vmatprep.subr.mxu0 0.0
        %1669 = vmatpush2.xpose.msra.mxu0 0.0
        %1670 = vmatprep.subr.mxu0 0.0
        %1671 = vmatpush2.xpose.msra.mxu0 0.0
        %1672 = vmatprep.subr.mxu0 0.0
        %1673 = vmatpush2.xpose.msra.mxu0 0.0
        %1674 = vmatprep.subr.mxu0 0.0
        %1675 = vmatpush2.xpose.msra.mxu0 0.0
        %1676 = vmatprep.subr.mxu0 0.0
        %1677 = vmatpush2.xpose.msra.mxu0 0.0
        %1678 = vmatprep.subr.mxu0 0.0
        %1679 = vmatpush2.xpose.msra.mxu0 0.0
        %1680 = vmatprep.mubr.f32.mxu0 0.0
        %1681 = vmatmul.mubr.f32.gmra.mxu0 %v1611
        %v1682 = vpop.f32.mrf.mxu0
        %v1683 = vadd.f32 0.0, %v1682
        %v1684 = vpop.f32.mrf.mxu0
        %1685 = vdwg.mxu0
        %v1687 = vsel %vm1457, %v1452, 0
        %v1690 = vsel %vm1457, %v1150, 0
        %1692 = vmatprep.subr.mxu0 0.0
        %1693 = vmatpush1.xpose.msra.mxu0 0.0
        %1694 = vmatprep.subr.mxu0 0.0
        %1695 = vmatpush1.xpose.msra.mxu0 0.0
        %1696 = vmatprep.subr.mxu0 0.0
        %1697 = vmatpush1.xpose.msra.mxu0 0.0
        %1698 = vmatprep.subr.mxu0 0.0
        %1699 = vmatpush1.xpose.msra.mxu0 0.0
        %1700 = vmatprep.subr.mxu0 0.0
        %1701 = vmatpush1.xpose.msra.mxu0 0.0
        %1702 = vmatprep.subr.mxu0 0.0
        %1703 = vmatpush1.xpose.msra.mxu0 0.0
        %1704 = vmatprep.subr.mxu0 0.0
        %1705 = vmatpush1.xpose.msra.mxu0 0.0
        %1706 = vmatprep.subr.mxu0 0.0
        %1707 = vmatpush1.xpose.msra.mxu0 0.0
        %1708 = vmatprep.subr.mxu0 0.0
        %1709 = vmatpush1.xpose.msra.mxu0 0.0
        %1710 = vmatprep.subr.mxu0 0.0
        %1711 = vmatpush1.xpose.msra.mxu0 0.0
        %1712 = vmatprep.subr.mxu0 0.0
        %1713 = vmatpush1.xpose.msra.mxu0 0.0
        %1714 = vmatprep.subr.mxu0 0.0
        %1715 = vmatpush1.xpose.msra.mxu0 0.0
        %1716 = vmatprep.subr.mxu0 0.0
        %1717 = vmatpush1.xpose.msra.mxu0 0.0
        %1718 = vmatprep.subr.mxu0 0.0
        %1719 = vmatpush1.xpose.msra.mxu0 0.0
        %1720 = vmatprep.subr.mxu0 0.0
        %1721 = vmatpush1.xpose.msra.mxu0 0.0
        %1722 = vmatprep.subr.mxu0 0.0
        %1723 = vmatpush1.xpose.msra.mxu0 %v1690
        %1724 = vmatprep.subr.mxu0 0.0
        %1725 = vmatpush2.xpose.msra.mxu0 0.0
        %1726 = vmatprep.subr.mxu0 0.0
        %1727 = vmatpush2.xpose.msra.mxu0 0.0
        %1728 = vmatprep.subr.mxu0 0.0
        %1729 = vmatpush2.xpose.msra.mxu0 0.0
        %1730 = vmatprep.subr.mxu0 0.0
        %1731 = vmatpush2.xpose.msra.mxu0 0.0
        %1732 = vmatprep.subr.mxu0 0.0
        %1733 = vmatpush2.xpose.msra.mxu0 0.0
        %1734 = vmatprep.subr.mxu0 0.0
        %1735 = vmatpush2.xpose.msra.mxu0 0.0
        %1736 = vmatprep.subr.mxu0 0.0
        %1737 = vmatpush2.xpose.msra.mxu0 0.0
        %1738 = vmatprep.subr.mxu0 0.0
        %1739 = vmatpush2.xpose.msra.mxu0 0.0
        %1740 = vmatprep.subr.mxu0 0.0
        %1741 = vmatpush2.xpose.msra.mxu0 0.0
        %1742 = vmatprep.subr.mxu0 0.0
        %1743 = vmatpush2.xpose.msra.mxu0 0.0
        %1744 = vmatprep.subr.mxu0 0.0
        %1745 = vmatpush2.xpose.msra.mxu0 0.0
        %1746 = vmatprep.subr.mxu0 0.0
        %1747 = vmatpush2.xpose.msra.mxu0 0.0
        %1748 = vmatprep.subr.mxu0 0.0
        %1749 = vmatpush2.xpose.msra.mxu0 0.0
        %1750 = vmatprep.subr.mxu0 0.0
        %1751 = vmatpush2.xpose.msra.mxu0 0.0
        %1752 = vmatprep.subr.mxu0 0.0
        %1753 = vmatpush2.xpose.msra.mxu0 0.0
        %1754 = vmatprep.subr.mxu0 0.0
        %1755 = vmatpush2.xpose.msra.mxu0 0.0
        %1756 = vmatprep.mubr.f32.mxu0 0.0
        %1757 = vmatmul.mubr.f32.gmra.mxu0 %v1687
        %v1758 = vpop.f32.mrf.mxu0
        %v1759 = vadd.f32 0.0, %v1758
        %v1760 = vpop.f32.mrf.mxu0
        %1761 = vdwg.mxu0
        %v1763 = vsel %vm1457, %v1453, 0
        %v1766 = vsel %vm1457, %v1151, 0
        %1768 = vmatprep.subr.mxu0 0.0
        %1769 = vmatpush1.xpose.msra.mxu0 0.0
        %1770 = vmatprep.subr.mxu0 0.0
        %1771 = vmatpush1.xpose.msra.mxu0 0.0
        %1772 = vmatprep.subr.mxu0 0.0
        %1773 = vmatpush1.xpose.msra.mxu0 0.0
        %1774 = vmatprep.subr.mxu0 0.0
        %1775 = vmatpush1.xpose.msra.mxu0 0.0
        %1776 = vmatprep.subr.mxu0 0.0
        %1777 = vmatpush1.xpose.msra.mxu0 0.0
        %1778 = vmatprep.subr.mxu0 0.0
        %1779 = vmatpush1.xpose.msra.mxu0 0.0
        %1780 = vmatprep.subr.mxu0 0.0
        %1781 = vmatpush1.xpose.msra.mxu0 0.0
        %1782 = vmatprep.subr.mxu0 0.0
        %1783 = vmatpush1.xpose.msra.mxu0 0.0
        %1784 = vmatprep.subr.mxu0 0.0
        %1785 = vmatpush1.xpose.msra.mxu0 0.0
        %1786 = vmatprep.subr.mxu0 0.0
        %1787 = vmatpush1.xpose.msra.mxu0 0.0
        %1788 = vmatprep.subr.mxu0 0.0
        %1789 = vmatpush1.xpose.msra.mxu0 0.0
        %1790 = vmatprep.subr.mxu0 0.0
        %1791 = vmatpush1.xpose.msra.mxu0 0.0
        %1792 = vmatprep.subr.mxu0 0.0
        %1793 = vmatpush1.xpose.msra.mxu0 0.0
        %1794 = vmatprep.subr.mxu0 0.0
        %1795 = vmatpush1.xpose.msra.mxu0 0.0
        %1796 = vmatprep.subr.mxu0 0.0
        %1797 = vmatpush1.xpose.msra.mxu0 0.0
        %1798 = vmatprep.subr.mxu0 0.0
        %1799 = vmatpush1.xpose.msra.mxu0 %v1766
        %1800 = vmatprep.subr.mxu0 0.0
        %1801 = vmatpush2.xpose.msra.mxu0 0.0
        %1802 = vmatprep.subr.mxu0 0.0
        %1803 = vmatpush2.xpose.msra.mxu0 0.0
        %1804 = vmatprep.subr.mxu0 0.0
        %1805 = vmatpush2.xpose.msra.mxu0 0.0
        %1806 = vmatprep.subr.mxu0 0.0
        %1807 = vmatpush2.xpose.msra.mxu0 0.0
        %1808 = vmatprep.subr.mxu0 0.0
        %1809 = vmatpush2.xpose.msra.mxu0 0.0
        %1810 = vmatprep.subr.mxu0 0.0
        %1811 = vmatpush2.xpose.msra.mxu0 0.0
        %1812 = vmatprep.subr.mxu0 0.0
        %1813 = vmatpush2.xpose.msra.mxu0 0.0
        %1814 = vmatprep.subr.mxu0 0.0
        %1815 = vmatpush2.xpose.msra.mxu0 0.0
        %1816 = vmatprep.subr.mxu0 0.0
        %1817 = vmatpush2.xpose.msra.mxu0 0.0
        %1818 = vmatprep.subr.mxu0 0.0
        %1819 = vmatpush2.xpose.msra.mxu0 0.0
        %1820 = vmatprep.subr.mxu0 0.0
        %1821 = vmatpush2.xpose.msra.mxu0 0.0
        %1822 = vmatprep.subr.mxu0 0.0
        %1823 = vmatpush2.xpose.msra.mxu0 0.0
        %1824 = vmatprep.subr.mxu0 0.0
        %1825 = vmatpush2.xpose.msra.mxu0 0.0
        %1826 = vmatprep.subr.mxu0 0.0
        %1827 = vmatpush2.xpose.msra.mxu0 0.0
        %1828 = vmatprep.subr.mxu0 0.0
        %1829 = vmatpush2.xpose.msra.mxu0 0.0
        %1830 = vmatprep.subr.mxu0 0.0
        %1831 = vmatpush2.xpose.msra.mxu0 0.0
        %1832 = vmatprep.mubr.f32.mxu0 0.0
        %1833 = vmatmul.mubr.f32.gmra.mxu0 %v1763
        %v1834 = vpop.f32.mrf.mxu0
        %v1835 = vadd.f32 0.0, %v1834
        %v1836 = vpop.f32.mrf.mxu0
        %1837 = vdwg.mxu0
        %v1839 = vsel %vm1457, %v1454, 0
        %v1842 = vsel %vm1457, %v1152, 0
        %1844 = vmatprep.subr.mxu0 0.0
        %1845 = vmatpush1.xpose.msra.mxu0 0.0
        %1846 = vmatprep.subr.mxu0 0.0
        %1847 = vmatpush1.xpose.msra.mxu0 0.0
        %1848 = vmatprep.subr.mxu0 0.0
        %1849 = vmatpush1.xpose.msra.mxu0 0.0
        %1850 = vmatprep.subr.mxu0 0.0
        %1851 = vmatpush1.xpose.msra.mxu0 0.0
        %1852 = vmatprep.subr.mxu0 0.0
        %1853 = vmatpush1.xpose.msra.mxu0 0.0
        %1854 = vmatprep.subr.mxu0 0.0
        %1855 = vmatpush1.xpose.msra.mxu0 0.0
        %1856 = vmatprep.subr.mxu0 0.0
        %1857 = vmatpush1.xpose.msra.mxu0 0.0
        %1858 = vmatprep.subr.mxu0 0.0
        %1859 = vmatpush1.xpose.msra.mxu0 0.0
        %1860 = vmatprep.subr.mxu0 0.0
        %1861 = vmatpush1.xpose.msra.mxu0 0.0
        %1862 = vmatprep.subr.mxu0 0.0
        %1863 = vmatpush1.xpose.msra.mxu0 0.0
        %1864 = vmatprep.subr.mxu0 0.0
        %1865 = vmatpush1.xpose.msra.mxu0 0.0
        %1866 = vmatprep.subr.mxu0 0.0
        %1867 = vmatpush1.xpose.msra.mxu0 0.0
        %1868 = vmatprep.subr.mxu0 0.0
        %1869 = vmatpush1.xpose.msra.mxu0 0.0
        %1870 = vmatprep.subr.mxu0 0.0
        %1871 = vmatpush1.xpose.msra.mxu0 0.0
        %1872 = vmatprep.subr.mxu0 0.0
        %1873 = vmatpush1.xpose.msra.mxu0 0.0
        %1874 = vmatprep.subr.mxu0 0.0
        %1875 = vmatpush1.xpose.msra.mxu0 %v1842
        %1876 = vmatprep.subr.mxu0 0.0
        %1877 = vmatpush2.xpose.msra.mxu0 0.0
        %1878 = vmatprep.subr.mxu0 0.0
        %1879 = vmatpush2.xpose.msra.mxu0 0.0
        %1880 = vmatprep.subr.mxu0 0.0
        %1881 = vmatpush2.xpose.msra.mxu0 0.0
        %1882 = vmatprep.subr.mxu0 0.0
        %1883 = vmatpush2.xpose.msra.mxu0 0.0
        %1884 = vmatprep.subr.mxu0 0.0
        %1885 = vmatpush2.xpose.msra.mxu0 0.0
        %1886 = vmatprep.subr.mxu0 0.0
        %1887 = vmatpush2.xpose.msra.mxu0 0.0
        %1888 = vmatprep.subr.mxu0 0.0
        %1889 = vmatpush2.xpose.msra.mxu0 0.0
        %1890 = vmatprep.subr.mxu0 0.0
        %1891 = vmatpush2.xpose.msra.mxu0 0.0
        %1892 = vmatprep.subr.mxu0 0.0
        %1893 = vmatpush2.xpose.msra.mxu0 0.0
        %1894 = vmatprep.subr.mxu0 0.0
        %1895 = vmatpush2.xpose.msra.mxu0 0.0
        %1896 = vmatprep.subr.mxu0 0.0
        %1897 = vmatpush2.xpose.msra.mxu0 0.0
        %1898 = vmatprep.subr.mxu0 0.0
        %1899 = vmatpush2.xpose.msra.mxu0 0.0
        %1900 = vmatprep.subr.mxu0 0.0
        %1901 = vmatpush2.xpose.msra.mxu0 0.0
        %1902 = vmatprep.subr.mxu0 0.0
        %1903 = vmatpush2.xpose.msra.mxu0 0.0
        %1904 = vmatprep.subr.mxu0 0.0
        %1905 = vmatpush2.xpose.msra.mxu0 0.0
        %1906 = vmatprep.subr.mxu0 0.0
        %1907 = vmatpush2.xpose.msra.mxu0 0.0
        %1908 = vmatprep.mubr.f32.mxu0 0.0
        %1909 = vmatmul.mubr.f32.gmra.mxu0 %v1839
        %v1910 = vpop.f32.mrf.mxu0
        %v1911 = vadd.f32 0.0, %v1910
        %v1912 = vpop.f32.mrf.mxu0
        %1913 = vdwg.mxu0
        %v1915 = vsel %vm1457, %v1455, 0
        %v1918 = vsel %vm1457, %v1153, 0
        %1920 = vmatprep.subr.mxu0 0.0
        %1921 = vmatpush1.xpose.msra.mxu0 0.0
        %1922 = vmatprep.subr.mxu0 0.0
        %1923 = vmatpush1.xpose.msra.mxu0 0.0
        %1924 = vmatprep.subr.mxu0 0.0
        %1925 = vmatpush1.xpose.msra.mxu0 0.0
        %1926 = vmatprep.subr.mxu0 0.0
        %1927 = vmatpush1.xpose.msra.mxu0 0.0
        %1928 = vmatprep.subr.mxu0 0.0
        %1929 = vmatpush1.xpose.msra.mxu0 0.0
        %1930 = vmatprep.subr.mxu0 0.0
        %1931 = vmatpush1.xpose.msra.mxu0 0.0
        %1932 = vmatprep.subr.mxu0 0.0
        %1933 = vmatpush1.xpose.msra.mxu0 0.0
        %1934 = vmatprep.subr.mxu0 0.0
        %1935 = vmatpush1.xpose.msra.mxu0 0.0
        %1936 = vmatprep.subr.mxu0 0.0
        %1937 = vmatpush1.xpose.msra.mxu0 0.0
        %1938 = vmatprep.subr.mxu0 0.0
        %1939 = vmatpush1.xpose.msra.mxu0 0.0
        %1940 = vmatprep.subr.mxu0 0.0
        %1941 = vmatpush1.xpose.msra.mxu0 0.0
        %1942 = vmatprep.subr.mxu0 0.0
        %1943 = vmatpush1.xpose.msra.mxu0 0.0
        %1944 = vmatprep.subr.mxu0 0.0
        %1945 = vmatpush1.xpose.msra.mxu0 0.0
        %1946 = vmatprep.subr.mxu0 0.0
        %1947 = vmatpush1.xpose.msra.mxu0 0.0
        %1948 = vmatprep.subr.mxu0 0.0
        %1949 = vmatpush1.xpose.msra.mxu0 0.0
        %1950 = vmatprep.subr.mxu0 0.0
        %1951 = vmatpush1.xpose.msra.mxu0 %v1918
        %1952 = vmatprep.subr.mxu0 0.0
        %1953 = vmatpush2.xpose.msra.mxu0 0.0
        %1954 = vmatprep.subr.mxu0 0.0
        %1955 = vmatpush2.xpose.msra.mxu0 0.0
        %1956 = vmatprep.subr.mxu0 0.0
        %1957 = vmatpush2.xpose.msra.mxu0 0.0
        %1958 = vmatprep.subr.mxu0 0.0
        %1959 = vmatpush2.xpose.msra.mxu0 0.0
        %1960 = vmatprep.subr.mxu0 0.0
        %1961 = vmatpush2.xpose.msra.mxu0 0.0
        %1962 = vmatprep.subr.mxu0 0.0
        %1963 = vmatpush2.xpose.msra.mxu0 0.0
        %1964 = vmatprep.subr.mxu0 0.0
        %1965 = vmatpush2.xpose.msra.mxu0 0.0
        %1966 = vmatprep.subr.mxu0 0.0
        %1967 = vmatpush2.xpose.msra.mxu0 0.0
        %1968 = vmatprep.subr.mxu0 0.0
        %1969 = vmatpush2.xpose.msra.mxu0 0.0
        %1970 = vmatprep.subr.mxu0 0.0
        %1971 = vmatpush2.xpose.msra.mxu0 0.0
        %1972 = vmatprep.subr.mxu0 0.0
        %1973 = vmatpush2.xpose.msra.mxu0 0.0
        %1974 = vmatprep.subr.mxu0 0.0
        %1975 = vmatpush2.xpose.msra.mxu0 0.0
        %1976 = vmatprep.subr.mxu0 0.0
        %1977 = vmatpush2.xpose.msra.mxu0 0.0
        %1978 = vmatprep.subr.mxu0 0.0
        %1979 = vmatpush2.xpose.msra.mxu0 0.0
        %1980 = vmatprep.subr.mxu0 0.0
        %1981 = vmatpush2.xpose.msra.mxu0 0.0
        %1982 = vmatprep.subr.mxu0 0.0
        %1983 = vmatpush2.xpose.msra.mxu0 0.0
        %1984 = vmatprep.mubr.f32.mxu0 0.0
        %1985 = vmatmul.mubr.f32.gmra.mxu0 %v1915
        %v1986 = vpop.f32.mrf.mxu0
        %v1987 = vadd.f32 0.0, %v1986
        %v1988 = vpop.f32.mrf.mxu0
        %1989 = vdwg.mxu0
        %v1991 = vsel %vm1457, %v1456, 0
        %v1994 = vsel %vm1457, %v1154, 0
        %1996 = vmatprep.subr.mxu0 0.0
        %1997 = vmatpush1.xpose.msra.mxu0 0.0
        %1998 = vmatprep.subr.mxu0 0.0
        %1999 = vmatpush1.xpose.msra.mxu0 0.0
        %2000 = vmatprep.subr.mxu0 0.0
        %2001 = vmatpush1.xpose.msra.mxu0 0.0
        %2002 = vmatprep.subr.mxu0 0.0
        %2003 = vmatpush1.xpose.msra.mxu0 0.0
        %2004 = vmatprep.subr.mxu0 0.0
        %2005 = vmatpush1.xpose.msra.mxu0 0.0
        %2006 = vmatprep.subr.mxu0 0.0
        %2007 = vmatpush1.xpose.msra.mxu0 0.0
        %2008 = vmatprep.subr.mxu0 0.0
        %2009 = vmatpush1.xpose.msra.mxu0 0.0
        %2010 = vmatprep.subr.mxu0 0.0
        %2011 = vmatpush1.xpose.msra.mxu0 0.0
        %2012 = vmatprep.subr.mxu0 0.0
        %2013 = vmatpush1.xpose.msra.mxu0 0.0
        %2014 = vmatprep.subr.mxu0 0.0
        %2015 = vmatpush1.xpose.msra.mxu0 0.0
        %2016 = vmatprep.subr.mxu0 0.0
        %2017 = vmatpush1.xpose.msra.mxu0 0.0
        %2018 = vmatprep.subr.mxu0 0.0
        %2019 = vmatpush1.xpose.msra.mxu0 0.0
        %2020 = vmatprep.subr.mxu0 0.0
        %2021 = vmatpush1.xpose.msra.mxu0 0.0
        %2022 = vmatprep.subr.mxu0 0.0
        %2023 = vmatpush1.xpose.msra.mxu0 0.0
        %2024 = vmatprep.subr.mxu0 0.0
        %2025 = vmatpush1.xpose.msra.mxu0 0.0
        %2026 = vmatprep.subr.mxu0 0.0
        %2027 = vmatpush1.xpose.msra.mxu0 %v1994
        %2028 = vmatprep.subr.mxu0 0.0
        %2029 = vmatpush2.xpose.msra.mxu0 0.0
        %2030 = vmatprep.subr.mxu0 0.0
        %2031 = vmatpush2.xpose.msra.mxu0 0.0
        %2032 = vmatprep.subr.mxu0 0.0
        %2033 = vmatpush2.xpose.msra.mxu0 0.0
        %2034 = vmatprep.subr.mxu0 0.0
        %2035 = vmatpush2.xpose.msra.mxu0 0.0
        %2036 = vmatprep.subr.mxu0 0.0
        %2037 = vmatpush2.xpose.msra.mxu0 0.0
        %2038 = vmatprep.subr.mxu0 0.0
        %2039 = vmatpush2.xpose.msra.mxu0 0.0
        %2040 = vmatprep.subr.mxu0 0.0
        %2041 = vmatpush2.xpose.msra.mxu0 0.0
        %2042 = vmatprep.subr.mxu0 0.0
        %2043 = vmatpush2.xpose.msra.mxu0 0.0
        %2044 = vmatprep.subr.mxu0 0.0
        %2045 = vmatpush2.xpose.msra.mxu0 0.0
        %2046 = vmatprep.subr.mxu0 0.0
        %2047 = vmatpush2.xpose.msra.mxu0 0.0
        %2048 = vmatprep.subr.mxu0 0.0
        %2049 = vmatpush2.xpose.msra.mxu0 0.0
        %2050 = vmatprep.subr.mxu0 0.0
        %2051 = vmatpush2.xpose.msra.mxu0 0.0
        %2052 = vmatprep.subr.mxu0 0.0
        %2053 = vmatpush2.xpose.msra.mxu0 0.0
        %2054 = vmatprep.subr.mxu0 0.0
        %2055 = vmatpush2.xpose.msra.mxu0 0.0
        %2056 = vmatprep.subr.mxu0 0.0
        %2057 = vmatpush2.xpose.msra.mxu0 0.0
        %2058 = vmatprep.subr.mxu0 0.0
        %2059 = vmatpush2.xpose.msra.mxu0 0.0
        %2060 = vmatprep.mubr.f32.mxu0 0.0
        %2061 = vmatmul.mubr.f32.gmra.mxu0 %v1991
        %v2062 = vpop.f32.mrf.mxu0
        %v2063 = vadd.f32 0.0, %v2062
        %v2064 = vpop.f32.mrf.mxu0
        %2065 = vdwg.mxu0
        %v2066 = vld [vmem:[#allocation3] sm:$0xff]
        %v2067 = vld [vmem:[#allocation3 + $0x8] sm:$0xff]
        %v2068 = vld [vmem:[#allocation3 + $0x10] sm:$0xff]
        %v2069 = vld [vmem:[#allocation3 + $0x18] sm:$0xff]
        %v2070 = vld [vmem:[#allocation3 + $0x20] sm:$0xff]
        %v2071 = vld [vmem:[#allocation3 + $0x28] sm:$0xff]
        %v2072 = vld [vmem:[#allocation3 + $0x30] sm:$0xff]
        %v2073 = vld [vmem:[#allocation3 + $0x38] sm:$0xff]
        %vm2074 = vcmask 64512
        %v2075 = vsel %vm2074, %v1531, -inf
        %2076 = vmax.xlane.f32.xlu0 %v2075
        %v2077 = vpop.xlane.xlu0 %2076
        %v2078 = vsel %vm2074, %v1607, -inf
        %2079 = vmax.xlane.f32.xlu0 %v2078
        %v2080 = vpop.xlane.xlu0 %2079
        %v2081 = vsel %vm2074, %v1683, -inf
        %2082 = vmax.xlane.f32.xlu0 %v2081
        %v2083 = vpop.xlane.xlu0 %2082
        %v2084 = vsel %vm2074, %v1759, -inf
        %2085 = vmax.xlane.f32.xlu0 %v2084
        %v2086 = vpop.xlane.xlu0 %2085
        %v2087 = vsel %vm2074, %v1835, -inf
        %2088 = vmax.xlane.f32.xlu0 %v2087
        %v2089 = vpop.xlane.xlu0 %2088
        %v2090 = vsel %vm2074, %v1911, -inf
        %2091 = vmax.xlane.f32.xlu0 %v2090
        %v2092 = vpop.xlane.xlu0 %2091
        %v2093 = vsel %vm2074, %v1987, -inf
        %2094 = vmax.xlane.f32.xlu0 %v2093
        %v2095 = vpop.xlane.xlu0 %2094
        %v2096 = vsel %vm2074, %v2063, -inf
        %2097 = vmax.xlane.f32.xlu0 %v2096
        %v2098 = vpop.xlane.xlu0 %2097
        %v2099 = vmax.f32 %v2066, %v2077
        %v2100 = vmax.f32 %v2067, %v2080
        %v2101 = vmax.f32 %v2068, %v2083
        %v2102 = vmax.f32 %v2069, %v2086
        %v2103 = vmax.f32 %v2070, %v2089
        %v2104 = vmax.f32 %v2071, %v2092
        %v2105 = vmax.f32 %v2072, %v2095
        %v2106 = vmax.f32 %v2073, %v2098
        %v2107 = vsub.f32 %v2066, %v2099
        %v2108 = vsub.f32 %v2067, %v2100
        %v2109 = vsub.f32 %v2068, %v2101
        %v2110 = vsub.f32 %v2069, %v2102
        %v2111 = vsub.f32 %v2070, %v2103
        %v2112 = vsub.f32 %v2071, %v2104
        %v2113 = vsub.f32 %v2072, %v2105
        %v2114 = vsub.f32 %v2073, %v2106
        %v2115 = vmul.f32 %v2107, 1.442695
        %v2116 = vpow.pop %v2115
        %v2117 = vmul.f32 %v2108, 1.442695
        %v2118 = vpow.pop %v2117
        %v2119 = vmul.f32 %v2109, 1.442695
        %v2120 = vpow.pop %v2119
        %v2121 = vmul.f32 %v2110, 1.442695
        %v2122 = vpow.pop %v2121
        %v2123 = vmul.f32 %v2111, 1.442695
        %v2124 = vpow.pop %v2123
        %v2125 = vmul.f32 %v2112, 1.442695
        %v2126 = vpow.pop %v2125
        %v2127 = vmul.f32 %v2113, 1.442695
        %v2128 = vpow.pop %v2127
        %v2129 = vmul.f32 %v2114, 1.442695
        %v2130 = vpow.pop %v2129
        %2132 = vset.pattern.permute.xlu0 0
        %2133 = vperm.xlu0 %2132, %v2099
        %v2134 = vpop.permute.xlu0 %2133
        %2137 = vset.pattern.permute.xlu0 0
        %2138 = vperm.xlu0 %2137, %v2100
        %v2139 = vpop.permute.xlu0 %2138
        %2142 = vset.pattern.permute.xlu0 0
        %2143 = vperm.xlu0 %2142, %v2101
        %v2144 = vpop.permute.xlu0 %2143
        %2147 = vset.pattern.permute.xlu0 0
        %2148 = vperm.xlu0 %2147, %v2102
        %v2149 = vpop.permute.xlu0 %2148
        %2152 = vset.pattern.permute.xlu0 0
        %2153 = vperm.xlu0 %2152, %v2103
        %v2154 = vpop.permute.xlu0 %2153
        %2157 = vset.pattern.permute.xlu0 0
        %2158 = vperm.xlu0 %2157, %v2104
        %v2159 = vpop.permute.xlu0 %2158
        %2162 = vset.pattern.permute.xlu0 0
        %2163 = vperm.xlu0 %2162, %v2105
        %v2164 = vpop.permute.xlu0 %2163
        %2167 = vset.pattern.permute.xlu0 0
        %2168 = vperm.xlu0 %2167, %v2106
        %v2169 = vpop.permute.xlu0 %2168
        %v2171 = vsub.f32 %v1531, %v2134
        %v2172 = vsub.f32 %v1607, %v2139
        %v2173 = vsub.f32 %v1683, %v2144
        %v2174 = vsub.f32 %v1759, %v2149
        %v2175 = vsub.f32 %v1835, %v2154
        %v2176 = vsub.f32 %v1911, %v2159
        %v2177 = vsub.f32 %v1987, %v2164
        %v2178 = vsub.f32 %v2063, %v2169
        %v2179 = vmul.f32 %v2171, 1.442695
        %v2180 = vpow.pop %v2179
        %v2181 = vmul.f32 %v2172, 1.442695
        %v2182 = vpow.pop %v2181
        %v2183 = vmul.f32 %v2173, 1.442695
        %v2184 = vpow.pop %v2183
        %v2185 = vmul.f32 %v2174, 1.442695
        %v2186 = vpow.pop %v2185
        %v2187 = vmul.f32 %v2175, 1.442695
        %v2188 = vpow.pop %v2187
        %v2189 = vmul.f32 %v2176, 1.442695
        %v2190 = vpow.pop %v2189
        %v2191 = vmul.f32 %v2177, 1.442695
        %v2192 = vpow.pop %v2191
        %v2193 = vmul.f32 %v2178, 1.442695
        %v2194 = vpow.pop %v2193
        %v2195 = vld [vmem:[#allocation4] sm:$0xff]
        %v2196 = vld [vmem:[#allocation4 + $0x8] sm:$0xff]
        %v2197 = vld [vmem:[#allocation4 + $0x10] sm:$0xff]
        %v2198 = vld [vmem:[#allocation4 + $0x18] sm:$0xff]
        %v2199 = vld [vmem:[#allocation4 + $0x20] sm:$0xff]
        %v2200 = vld [vmem:[#allocation4 + $0x28] sm:$0xff]
        %v2201 = vld [vmem:[#allocation4 + $0x30] sm:$0xff]
        %v2202 = vld [vmem:[#allocation4 + $0x38] sm:$0xff]
        %v2203 = vmul.f32 %v2116, %v2195
        %v2204 = vmul.f32 %v2118, %v2196
        %v2205 = vmul.f32 %v2120, %v2197
        %v2206 = vmul.f32 %v2122, %v2198
        %v2207 = vmul.f32 %v2124, %v2199
        %v2208 = vmul.f32 %v2126, %v2200
        %v2209 = vmul.f32 %v2128, %v2201
        %v2210 = vmul.f32 %v2130, %v2202
        %v2211 = vsel %vm2074, %v2180, 0.0
        %2212 = vadd.xlane.f32.xlu0 %v2211
        %v2213 = vpop.xlane.xlu0 %2212
        %v2214 = vsel %vm2074, %v2182, 0.0
        %2215 = vadd.xlane.f32.xlu0 %v2214
        %v2216 = vpop.xlane.xlu0 %2215
        %v2217 = vsel %vm2074, %v2184, 0.0
        %2218 = vadd.xlane.f32.xlu0 %v2217
        %v2219 = vpop.xlane.xlu0 %2218
        %v2220 = vsel %vm2074, %v2186, 0.0
        %2221 = vadd.xlane.f32.xlu0 %v2220
        %v2222 = vpop.xlane.xlu0 %2221
        %v2223 = vsel %vm2074, %v2188, 0.0
        %2224 = vadd.xlane.f32.xlu0 %v2223
        %v2225 = vpop.xlane.xlu0 %2224
        %v2226 = vsel %vm2074, %v2190, 0.0
        %2227 = vadd.xlane.f32.xlu0 %v2226
        %v2228 = vpop.xlane.xlu0 %2227
        %v2229 = vsel %vm2074, %v2192, 0.0
        %2230 = vadd.xlane.f32.xlu0 %v2229
        %v2231 = vpop.xlane.xlu0 %2230
        %v2232 = vsel %vm2074, %v2194, 0.0
        %2233 = vadd.xlane.f32.xlu0 %v2232
        %v2234 = vpop.xlane.xlu0 %2233
        %v2235 = vadd.f32 %v2203, %v2213
        %v2236 = vadd.f32 %v2204, %v2216
        %v2237 = vadd.f32 %v2205, %v2219
        %v2238 = vadd.f32 %v2206, %v2222
        %v2239 = vadd.f32 %v2207, %v2225
        %v2240 = vadd.f32 %v2208, %v2228
        %v2241 = vadd.f32 %v2209, %v2231
        %v2242 = vadd.f32 %v2210, %v2234
        %vm2243 = vcmask 7168
        %2244 = vst.msk [vmem:[#allocation4] sm:$0xff] %vm2243, %v2235
        %2245 = vst.msk [vmem:[#allocation4 + $0x8] sm:$0xff] %vm2243, %v2236
        %2246 = vst.msk [vmem:[#allocation4 + $0x10] sm:$0xff] %vm2243, %v2237
        %2247 = vst.msk [vmem:[#allocation4 + $0x18] sm:$0xff] %vm2243, %v2238
        %2248 = vst.msk [vmem:[#allocation4 + $0x20] sm:$0xff] %vm2243, %v2239
        %2249 = vst.msk [vmem:[#allocation4 + $0x28] sm:$0xff] %vm2243, %v2240
        %2250 = vst.msk [vmem:[#allocation4 + $0x30] sm:$0xff] %vm2243, %v2241
        %2251 = vst.msk [vmem:[#allocation4 + $0x38] sm:$0xff] %vm2243, %v2242
        %v2252 = vld [vmem:[#allocation5] sm:$0xff]
        %v2253 = vld [vmem:[#allocation5 + $0x8] sm:$0xff]
        %v2254 = vld [vmem:[#allocation5 + $0x10] sm:$0xff]
        %v2255 = vld [vmem:[#allocation5 + $0x18] sm:$0xff]
        %v2256 = vld [vmem:[#allocation5 + $0x20] sm:$0xff]
        %v2257 = vld [vmem:[#allocation5 + $0x28] sm:$0xff]
        %v2258 = vld [vmem:[#allocation5 + $0x30] sm:$0xff]
        %v2259 = vld [vmem:[#allocation5 + $0x38] sm:$0xff]
        %2261 = vset.pattern.permute.xlu0 0
        %2262 = vperm.xlu0 %2261, %v2116
        %v2263 = vpop.permute.xlu0 %2262
        %2266 = vset.pattern.permute.xlu0 0
        %2267 = vperm.xlu0 %2266, %v2118
        %v2268 = vpop.permute.xlu0 %2267
        %2271 = vset.pattern.permute.xlu0 0
        %2272 = vperm.xlu0 %2271, %v2120
        %v2273 = vpop.permute.xlu0 %2272
        %2276 = vset.pattern.permute.xlu0 0
        %2277 = vperm.xlu0 %2276, %v2122
        %v2278 = vpop.permute.xlu0 %2277
        %2281 = vset.pattern.permute.xlu0 0
        %2282 = vperm.xlu0 %2281, %v2124
        %v2283 = vpop.permute.xlu0 %2282
        %2286 = vset.pattern.permute.xlu0 0
        %2287 = vperm.xlu0 %2286, %v2126
        %v2288 = vpop.permute.xlu0 %2287
        %2291 = vset.pattern.permute.xlu0 0
        %2292 = vperm.xlu0 %2291, %v2128
        %v2293 = vpop.permute.xlu0 %2292
        %2296 = vset.pattern.permute.xlu0 0
        %2297 = vperm.xlu0 %2296, %v2130
        %v2298 = vpop.permute.xlu0 %2297
        %v2300 = vmul.f32 %v2263, %v2252
        %v2301 = vmul.f32 %v2268, %v2253
        %v2302 = vmul.f32 %v2273, %v2254
        %v2303 = vmul.f32 %v2278, %v2255
        %v2304 = vmul.f32 %v2283, %v2256
        %v2305 = vmul.f32 %v2288, %v2257
        %v2306 = vmul.f32 %v2293, %v2258
        %v2307 = vmul.f32 %v2298, %v2259
        %v2309 = vsel %vm2074, %v2180, 0
        %2311 = vmatprep.subr.mxu0 0.0
        %2312 = vmatpush1.msra.mxu0 0.0
        %2313 = vmatprep.subr.mxu0 0.0
        %2314 = vmatpush1.msra.mxu0 0.0
        %2315 = vmatprep.subr.mxu0 0.0
        %2316 = vmatpush1.msra.mxu0 0.0
        %2317 = vmatprep.subr.mxu0 0.0
        %2318 = vmatpush1.msra.mxu0 0.0
        %2319 = vmatprep.subr.mxu0 0.0
        %2320 = vmatpush1.msra.mxu0 0.0
        %2321 = vmatprep.subr.mxu0 0.0
        %2322 = vmatpush1.msra.mxu0 0.0
        %2323 = vmatprep.subr.mxu0 0.0
        %2324 = vmatpush1.msra.mxu0 0.0
        %2325 = vmatprep.subr.mxu0 0.0
        %2326 = vmatpush1.msra.mxu0 0.0
        %2327 = vmatprep.subr.mxu0 0.0
        %2328 = vmatpush1.msra.mxu0 0.0
        %2329 = vmatprep.subr.mxu0 0.0
        %2330 = vmatpush1.msra.mxu0 0.0
        %2331 = vmatprep.subr.mxu0 0.0
        %2332 = vmatpush1.msra.mxu0 0.0
        %2333 = vmatprep.subr.mxu0 0.0
        %2334 = vmatpush1.msra.mxu0 0.0
        %2335 = vmatprep.subr.mxu0 0.0
        %2336 = vmatpush1.msra.mxu0 0.0
        %2337 = vmatprep.subr.mxu0 0.0
        %2338 = vmatpush1.msra.mxu0 0.0
        %2339 = vmatprep.subr.mxu0 0.0
        %2340 = vmatpush1.msra.mxu0 0.0
        %2341 = vmatprep.subr.mxu0 0.0
        %2342 = vmatpush1.msra.mxu0 %v1441
        %2343 = vmatprep.subr.mxu0 0.0
        %2344 = vmatpush2.msra.mxu0 0.0
        %2345 = vmatprep.subr.mxu0 0.0
        %2346 = vmatpush2.msra.mxu0 0.0
        %2347 = vmatprep.subr.mxu0 0.0
        %2348 = vmatpush2.msra.mxu0 0.0
        %2349 = vmatprep.subr.mxu0 0.0
        %2350 = vmatpush2.msra.mxu0 0.0
        %2351 = vmatprep.subr.mxu0 0.0
        %2352 = vmatpush2.msra.mxu0 0.0
        %2353 = vmatprep.subr.mxu0 0.0
        %2354 = vmatpush2.msra.mxu0 0.0
        %2355 = vmatprep.subr.mxu0 0.0
        %2356 = vmatpush2.msra.mxu0 0.0
        %2357 = vmatprep.subr.mxu0 0.0
        %2358 = vmatpush2.msra.mxu0 0.0
        %2359 = vmatprep.subr.mxu0 0.0
        %2360 = vmatpush2.msra.mxu0 0.0
        %2361 = vmatprep.subr.mxu0 0.0
        %2362 = vmatpush2.msra.mxu0 0.0
        %2363 = vmatprep.subr.mxu0 0.0
        %2364 = vmatpush2.msra.mxu0 0.0
        %2365 = vmatprep.subr.mxu0 0.0
        %2366 = vmatpush2.msra.mxu0 0.0
        %2367 = vmatprep.subr.mxu0 0.0
        %2368 = vmatpush2.msra.mxu0 0.0
        %2369 = vmatprep.subr.mxu0 0.0
        %2370 = vmatpush2.msra.mxu0 0.0
        %2371 = vmatprep.subr.mxu0 0.0
        %2372 = vmatpush2.msra.mxu0 0.0
        %2373 = vmatprep.subr.mxu0 0.0
        %2374 = vmatpush2.msra.mxu0 0.0
        %2375 = vmatprep.mubr.f32.mxu0 0.0
        %2376 = vmatmul.mubr.f32.gmra.mxu0 %v2309
        %v2377 = vpop.f32.mrf.mxu0
        %v2378 = vadd.f32 0.0, %v2377
        %v2379 = vpop.f32.mrf.mxu0
        %2380 = vdwg.mxu0
        %v2382 = vsel %vm2074, %v2182, 0
        %2384 = vmatprep.subr.mxu0 0.0
        %2385 = vmatpush1.msra.mxu0 0.0
        %2386 = vmatprep.subr.mxu0 0.0
        %2387 = vmatpush1.msra.mxu0 0.0
        %2388 = vmatprep.subr.mxu0 0.0
        %2389 = vmatpush1.msra.mxu0 0.0
        %2390 = vmatprep.subr.mxu0 0.0
        %2391 = vmatpush1.msra.mxu0 0.0
        %2392 = vmatprep.subr.mxu0 0.0
        %2393 = vmatpush1.msra.mxu0 0.0
        %2394 = vmatprep.subr.mxu0 0.0
        %2395 = vmatpush1.msra.mxu0 0.0
        %2396 = vmatprep.subr.mxu0 0.0
        %2397 = vmatpush1.msra.mxu0 0.0
        %2398 = vmatprep.subr.mxu0 0.0
        %2399 = vmatpush1.msra.mxu0 0.0
        %2400 = vmatprep.subr.mxu0 0.0
        %2401 = vmatpush1.msra.mxu0 0.0
        %2402 = vmatprep.subr.mxu0 0.0
        %2403 = vmatpush1.msra.mxu0 0.0
        %2404 = vmatprep.subr.mxu0 0.0
        %2405 = vmatpush1.msra.mxu0 0.0
        %2406 = vmatprep.subr.mxu0 0.0
        %2407 = vmatpush1.msra.mxu0 0.0
        %2408 = vmatprep.subr.mxu0 0.0
        %2409 = vmatpush1.msra.mxu0 0.0
        %2410 = vmatprep.subr.mxu0 0.0
        %2411 = vmatpush1.msra.mxu0 0.0
        %2412 = vmatprep.subr.mxu0 0.0
        %2413 = vmatpush1.msra.mxu0 0.0
        %2414 = vmatprep.subr.mxu0 0.0
        %2415 = vmatpush1.msra.mxu0 %v1442
        %2416 = vmatprep.subr.mxu0 0.0
        %2417 = vmatpush2.msra.mxu0 0.0
        %2418 = vmatprep.subr.mxu0 0.0
        %2419 = vmatpush2.msra.mxu0 0.0
        %2420 = vmatprep.subr.mxu0 0.0
        %2421 = vmatpush2.msra.mxu0 0.0
        %2422 = vmatprep.subr.mxu0 0.0
        %2423 = vmatpush2.msra.mxu0 0.0
        %2424 = vmatprep.subr.mxu0 0.0
        %2425 = vmatpush2.msra.mxu0 0.0
        %2426 = vmatprep.subr.mxu0 0.0
        %2427 = vmatpush2.msra.mxu0 0.0
        %2428 = vmatprep.subr.mxu0 0.0
        %2429 = vmatpush2.msra.mxu0 0.0
        %2430 = vmatprep.subr.mxu0 0.0
        %2431 = vmatpush2.msra.mxu0 0.0
        %2432 = vmatprep.subr.mxu0 0.0
        %2433 = vmatpush2.msra.mxu0 0.0
        %2434 = vmatprep.subr.mxu0 0.0
        %2435 = vmatpush2.msra.mxu0 0.0
        %2436 = vmatprep.subr.mxu0 0.0
        %2437 = vmatpush2.msra.mxu0 0.0
        %2438 = vmatprep.subr.mxu0 0.0
        %2439 = vmatpush2.msra.mxu0 0.0
        %2440 = vmatprep.subr.mxu0 0.0
        %2441 = vmatpush2.msra.mxu0 0.0
        %2442 = vmatprep.subr.mxu0 0.0
        %2443 = vmatpush2.msra.mxu0 0.0
        %2444 = vmatprep.subr.mxu0 0.0
        %2445 = vmatpush2.msra.mxu0 0.0
        %2446 = vmatprep.subr.mxu0 0.0
        %2447 = vmatpush2.msra.mxu0 0.0
        %2448 = vmatprep.mubr.f32.mxu0 0.0
        %2449 = vmatmul.mubr.f32.gmra.mxu0 %v2382
        %v2450 = vpop.f32.mrf.mxu0
        %v2451 = vadd.f32 0.0, %v2450
        %v2452 = vpop.f32.mrf.mxu0
        %2453 = vdwg.mxu0
        %v2455 = vsel %vm2074, %v2184, 0
        %2457 = vmatprep.subr.mxu0 0.0
        %2458 = vmatpush1.msra.mxu0 0.0
        %2459 = vmatprep.subr.mxu0 0.0
        %2460 = vmatpush1.msra.mxu0 0.0
        %2461 = vmatprep.subr.mxu0 0.0
        %2462 = vmatpush1.msra.mxu0 0.0
        %2463 = vmatprep.subr.mxu0 0.0
        %2464 = vmatpush1.msra.mxu0 0.0
        %2465 = vmatprep.subr.mxu0 0.0
        %2466 = vmatpush1.msra.mxu0 0.0
        %2467 = vmatprep.subr.mxu0 0.0
        %2468 = vmatpush1.msra.mxu0 0.0
        %2469 = vmatprep.subr.mxu0 0.0
        %2470 = vmatpush1.msra.mxu0 0.0
        %2471 = vmatprep.subr.mxu0 0.0
        %2472 = vmatpush1.msra.mxu0 0.0
        %2473 = vmatprep.subr.mxu0 0.0
        %2474 = vmatpush1.msra.mxu0 0.0
        %2475 = vmatprep.subr.mxu0 0.0
        %2476 = vmatpush1.msra.mxu0 0.0
        %2477 = vmatprep.subr.mxu0 0.0
        %2478 = vmatpush1.msra.mxu0 0.0
        %2479 = vmatprep.subr.mxu0 0.0
        %2480 = vmatpush1.msra.mxu0 0.0
        %2481 = vmatprep.subr.mxu0 0.0
        %2482 = vmatpush1.msra.mxu0 0.0
        %2483 = vmatprep.subr.mxu0 0.0
        %2484 = vmatpush1.msra.mxu0 0.0
        %2485 = vmatprep.subr.mxu0 0.0
        %2486 = vmatpush1.msra.mxu0 0.0
        %2487 = vmatprep.subr.mxu0 0.0
        %2488 = vmatpush1.msra.mxu0 %v1443
        %2489 = vmatprep.subr.mxu0 0.0
        %2490 = vmatpush2.msra.mxu0 0.0
        %2491 = vmatprep.subr.mxu0 0.0
        %2492 = vmatpush2.msra.mxu0 0.0
        %2493 = vmatprep.subr.mxu0 0.0
        %2494 = vmatpush2.msra.mxu0 0.0
        %2495 = vmatprep.subr.mxu0 0.0
        %2496 = vmatpush2.msra.mxu0 0.0
        %2497 = vmatprep.subr.mxu0 0.0
        %2498 = vmatpush2.msra.mxu0 0.0
        %2499 = vmatprep.subr.mxu0 0.0
        %2500 = vmatpush2.msra.mxu0 0.0
        %2501 = vmatprep.subr.mxu0 0.0
        %2502 = vmatpush2.msra.mxu0 0.0
        %2503 = vmatprep.subr.mxu0 0.0
        %2504 = vmatpush2.msra.mxu0 0.0
        %2505 = vmatprep.subr.mxu0 0.0
        %2506 = vmatpush2.msra.mxu0 0.0
        %2507 = vmatprep.subr.mxu0 0.0
        %2508 = vmatpush2.msra.mxu0 0.0
        %2509 = vmatprep.subr.mxu0 0.0
        %2510 = vmatpush2.msra.mxu0 0.0
        %2511 = vmatprep.subr.mxu0 0.0
        %2512 = vmatpush2.msra.mxu0 0.0
        %2513 = vmatprep.subr.mxu0 0.0
        %2514 = vmatpush2.msra.mxu0 0.0
        %2515 = vmatprep.subr.mxu0 0.0
        %2516 = vmatpush2.msra.mxu0 0.0
        %2517 = vmatprep.subr.mxu0 0.0
        %2518 = vmatpush2.msra.mxu0 0.0
        %2519 = vmatprep.subr.mxu0 0.0
        %2520 = vmatpush2.msra.mxu0 0.0
        %2521 = vmatprep.mubr.f32.mxu0 0.0
        %2522 = vmatmul.mubr.f32.gmra.mxu0 %v2455
        %v2523 = vpop.f32.mrf.mxu0
        %v2524 = vadd.f32 0.0, %v2523
        %v2525 = vpop.f32.mrf.mxu0
        %2526 = vdwg.mxu0
        %v2528 = vsel %vm2074, %v2186, 0
        %2530 = vmatprep.subr.mxu0 0.0
        %2531 = vmatpush1.msra.mxu0 0.0
        %2532 = vmatprep.subr.mxu0 0.0
        %2533 = vmatpush1.msra.mxu0 0.0
        %2534 = vmatprep.subr.mxu0 0.0
        %2535 = vmatpush1.msra.mxu0 0.0
        %2536 = vmatprep.subr.mxu0 0.0
        %2537 = vmatpush1.msra.mxu0 0.0
        %2538 = vmatprep.subr.mxu0 0.0
        %2539 = vmatpush1.msra.mxu0 0.0
        %2540 = vmatprep.subr.mxu0 0.0
        %2541 = vmatpush1.msra.mxu0 0.0
        %2542 = vmatprep.subr.mxu0 0.0
        %2543 = vmatpush1.msra.mxu0 0.0
        %2544 = vmatprep.subr.mxu0 0.0
        %2545 = vmatpush1.msra.mxu0 0.0
        %2546 = vmatprep.subr.mxu0 0.0
        %2547 = vmatpush1.msra.mxu0 0.0
        %2548 = vmatprep.subr.mxu0 0.0
        %2549 = vmatpush1.msra.mxu0 0.0
        %2550 = vmatprep.subr.mxu0 0.0
        %2551 = vmatpush1.msra.mxu0 0.0
        %2552 = vmatprep.subr.mxu0 0.0
        %2553 = vmatpush1.msra.mxu0 0.0
        %2554 = vmatprep.subr.mxu0 0.0
        %2555 = vmatpush1.msra.mxu0 0.0
        %2556 = vmatprep.subr.mxu0 0.0
        %2557 = vmatpush1.msra.mxu0 0.0
        %2558 = vmatprep.subr.mxu0 0.0
        %2559 = vmatpush1.msra.mxu0 0.0
        %2560 = vmatprep.subr.mxu0 0.0
        %2561 = vmatpush1.msra.mxu0 %v1444
        %2562 = vmatprep.subr.mxu0 0.0
        %2563 = vmatpush2.msra.mxu0 0.0
        %2564 = vmatprep.subr.mxu0 0.0
        %2565 = vmatpush2.msra.mxu0 0.0
        %2566 = vmatprep.subr.mxu0 0.0
        %2567 = vmatpush2.msra.mxu0 0.0
        %2568 = vmatprep.subr.mxu0 0.0
        %2569 = vmatpush2.msra.mxu0 0.0
        %2570 = vmatprep.subr.mxu0 0.0
        %2571 = vmatpush2.msra.mxu0 0.0
        %2572 = vmatprep.subr.mxu0 0.0
        %2573 = vmatpush2.msra.mxu0 0.0
        %2574 = vmatprep.subr.mxu0 0.0
        %2575 = vmatpush2.msra.mxu0 0.0
        %2576 = vmatprep.subr.mxu0 0.0
        %2577 = vmatpush2.msra.mxu0 0.0
        %2578 = vmatprep.subr.mxu0 0.0
        %2579 = vmatpush2.msra.mxu0 0.0
        %2580 = vmatprep.subr.mxu0 0.0
        %2581 = vmatpush2.msra.mxu0 0.0
        %2582 = vmatprep.subr.mxu0 0.0
        %2583 = vmatpush2.msra.mxu0 0.0
        %2584 = vmatprep.subr.mxu0 0.0
        %2585 = vmatpush2.msra.mxu0 0.0
        %2586 = vmatprep.subr.mxu0 0.0
        %2587 = vmatpush2.msra.mxu0 0.0
        %2588 = vmatprep.subr.mxu0 0.0
        %2589 = vmatpush2.msra.mxu0 0.0
        %2590 = vmatprep.subr.mxu0 0.0
        %2591 = vmatpush2.msra.mxu0 0.0
        %2592 = vmatprep.subr.mxu0 0.0
        %2593 = vmatpush2.msra.mxu0 0.0
        %2594 = vmatprep.mubr.f32.mxu0 0.0
        %2595 = vmatmul.mubr.f32.gmra.mxu0 %v2528
        %v2596 = vpop.f32.mrf.mxu0
        %v2597 = vadd.f32 0.0, %v2596
        %v2598 = vpop.f32.mrf.mxu0
        %2599 = vdwg.mxu0
        %v2601 = vsel %vm2074, %v2188, 0
        %2603 = vmatprep.subr.mxu0 0.0
        %2604 = vmatpush1.msra.mxu0 0.0
        %2605 = vmatprep.subr.mxu0 0.0
        %2606 = vmatpush1.msra.mxu0 0.0
        %2607 = vmatprep.subr.mxu0 0.0
        %2608 = vmatpush1.msra.mxu0 0.0
        %2609 = vmatprep.subr.mxu0 0.0
        %2610 = vmatpush1.msra.mxu0 0.0
        %2611 = vmatprep.subr.mxu0 0.0
        %2612 = vmatpush1.msra.mxu0 0.0
        %2613 = vmatprep.subr.mxu0 0.0
        %2614 = vmatpush1.msra.mxu0 0.0
        %2615 = vmatprep.subr.mxu0 0.0
        %2616 = vmatpush1.msra.mxu0 0.0
        %2617 = vmatprep.subr.mxu0 0.0
        %2618 = vmatpush1.msra.mxu0 0.0
        %2619 = vmatprep.subr.mxu0 0.0
        %2620 = vmatpush1.msra.mxu0 0.0
        %2621 = vmatprep.subr.mxu0 0.0
        %2622 = vmatpush1.msra.mxu0 0.0
        %2623 = vmatprep.subr.mxu0 0.0
        %2624 = vmatpush1.msra.mxu0 0.0
        %2625 = vmatprep.subr.mxu0 0.0
        %2626 = vmatpush1.msra.mxu0 0.0
        %2627 = vmatprep.subr.mxu0 0.0
        %2628 = vmatpush1.msra.mxu0 0.0
        %2629 = vmatprep.subr.mxu0 0.0
        %2630 = vmatpush1.msra.mxu0 0.0
        %2631 = vmatprep.subr.mxu0 0.0
        %2632 = vmatpush1.msra.mxu0 0.0
        %2633 = vmatprep.subr.mxu0 0.0
        %2634 = vmatpush1.msra.mxu0 %v1445
        %2635 = vmatprep.subr.mxu0 0.0
        %2636 = vmatpush2.msra.mxu0 0.0
        %2637 = vmatprep.subr.mxu0 0.0
        %2638 = vmatpush2.msra.mxu0 0.0
        %2639 = vmatprep.subr.mxu0 0.0
        %2640 = vmatpush2.msra.mxu0 0.0
        %2641 = vmatprep.subr.mxu0 0.0
        %2642 = vmatpush2.msra.mxu0 0.0
        %2643 = vmatprep.subr.mxu0 0.0
        %2644 = vmatpush2.msra.mxu0 0.0
        %2645 = vmatprep.subr.mxu0 0.0
        %2646 = vmatpush2.msra.mxu0 0.0
        %2647 = vmatprep.subr.mxu0 0.0
        %2648 = vmatpush2.msra.mxu0 0.0
        %2649 = vmatprep.subr.mxu0 0.0
        %2650 = vmatpush2.msra.mxu0 0.0
        %2651 = vmatprep.subr.mxu0 0.0
        %2652 = vmatpush2.msra.mxu0 0.0
        %2653 = vmatprep.subr.mxu0 0.0
        %2654 = vmatpush2.msra.mxu0 0.0
        %2655 = vmatprep.subr.mxu0 0.0
        %2656 = vmatpush2.msra.mxu0 0.0
        %2657 = vmatprep.subr.mxu0 0.0
        %2658 = vmatpush2.msra.mxu0 0.0
        %2659 = vmatprep.subr.mxu0 0.0
        %2660 = vmatpush2.msra.mxu0 0.0
        %2661 = vmatprep.subr.mxu0 0.0
        %2662 = vmatpush2.msra.mxu0 0.0
        %2663 = vmatprep.subr.mxu0 0.0
        %2664 = vmatpush2.msra.mxu0 0.0
        %2665 = vmatprep.subr.mxu0 0.0
        %2666 = vmatpush2.msra.mxu0 0.0
        %2667 = vmatprep.mubr.f32.mxu0 0.0
        %2668 = vmatmul.mubr.f32.gmra.mxu0 %v2601
        %v2669 = vpop.f32.mrf.mxu0
        %v2670 = vadd.f32 0.0, %v2669
        %v2671 = vpop.f32.mrf.mxu0
        %2672 = vdwg.mxu0
        %v2674 = vsel %vm2074, %v2190, 0
        %2676 = vmatprep.subr.mxu0 0.0
        %2677 = vmatpush1.msra.mxu0 0.0
        %2678 = vmatprep.subr.mxu0 0.0
        %2679 = vmatpush1.msra.mxu0 0.0
        %2680 = vmatprep.subr.mxu0 0.0
        %2681 = vmatpush1.msra.mxu0 0.0
        %2682 = vmatprep.subr.mxu0 0.0
        %2683 = vmatpush1.msra.mxu0 0.0
        %2684 = vmatprep.subr.mxu0 0.0
        %2685 = vmatpush1.msra.mxu0 0.0
        %2686 = vmatprep.subr.mxu0 0.0
        %2687 = vmatpush1.msra.mxu0 0.0
        %2688 = vmatprep.subr.mxu0 0.0
        %2689 = vmatpush1.msra.mxu0 0.0
        %2690 = vmatprep.subr.mxu0 0.0
        %2691 = vmatpush1.msra.mxu0 0.0
        %2692 = vmatprep.subr.mxu0 0.0
        %2693 = vmatpush1.msra.mxu0 0.0
        %2694 = vmatprep.subr.mxu0 0.0
        %2695 = vmatpush1.msra.mxu0 0.0
        %2696 = vmatprep.subr.mxu0 0.0
        %2697 = vmatpush1.msra.mxu0 0.0
        %2698 = vmatprep.subr.mxu0 0.0
        %2699 = vmatpush1.msra.mxu0 0.0
        %2700 = vmatprep.subr.mxu0 0.0
        %2701 = vmatpush1.msra.mxu0 0.0
        %2702 = vmatprep.subr.mxu0 0.0
        %2703 = vmatpush1.msra.mxu0 0.0
        %2704 = vmatprep.subr.mxu0 0.0
        %2705 = vmatpush1.msra.mxu0 0.0
        %2706 = vmatprep.subr.mxu0 0.0
        %2707 = vmatpush1.msra.mxu0 %v1446
        %2708 = vmatprep.subr.mxu0 0.0
        %2709 = vmatpush2.msra.mxu0 0.0
        %2710 = vmatprep.subr.mxu0 0.0
        %2711 = vmatpush2.msra.mxu0 0.0
        %2712 = vmatprep.subr.mxu0 0.0
        %2713 = vmatpush2.msra.mxu0 0.0
        %2714 = vmatprep.subr.mxu0 0.0
        %2715 = vmatpush2.msra.mxu0 0.0
        %2716 = vmatprep.subr.mxu0 0.0
        %2717 = vmatpush2.msra.mxu0 0.0
        %2718 = vmatprep.subr.mxu0 0.0
        %2719 = vmatpush2.msra.mxu0 0.0
        %2720 = vmatprep.subr.mxu0 0.0
        %2721 = vmatpush2.msra.mxu0 0.0
        %2722 = vmatprep.subr.mxu0 0.0
        %2723 = vmatpush2.msra.mxu0 0.0
        %2724 = vmatprep.subr.mxu0 0.0
        %2725 = vmatpush2.msra.mxu0 0.0
        %2726 = vmatprep.subr.mxu0 0.0
        %2727 = vmatpush2.msra.mxu0 0.0
        %2728 = vmatprep.subr.mxu0 0.0
        %2729 = vmatpush2.msra.mxu0 0.0
        %2730 = vmatprep.subr.mxu0 0.0
        %2731 = vmatpush2.msra.mxu0 0.0
        %2732 = vmatprep.subr.mxu0 0.0
        %2733 = vmatpush2.msra.mxu0 0.0
        %2734 = vmatprep.subr.mxu0 0.0
        %2735 = vmatpush2.msra.mxu0 0.0
        %2736 = vmatprep.subr.mxu0 0.0
        %2737 = vmatpush2.msra.mxu0 0.0
        %2738 = vmatprep.subr.mxu0 0.0
        %2739 = vmatpush2.msra.mxu0 0.0
        %2740 = vmatprep.mubr.f32.mxu0 0.0
        %2741 = vmatmul.mubr.f32.gmra.mxu0 %v2674
        %v2742 = vpop.f32.mrf.mxu0
        %v2743 = vadd.f32 0.0, %v2742
        %v2744 = vpop.f32.mrf.mxu0
        %2745 = vdwg.mxu0
        %v2747 = vsel %vm2074, %v2192, 0
        %2749 = vmatprep.subr.mxu0 0.0
        %2750 = vmatpush1.msra.mxu0 0.0
        %2751 = vmatprep.subr.mxu0 0.0
        %2752 = vmatpush1.msra.mxu0 0.0
        %2753 = vmatprep.subr.mxu0 0.0
        %2754 = vmatpush1.msra.mxu0 0.0
        %2755 = vmatprep.subr.mxu0 0.0
        %2756 = vmatpush1.msra.mxu0 0.0
        %2757 = vmatprep.subr.mxu0 0.0
        %2758 = vmatpush1.msra.mxu0 0.0
        %2759 = vmatprep.subr.mxu0 0.0
        %2760 = vmatpush1.msra.mxu0 0.0
        %2761 = vmatprep.subr.mxu0 0.0
        %2762 = vmatpush1.msra.mxu0 0.0
        %2763 = vmatprep.subr.mxu0 0.0
        %2764 = vmatpush1.msra.mxu0 0.0
        %2765 = vmatprep.subr.mxu0 0.0
        %2766 = vmatpush1.msra.mxu0 0.0
        %2767 = vmatprep.subr.mxu0 0.0
        %2768 = vmatpush1.msra.mxu0 0.0
        %2769 = vmatprep.subr.mxu0 0.0
        %2770 = vmatpush1.msra.mxu0 0.0
        %2771 = vmatprep.subr.mxu0 0.0
        %2772 = vmatpush1.msra.mxu0 0.0
        %2773 = vmatprep.subr.mxu0 0.0
        %2774 = vmatpush1.msra.mxu0 0.0
        %2775 = vmatprep.subr.mxu0 0.0
        %2776 = vmatpush1.msra.mxu0 0.0
        %2777 = vmatprep.subr.mxu0 0.0
        %2778 = vmatpush1.msra.mxu0 0.0
        %2779 = vmatprep.subr.mxu0 0.0
        %2780 = vmatpush1.msra.mxu0 %v1447
        %2781 = vmatprep.subr.mxu0 0.0
        %2782 = vmatpush2.msra.mxu0 0.0
        %2783 = vmatprep.subr.mxu0 0.0
        %2784 = vmatpush2.msra.mxu0 0.0
        %2785 = vmatprep.subr.mxu0 0.0
        %2786 = vmatpush2.msra.mxu0 0.0
        %2787 = vmatprep.subr.mxu0 0.0
        %2788 = vmatpush2.msra.mxu0 0.0
        %2789 = vmatprep.subr.mxu0 0.0
        %2790 = vmatpush2.msra.mxu0 0.0
        %2791 = vmatprep.subr.mxu0 0.0
        %2792 = vmatpush2.msra.mxu0 0.0
        %2793 = vmatprep.subr.mxu0 0.0
        %2794 = vmatpush2.msra.mxu0 0.0
        %2795 = vmatprep.subr.mxu0 0.0
        %2796 = vmatpush2.msra.mxu0 0.0
        %2797 = vmatprep.subr.mxu0 0.0
        %2798 = vmatpush2.msra.mxu0 0.0
        %2799 = vmatprep.subr.mxu0 0.0
        %2800 = vmatpush2.msra.mxu0 0.0
        %2801 = vmatprep.subr.mxu0 0.0
        %2802 = vmatpush2.msra.mxu0 0.0
        %2803 = vmatprep.subr.mxu0 0.0
        %2804 = vmatpush2.msra.mxu0 0.0
        %2805 = vmatprep.subr.mxu0 0.0
        %2806 = vmatpush2.msra.mxu0 0.0
        %2807 = vmatprep.subr.mxu0 0.0
        %2808 = vmatpush2.msra.mxu0 0.0
        %2809 = vmatprep.subr.mxu0 0.0
        %2810 = vmatpush2.msra.mxu0 0.0
        %2811 = vmatprep.subr.mxu0 0.0
        %2812 = vmatpush2.msra.mxu0 0.0
        %2813 = vmatprep.mubr.f32.mxu0 0.0
        %2814 = vmatmul.mubr.f32.gmra.mxu0 %v2747
        %v2815 = vpop.f32.mrf.mxu0
        %v2816 = vadd.f32 0.0, %v2815
        %v2817 = vpop.f32.mrf.mxu0
        %2818 = vdwg.mxu0
        %v2820 = vsel %vm2074, %v2194, 0
        %2822 = vmatprep.subr.mxu0 0.0
        %2823 = vmatpush1.msra.mxu0 0.0
        %2824 = vmatprep.subr.mxu0 0.0
        %2825 = vmatpush1.msra.mxu0 0.0
        %2826 = vmatprep.subr.mxu0 0.0
        %2827 = vmatpush1.msra.mxu0 0.0
        %2828 = vmatprep.subr.mxu0 0.0
        %2829 = vmatpush1.msra.mxu0 0.0
        %2830 = vmatprep.subr.mxu0 0.0
        %2831 = vmatpush1.msra.mxu0 0.0
        %2832 = vmatprep.subr.mxu0 0.0
        %2833 = vmatpush1.msra.mxu0 0.0
        %2834 = vmatprep.subr.mxu0 0.0
        %2835 = vmatpush1.msra.mxu0 0.0
        %2836 = vmatprep.subr.mxu0 0.0
        %2837 = vmatpush1.msra.mxu0 0.0
        %2838 = vmatprep.subr.mxu0 0.0
        %2839 = vmatpush1.msra.mxu0 0.0
        %2840 = vmatprep.subr.mxu0 0.0
        %2841 = vmatpush1.msra.mxu0 0.0
        %2842 = vmatprep.subr.mxu0 0.0
        %2843 = vmatpush1.msra.mxu0 0.0
        %2844 = vmatprep.subr.mxu0 0.0
        %2845 = vmatpush1.msra.mxu0 0.0
        %2846 = vmatprep.subr.mxu0 0.0
        %2847 = vmatpush1.msra.mxu0 0.0
        %2848 = vmatprep.subr.mxu0 0.0
        %2849 = vmatpush1.msra.mxu0 0.0
        %2850 = vmatprep.subr.mxu0 0.0
        %2851 = vmatpush1.msra.mxu0 0.0
        %2852 = vmatprep.subr.mxu0 0.0
        %2853 = vmatpush1.msra.mxu0 %v1448
        %2854 = vmatprep.subr.mxu0 0.0
        %2855 = vmatpush2.msra.mxu0 0.0
        %2856 = vmatprep.subr.mxu0 0.0
        %2857 = vmatpush2.msra.mxu0 0.0
        %2858 = vmatprep.subr.mxu0 0.0
        %2859 = vmatpush2.msra.mxu0 0.0
        %2860 = vmatprep.subr.mxu0 0.0
        %2861 = vmatpush2.msra.mxu0 0.0
        %2862 = vmatprep.subr.mxu0 0.0
        %2863 = vmatpush2.msra.mxu0 0.0
        %2864 = vmatprep.subr.mxu0 0.0
        %2865 = vmatpush2.msra.mxu0 0.0
        %2866 = vmatprep.subr.mxu0 0.0
        %2867 = vmatpush2.msra.mxu0 0.0
        %2868 = vmatprep.subr.mxu0 0.0
        %2869 = vmatpush2.msra.mxu0 0.0
        %2870 = vmatprep.subr.mxu0 0.0
        %2871 = vmatpush2.msra.mxu0 0.0
        %2872 = vmatprep.subr.mxu0 0.0
        %2873 = vmatpush2.msra.mxu0 0.0
        %2874 = vmatprep.subr.mxu0 0.0
        %2875 = vmatpush2.msra.mxu0 0.0
        %2876 = vmatprep.subr.mxu0 0.0
        %2877 = vmatpush2.msra.mxu0 0.0
        %2878 = vmatprep.subr.mxu0 0.0
        %2879 = vmatpush2.msra.mxu0 0.0
        %2880 = vmatprep.subr.mxu0 0.0
        %2881 = vmatpush2.msra.mxu0 0.0
        %2882 = vmatprep.subr.mxu0 0.0
        %2883 = vmatpush2.msra.mxu0 0.0
        %2884 = vmatprep.subr.mxu0 0.0
        %2885 = vmatpush2.msra.mxu0 0.0
        %2886 = vmatprep.mubr.f32.mxu0 0.0
        %2887 = vmatmul.mubr.f32.gmra.mxu0 %v2820
        %v2888 = vpop.f32.mrf.mxu0
        %v2889 = vadd.f32 0.0, %v2888
        %v2890 = vpop.f32.mrf.mxu0
        %2891 = vdwg.mxu0
        %v2892 = vadd.f32 %v2300, %v2378
        %v2893 = vadd.f32 %v2301, %v2451
        %v2894 = vadd.f32 %v2302, %v2524
        %v2895 = vadd.f32 %v2303, %v2597
        %v2896 = vadd.f32 %v2304, %v2670
        %v2897 = vadd.f32 %v2305, %v2743
        %v2898 = vadd.f32 %v2306, %v2816
        %v2899 = vadd.f32 %v2307, %v2889
        %2900 = vst.msk [vmem:[#allocation5] sm:$0xff] %vm1457, %v2892
        %2901 = vst.msk [vmem:[#allocation5 + $0x8] sm:$0xff] %vm1457, %v2893
        %2902 = vst.msk [vmem:[#allocation5 + $0x10] sm:$0xff] %vm1457, %v2894
        %2903 = vst.msk [vmem:[#allocation5 + $0x18] sm:$0xff] %vm1457, %v2895
        %2904 = vst.msk [vmem:[#allocation5 + $0x20] sm:$0xff] %vm1457, %v2896
        %2905 = vst.msk [vmem:[#allocation5 + $0x28] sm:$0xff] %vm1457, %v2897
        %2906 = vst.msk [vmem:[#allocation5 + $0x30] sm:$0xff] %vm1457, %v2898
        %2907 = vst.msk [vmem:[#allocation5 + $0x38] sm:$0xff] %vm1457, %v2899
        %2908 = vst.msk [vmem:[#allocation3] sm:$0xff] %vm2243, %v2099
        %2909 = vst.msk [vmem:[#allocation3 + $0x8] sm:$0xff] %vm2243, %v2100
        %2910 = vst.msk [vmem:[#allocation3 + $0x10] sm:$0xff] %vm2243, %v2101
        %2911 = vst.msk [vmem:[#allocation3 + $0x18] sm:$0xff] %vm2243, %v2102
        %2912 = vst.msk [vmem:[#allocation3 + $0x20] sm:$0xff] %vm2243, %v2103
        %2913 = vst.msk [vmem:[#allocation3 + $0x28] sm:$0xff] %vm2243, %v2104
        %2914 = vst.msk [vmem:[#allocation3 + $0x30] sm:$0xff] %vm2243, %v2105
        %2915 = vst.msk [vmem:[#allocation3 + $0x38] sm:$0xff] %vm2243, %v2106
        // Predicated region
        $region69: #{tpu_custom_call.1} parent=43 // pred_check
          %p2916 = pneg %p374
        $region70: #{tpu_custom_call.1} parent=43 // pred_check_branch
          %2918 = sbr.rel (%p2916) target = $region72
        $region71: #{tpu_custom_call.1} parent=43 // pred_region
          %v2919 = vld [vmem:[#allocation5] sm:$0xff]
          %v2920 = vld [vmem:[#allocation5 + $0x8] sm:$0xff]
          %v2921 = vld [vmem:[#allocation5 + $0x10] sm:$0xff]
          %v2922 = vld [vmem:[#allocation5 + $0x18] sm:$0xff]
          %v2923 = vld [vmem:[#allocation5 + $0x20] sm:$0xff]
          %v2924 = vld [vmem:[#allocation5 + $0x28] sm:$0xff]
          %v2925 = vld [vmem:[#allocation5 + $0x30] sm:$0xff]
          %v2926 = vld [vmem:[#allocation5 + $0x38] sm:$0xff]
          %v2927 = vld [vmem:[#allocation4] sm:$0xff]
          %v2928 = vld [vmem:[#allocation4 + $0x8] sm:$0xff]
          %v2929 = vld [vmem:[#allocation4 + $0x10] sm:$0xff]
          %v2930 = vld [vmem:[#allocation4 + $0x18] sm:$0xff]
          %v2931 = vld [vmem:[#allocation4 + $0x20] sm:$0xff]
          %v2932 = vld [vmem:[#allocation4 + $0x28] sm:$0xff]
          %v2933 = vld [vmem:[#allocation4 + $0x30] sm:$0xff]
          %v2934 = vld [vmem:[#allocation4 + $0x38] sm:$0xff]
          %v2935 = vrcp.pop %v2927
          %v2936 = vrcp.pop %v2928
          %v2937 = vrcp.pop %v2929
          %v2938 = vrcp.pop %v2930
          %v2939 = vrcp.pop %v2931
          %v2940 = vrcp.pop %v2932
          %v2941 = vrcp.pop %v2933
          %v2942 = vrcp.pop %v2934
          %2944 = vset.pattern.permute.xlu0 0
          %2945 = vperm.xlu0 %2944, %v2935
          %v2946 = vpop.permute.xlu0 %2945
          %2949 = vset.pattern.permute.xlu0 0
          %2950 = vperm.xlu0 %2949, %v2936
          %v2951 = vpop.permute.xlu0 %2950
          %2954 = vset.pattern.permute.xlu0 0
          %2955 = vperm.xlu0 %2954, %v2937
          %v2956 = vpop.permute.xlu0 %2955
          %2959 = vset.pattern.permute.xlu0 0
          %2960 = vperm.xlu0 %2959, %v2938
          %v2961 = vpop.permute.xlu0 %2960
          %2964 = vset.pattern.permute.xlu0 0
          %2965 = vperm.xlu0 %2964, %v2939
          %v2966 = vpop.permute.xlu0 %2965
          %2969 = vset.pattern.permute.xlu0 0
          %2970 = vperm.xlu0 %2969, %v2940
          %v2971 = vpop.permute.xlu0 %2970
          %2974 = vset.pattern.permute.xlu0 0
          %2975 = vperm.xlu0 %2974, %v2941
          %v2976 = vpop.permute.xlu0 %2975
          %2979 = vset.pattern.permute.xlu0 0
          %2980 = vperm.xlu0 %2979, %v2942
          %v2981 = vpop.permute.xlu0 %2980
          %v2983 = vmul.f32 %v2919, %v2946
          %v2984 = vmul.f32 %v2920, %v2951
          %v2985 = vmul.f32 %v2921, %v2956
          %v2986 = vmul.f32 %v2922, %v2961
          %v2987 = vmul.f32 %v2923, %v2966
          %v2988 = vmul.f32 %v2924, %v2971
          %v2989 = vmul.f32 %v2925, %v2976
          %v2990 = vmul.f32 %v2926, %v2981
          %v2991 = vcombine.low %v2983, %v2985
          %v2992 = vcombine.high %v2983, %v2985
          %v2994 = vunpack.c.l.s4 1983009808
          %v2995 = vunpack.c.0.s8 %v2994
          %v2996 = vlaneseq
          %v2997 = vshrl.u32 %v2996, 7
          %v2998 = vsub.s32 %v2995, %v2997
          %v2999 = vrot.slane %v2991, %v2998
          %v3001 = vunpack.c.l.s4 1983009808
          %v3002 = vunpack.c.0.s8 %v3001
          %v3003 = vlaneseq
          %v3004 = vshrl.u32 %v3003, 7
          %v3005 = vsub.s32 %v3002, %v3004
          %v3006 = vrot.slane %v2992, %v3005
          %v3007 = vcombine.low %v2984, %v2986
          %v3008 = vcombine.high %v2984, %v2986
          %v3010 = vunpack.c.l.s4 1983009808
          %v3011 = vunpack.c.0.s8 %v3010
          %v3012 = vlaneseq
          %v3013 = vshrl.u32 %v3012, 7
          %v3014 = vsub.s32 %v3011, %v3013
          %v3015 = vrot.slane %v3007, %v3014
          %v3017 = vunpack.c.l.s4 1983009808
          %v3018 = vunpack.c.0.s8 %v3017
          %v3019 = vlaneseq
          %v3020 = vshrl.u32 %v3019, 7
          %v3021 = vsub.s32 %v3018, %v3020
          %v3022 = vrot.slane %v3008, %v3021
          %v3023 = vcombine.low %v2987, %v2989
          %v3024 = vcombine.high %v2987, %v2989
          %v3026 = vunpack.c.l.s4 1983009808
          %v3027 = vunpack.c.0.s8 %v3026
          %v3028 = vlaneseq
          %v3029 = vshrl.u32 %v3028, 7
          %v3030 = vsub.s32 %v3027, %v3029
          %v3031 = vrot.slane %v3023, %v3030
          %v3033 = vunpack.c.l.s4 1983009808
          %v3034 = vunpack.c.0.s8 %v3033
          %v3035 = vlaneseq
          %v3036 = vshrl.u32 %v3035, 7
          %v3037 = vsub.s32 %v3034, %v3036
          %v3038 = vrot.slane %v3024, %v3037
          %v3039 = vcombine.low %v2988, %v2990
          %v3040 = vcombine.high %v2988, %v2990
          %v3042 = vunpack.c.l.s4 1983009808
          %v3043 = vunpack.c.0.s8 %v3042
          %v3044 = vlaneseq
          %v3045 = vshrl.u32 %v3044, 7
          %v3046 = vsub.s32 %v3043, %v3045
          %v3047 = vrot.slane %v3039, %v3046
          %v3049 = vunpack.c.l.s4 1983009808
          %v3050 = vunpack.c.0.s8 %v3049
          %v3051 = vlaneseq
          %v3052 = vshrl.u32 %v3051, 7
          %v3053 = vsub.s32 %v3050, %v3052
          %v3054 = vrot.slane %v3040, %v3053
          %v3055 = vcombine.low %v2999, %v3015
          %v3056 = vcombine.high %v2999, %v3015
          %v3058 = vunpack.c.l.s4 1934713408
          %v3059 = vunpack.c.0.s8 %v3058
          %v3060 = vlaneseq
          %v3061 = vshrl.u32 %v3060, 7
          %v3062 = vsub.s32 %v3059, %v3061
          %v3063 = vrot.slane %v3055, %v3062
          %v3065 = vunpack.c.l.s4 1934713408
          %v3066 = vunpack.c.0.s8 %v3065
          %v3067 = vlaneseq
          %v3068 = vshrl.u32 %v3067, 7
          %v3069 = vsub.s32 %v3066, %v3068
          %v3070 = vrot.slane %v3056, %v3069
          %v3071 = vcombine.low %v3006, %v3022
          %v3072 = vcombine.high %v3006, %v3022
          %v3074 = vunpack.c.l.s4 1934713408
          %v3075 = vunpack.c.0.s8 %v3074
          %v3076 = vlaneseq
          %v3077 = vshrl.u32 %v3076, 7
          %v3078 = vsub.s32 %v3075, %v3077
          %v3079 = vrot.slane %v3071, %v3078
          %v3081 = vunpack.c.l.s4 1934713408
          %v3082 = vunpack.c.0.s8 %v3081
          %v3083 = vlaneseq
          %v3084 = vshrl.u32 %v3083, 7
          %v3085 = vsub.s32 %v3082, %v3084
          %v3086 = vrot.slane %v3072, %v3085
          %v3087 = vcombine.low %v3031, %v3047
          %v3088 = vcombine.high %v3031, %v3047
          %v3090 = vunpack.c.l.s4 1934713408
          %v3091 = vunpack.c.0.s8 %v3090
          %v3092 = vlaneseq
          %v3093 = vshrl.u32 %v3092, 7
          %v3094 = vsub.s32 %v3091, %v3093
          %v3095 = vrot.slane %v3087, %v3094
          %v3097 = vunpack.c.l.s4 1934713408
          %v3098 = vunpack.c.0.s8 %v3097
          %v3099 = vlaneseq
          %v3100 = vshrl.u32 %v3099, 7
          %v3101 = vsub.s32 %v3098, %v3100
          %v3102 = vrot.slane %v3088, %v3101
          %v3103 = vcombine.low %v3038, %v3054
          %v3104 = vcombine.high %v3038, %v3054
          %v3106 = vunpack.c.l.s4 1934713408
          %v3107 = vunpack.c.0.s8 %v3106
          %v3108 = vlaneseq
          %v3109 = vshrl.u32 %v3108, 7
          %v3110 = vsub.s32 %v3107, %v3109
          %v3111 = vrot.slane %v3103, %v3110
          %v3113 = vunpack.c.l.s4 1934713408
          %v3114 = vunpack.c.0.s8 %v3113
          %v3115 = vlaneseq
          %v3116 = vshrl.u32 %v3115, 7
          %v3117 = vsub.s32 %v3114, %v3116
          %v3118 = vrot.slane %v3104, %v3117
          %v3119 = vcombine.low %v3063, %v3095
          %v3120 = vcombine.high %v3063, %v3095
          %v3121 = vcombine.low %v3070, %v3102
          %v3122 = vcombine.high %v3070, %v3102
          %v3123 = vcombine.low %v3079, %v3111
          %v3124 = vcombine.high %v3079, %v3111
          %v3125 = vcombine.low %v3086, %v3118
          %v3126 = vcombine.high %v3086, %v3118
          %v3127 = vcombine.low %v3119, %v3121
          %v3128 = vcombine.high %v3119, %v3121
          %v3130 = vunpack.c.l.s4 1983009808
          %v3131 = vunpack.c.0.s8 %v3130
          %v3132 = vlaneseq
          %v3133 = vshrl.u32 %v3132, 7
          %v3134 = vsub.s32 %v3131, %v3133
          %v3135 = vrot.slane %v3127, %v3134
          %v3137 = vunpack.c.l.s4 1983009808
          %v3138 = vunpack.c.0.s8 %v3137
          %v3139 = vlaneseq
          %v3140 = vshrl.u32 %v3139, 7
          %v3141 = vsub.s32 %v3138, %v3140
          %v3142 = vrot.slane %v3128, %v3141
          %v3143 = vcombine.low %v3120, %v3122
          %v3144 = vcombine.high %v3120, %v3122
          %v3146 = vunpack.c.l.s4 1983009808
          %v3147 = vunpack.c.0.s8 %v3146
          %v3148 = vlaneseq
          %v3149 = vshrl.u32 %v3148, 7
          %v3150 = vsub.s32 %v3147, %v3149
          %v3151 = vrot.slane %v3143, %v3150
          %v3153 = vunpack.c.l.s4 1983009808
          %v3154 = vunpack.c.0.s8 %v3153
          %v3155 = vlaneseq
          %v3156 = vshrl.u32 %v3155, 7
          %v3157 = vsub.s32 %v3154, %v3156
          %v3158 = vrot.slane %v3144, %v3157
          %v3159 = vcombine.low %v3123, %v3125
          %v3160 = vcombine.high %v3123, %v3125
          %v3162 = vunpack.c.l.s4 1983009808
          %v3163 = vunpack.c.0.s8 %v3162
          %v3164 = vlaneseq
          %v3165 = vshrl.u32 %v3164, 7
          %v3166 = vsub.s32 %v3163, %v3165
          %v3167 = vrot.slane %v3159, %v3166
          %v3169 = vunpack.c.l.s4 1983009808
          %v3170 = vunpack.c.0.s8 %v3169
          %v3171 = vlaneseq
          %v3172 = vshrl.u32 %v3171, 7
          %v3173 = vsub.s32 %v3170, %v3172
          %v3174 = vrot.slane %v3160, %v3173
          %v3175 = vcombine.low %v3124, %v3126
          %v3176 = vcombine.high %v3124, %v3126
          %v3178 = vunpack.c.l.s4 1983009808
          %v3179 = vunpack.c.0.s8 %v3178
          %v3180 = vlaneseq
          %v3181 = vshrl.u32 %v3180, 7
          %v3182 = vsub.s32 %v3179, %v3181
          %v3183 = vrot.slane %v3175, %v3182
          %v3185 = vunpack.c.l.s4 1983009808
          %v3186 = vunpack.c.0.s8 %v3185
          %v3187 = vlaneseq
          %v3188 = vshrl.u32 %v3187, 7
          %v3189 = vsub.s32 %v3186, %v3188
          %v3190 = vrot.slane %v3176, %v3189
          %v3191 = vcombine.low %v3135, %v3151
          %v3192 = vcombine.high %v3135, %v3151
          %v3194 = vunpack.c.l.s4 1934713408
          %v3195 = vunpack.c.0.s8 %v3194
          %v3196 = vlaneseq
          %v3197 = vshrl.u32 %v3196, 7
          %v3198 = vsub.s32 %v3195, %v3197
          %v3199 = vrot.slane %v3191, %v3198
          %v3201 = vunpack.c.l.s4 1934713408
          %v3202 = vunpack.c.0.s8 %v3201
          %v3203 = vlaneseq
          %v3204 = vshrl.u32 %v3203, 7
          %v3205 = vsub.s32 %v3202, %v3204
          %v3206 = vrot.slane %v3192, %v3205
          %v3207 = vcombine.low %v3142, %v3158
          %v3208 = vcombine.high %v3142, %v3158
          %v3210 = vunpack.c.l.s4 1934713408
          %v3211 = vunpack.c.0.s8 %v3210
          %v3212 = vlaneseq
          %v3213 = vshrl.u32 %v3212, 7
          %v3214 = vsub.s32 %v3211, %v3213
          %v3215 = vrot.slane %v3207, %v3214
          %v3217 = vunpack.c.l.s4 1934713408
          %v3218 = vunpack.c.0.s8 %v3217
          %v3219 = vlaneseq
          %v3220 = vshrl.u32 %v3219, 7
          %v3221 = vsub.s32 %v3218, %v3220
          %v3222 = vrot.slane %v3208, %v3221
          %v3223 = vcombine.low %v3167, %v3183
          %v3224 = vcombine.high %v3167, %v3183
          %v3226 = vunpack.c.l.s4 1934713408
          %v3227 = vunpack.c.0.s8 %v3226
          %v3228 = vlaneseq
          %v3229 = vshrl.u32 %v3228, 7
          %v3230 = vsub.s32 %v3227, %v3229
          %v3231 = vrot.slane %v3223, %v3230
          %v3233 = vunpack.c.l.s4 1934713408
          %v3234 = vunpack.c.0.s8 %v3233
          %v3235 = vlaneseq
          %v3236 = vshrl.u32 %v3235, 7
          %v3237 = vsub.s32 %v3234, %v3236
          %v3238 = vrot.slane %v3224, %v3237
          %v3239 = vcombine.low %v3174, %v3190
          %v3240 = vcombine.high %v3174, %v3190
          %v3242 = vunpack.c.l.s4 1934713408
          %v3243 = vunpack.c.0.s8 %v3242
          %v3244 = vlaneseq
          %v3245 = vshrl.u32 %v3244, 7
          %v3246 = vsub.s32 %v3243, %v3245
          %v3247 = vrot.slane %v3239, %v3246
          %v3249 = vunpack.c.l.s4 1934713408
          %v3250 = vunpack.c.0.s8 %v3249
          %v3251 = vlaneseq
          %v3252 = vshrl.u32 %v3251, 7
          %v3253 = vsub.s32 %v3250, %v3252
          %v3254 = vrot.slane %v3240, %v3253
          %v3255 = vcombine.low %v3199, %v3231
          %v3256 = vcombine.high %v3199, %v3231
          %v3257 = vcombine.low %v3206, %v3238
          %v3258 = vcombine.high %v3206, %v3238
          %v3259 = vcombine.low %v3215, %v3247
          %v3260 = vcombine.high %v3215, %v3247
          %v3261 = vcombine.low %v3222, %v3254
          %v3262 = vcombine.high %v3222, %v3254
          %3264 = vrot.lane.b32.xlu0 %v3256, 4
          %v3265 = vpop.permute.xlu0 %3264
          %3268 = vrot.lane.b32.xlu0 %v3257, 8
          %v3269 = vpop.permute.xlu0 %3268
          %3272 = vrot.lane.b32.xlu0 %v3258, 12
          %v3273 = vpop.permute.xlu0 %3272
          %3276 = vrot.lane.b32.xlu0 %v3259, 16
          %v3277 = vpop.permute.xlu0 %3276
          %3280 = vrot.lane.b32.xlu0 %v3260, 20
          %v3281 = vpop.permute.xlu0 %3280
          %3284 = vrot.lane.b32.xlu0 %v3261, 24
          %v3285 = vpop.permute.xlu0 %3284
          %3288 = vrot.lane.b32.xlu0 %v3262, 28
          %v3289 = vpop.permute.xlu0 %3288
          %v3291 = vsel %vm1457, %v3255, %v3265
          %v3292 = vsel %vm2074, %v3291, %v3269
          %vm3293 = vcmask 97280
          %v3294 = vsel %vm3293, %v3292, %v3273
          %vm3295 = vcmask 130048
          %v3296 = vsel %vm3295, %v3294, %v3277
          %vm3297 = vcmask 162816
          %v3298 = vsel %vm3297, %v3296, %v3281
          %vm3299 = vcmask 195584
          %v3300 = vsel %vm3299, %v3298, %v3285
          %vm3301 = vcmask 228352
          %v3302 = vsel %vm3301, %v3300, %v3289
          %v3303 = vld [vmem:[#allocation14] sm:$0xff]
          %v3304 = vld [vmem:[#allocation14 + $0x8] sm:$0xff]
          %v3305 = vld [vmem:[#allocation14 + $0x10] sm:$0xff]
          %v3306 = vld [vmem:[#allocation14 + $0x18] sm:$0xff]
          %v3307 = vld [vmem:[%s5] sm:$0x1]
          %v3309 = vlaneseq
          %v3310 = vshrl.u32 %v3309, 7
          %v3311 = vsub.s32 0, %v3310
          %v3312 = vrot.slane %v3307, %v3311
          %v3315 = vsel %vm713, %v3302, 0
          %3317 = vmatprep.subr.mxu0 0.0
          %3318 = vmatpush1.msra.mxu0 0.0
          %3319 = vmatprep.subr.mxu0 0.0
          %3320 = vmatpush1.msra.mxu0 0.0
          %3321 = vmatprep.subr.mxu0 0.0
          %3322 = vmatpush1.msra.mxu0 0.0
          %3323 = vmatprep.subr.mxu0 0.0
          %3324 = vmatpush1.msra.mxu0 0.0
          %3325 = vmatprep.subr.mxu0 0.0
          %3326 = vmatpush1.msra.mxu0 0.0
          %3327 = vmatprep.subr.mxu0 0.0
          %3328 = vmatpush1.msra.mxu0 0.0
          %3329 = vmatprep.subr.mxu0 0.0
          %3330 = vmatpush1.msra.mxu0 0.0
          %3331 = vmatprep.subr.mxu0 0.0
          %3332 = vmatpush1.msra.mxu0 0.0
          %3333 = vmatprep.subr.mxu0 0.0
          %3334 = vmatpush1.msra.mxu0 0.0
          %3335 = vmatprep.subr.mxu0 0.0
          %3336 = vmatpush1.msra.mxu0 0.0
          %3337 = vmatprep.subr.mxu0 0.0
          %3338 = vmatpush1.msra.mxu0 0.0
          %3339 = vmatprep.subr.mxu0 0.0
          %3340 = vmatpush1.msra.mxu0 0.0
          %3341 = vmatprep.subr.mxu0 0.0
          %3342 = vmatpush1.msra.mxu0 %v3306
          %3343 = vmatprep.subr.mxu0 0.0
          %3344 = vmatpush1.msra.mxu0 %v3305
          %3345 = vmatprep.subr.mxu0 0.0
          %3346 = vmatpush1.msra.mxu0 %v3304
          %3347 = vmatprep.subr.mxu0 0.0
          %3348 = vmatpush1.msra.mxu0 %v3303
          %3349 = vmatprep.subr.mxu0 0.0
          %3350 = vmatpush2.msra.mxu0 0.0
          %3351 = vmatprep.subr.mxu0 0.0
          %3352 = vmatpush2.msra.mxu0 0.0
          %3353 = vmatprep.subr.mxu0 0.0
          %3354 = vmatpush2.msra.mxu0 0.0
          %3355 = vmatprep.subr.mxu0 0.0
          %3356 = vmatpush2.msra.mxu0 0.0
          %3357 = vmatprep.subr.mxu0 0.0
          %3358 = vmatpush2.msra.mxu0 0.0
          %3359 = vmatprep.subr.mxu0 0.0
          %3360 = vmatpush2.msra.mxu0 0.0
          %3361 = vmatprep.subr.mxu0 0.0
          %3362 = vmatpush2.msra.mxu0 0.0
          %3363 = vmatprep.subr.mxu0 0.0
          %3364 = vmatpush2.msra.mxu0 0.0
          %3365 = vmatprep.subr.mxu0 0.0
          %3366 = vmatpush2.msra.mxu0 0.0
          %3367 = vmatprep.subr.mxu0 0.0
          %3368 = vmatpush2.msra.mxu0 0.0
          %3369 = vmatprep.subr.mxu0 0.0
          %3370 = vmatpush2.msra.mxu0 0.0
          %3371 = vmatprep.subr.mxu0 0.0
          %3372 = vmatpush2.msra.mxu0 0.0
          %3373 = vmatprep.subr.mxu0 0.0
          %3374 = vmatpush2.msra.mxu0 0.0
          %3375 = vmatprep.subr.mxu0 0.0
          %3376 = vmatpush2.msra.mxu0 0.0
          %3377 = vmatprep.subr.mxu0 0.0
          %3378 = vmatpush2.msra.mxu0 0.0
          %3379 = vmatprep.subr.mxu0 0.0
          %3380 = vmatpush2.msra.mxu0 0.0
          %3381 = vmatprep.mubr.f32.mxu0 0.0
          %3382 = vmatmul.mubr.f32.gmra.mxu0 %v3315
          %v3383 = vpop.f32.mrf.mxu0
          %v3384 = vadd.f32 %v3312, %v3383
          %v3385 = vpop.f32.mrf.mxu0
          %3386 = vdwg.mxu0
          %3387 = vst.msk [vmem:[%s373] sm:$0xff] %vm713, %v3384
        $region72: #{tpu_custom_call.1} parent=43 // pred_fallthru
          _
        %s3388 = sand.u32 %s196, 1
        %s3389 = scalar_lea.sflag [#allocation8], %s3388
        %s3390 = sand.u32 %s196, 1
        %s3391 = smul.addr %s3390, 8
        %s3392 = scalar_lea.vmem [#allocation15], %s3391
        // Predicated region
        $region73: #{tpu_custom_call.1} parent=43 // pred_check
          %p3393 = pneg %p206
        $region74: #{tpu_custom_call.1} parent=43 // pred_check_branch
          %3395 = sbr.rel (%p3393) target = $region76
        $region75: #{tpu_custom_call.1} parent=43 // pred_region
          %s3397 = ssub.s32 128, 128
          %3398 = vsyncadd %s3389, %s3397
          %s3399 = sadd.s32 %s33, %s32
          %s3400 = smul.addr %s3399, 128
          %s3401 = scalar_lea.hbm %s6, %s3400
          %s3403 = sshll.u32 %s3392, 4
          %s3404 = int_to_ptr.vmem [resolvable:$true] %s3403
          %3406 = dma.vmem_to_hbm [thread:$0]  %s3404, 128, %s3401, %s3389
        $region76: #{tpu_custom_call.1} parent=43 // pred_fallthru
          _
      $region44: #{tpu_custom_call.1} parent=5 // pred_fallthru
        _
      %p3407 = scmp.le.s32.totalorder 2, %s22
      // Predicated region
      $region77: #{tpu_custom_call.1} parent=5 // pred_check
        %p3408 = pneg %p3407
      $region78: #{tpu_custom_call.1} parent=5 // pred_check_branch
        %3410 = sbr.rel (%p3408) target = $region80
      $region79: #{tpu_custom_call.1} parent=5 // pred_region
        %s3411 = ssub.s32 %s22, 2
        // Predicated region
        $region81: #{tpu_custom_call.1} parent=79 // pred_check
          %p3412 = pneg %p212
        $region82: #{tpu_custom_call.1} parent=79 // pred_check_branch
          %3414 = sbr.rel (%p3412) target = $region84
        $region83: #{tpu_custom_call.1} parent=79 // pred_region
          %s3415 = sand.u32 %s197, 1
          %s3416 = scalar_lea.sflag [#allocation8], %s3415
          %s3417 = sand.u32 %s197, 1
          %s3418 = smul.addr %s3417, 8
          %s3419 = scalar_lea.vmem [#allocation15], %s3418
          %3420 = dma.done %s3416, 128
        $region84: #{tpu_custom_call.1} parent=79 // pred_fallthru
          _
      $region80: #{tpu_custom_call.1} parent=5 // pred_fallthru
        _
    $region6: #{tpu_custom_call.1} parent=1 // loop_footer
      %s26 = sadd.s32 1, %s22
    $region7: #{tpu_custom_call.1} parent=1 // loop_footer_branch
      %21 = sbr.rel target = $region3
    $region8: #{tpu_custom_call.1} parent=1 // loop_exit
      _
    %3421 = vsyncpa [#allocation7], 1
    %s3422 = scalar_lea.sflag [#allocation7], 1
    %3423 = vsyncpa %s3422, 1
    %3424 = vsyncpa [#allocation10], 1
    %s3425 = scalar_lea.sflag [#allocation10], 1
    %3426 = vsyncpa %s3425, 1
    %3427 = vsyncpa [#allocation13], 1
    %3428 = vsyncpa [#allocation8], 1
    %s3429 = scalar_lea.sflag [#allocation8], 1
    %3430 = vsyncpa %s3429, 1

</llo_original>
